<compile_context>
chip_gen: v6e
topology: v6e:2x2x1
jax: 0.10.0
libtpu: 0.0.40
codegen_flags: <defaults>
</compile_context>

<pallas_src>
import math

import jax
import jax.numpy as jnp
from jax.experimental import pallas as pl
from jax.experimental.pallas import tpu as pltpu

d_k = d_v = 64
d_model = 512
n_heads = 8
LN_EPS = 1e-5


def mha_kernel(xq_ref, xk_ref, xv_ref, mask_ref,
               wq_ref, wk_ref, wv_ref, wfc_ref,
               out_ref, attn_ref,
               k_scratch, v_scratch, q_scratch, ctx_scratch):
    # xq_ref   : [1, TQ, d_model] f32   (query activations; also the residual)
    # xk/xv    : [1, S,  d_model] f32   (full key/value sequence, reused across q tiles)
    # mask_ref : [1, TQ, S]       int8  (nonzero == masked)
    # wq/wk/wv : [d_model, H*d]   bf16  (wq has 1/sqrt(d_k) pre-folded)
    # wfc      : [H*d_v, d_model] bf16
    S = xk_ref.shape[1]
    q_idx = pl.program_id(1)

    # K / V projections: one full-width matmul each, computed once per batch element
    # (query tile 0) into persistent head-major scratch, reused by all query tiles.
    @pl.when(q_idx == 0)
    def _():
        xk = xk_ref[0].astype(jnp.bfloat16)
        xv = xv_ref[0].astype(jnp.bfloat16)
        K = jnp.dot(xk, wk_ref[...], preferred_element_type=jnp.float32)   # [S, H*d_k]
        V = jnp.dot(xv, wv_ref[...], preferred_element_type=jnp.float32)   # [S, H*d_v]
        for h in range(n_heads):  # cheap static lane-slices -> head-major layout
            k_scratch[h] = K[:, h * d_k:(h + 1) * d_k].astype(jnp.bfloat16)
            v_scratch[h] = V[:, h * d_v:(h + 1) * d_v].astype(jnp.bfloat16)

    resid = xq_ref[0]                                                      # [TQ, D] f32
    # Q projection: one full-width matmul (softmax scale already folded into wq).
    Q = jnp.dot(resid.astype(jnp.bfloat16), wq_ref[...],
                preferred_element_type=jnp.float32)                        # [TQ, H*d_k]
    for h in range(n_heads):
        q_scratch[h] = Q[:, h * d_k:(h + 1) * d_k].astype(jnp.bfloat16)

    # scores = Q K^T, batched over the head axis on the MXU.
    scores = jnp.einsum('hqd,hkd->hqk', q_scratch[...], k_scratch[...],
                        preferred_element_type=jnp.float32)                # [H, TQ, S]

    # Single [TQ, S] compare, broadcast over heads (exact masked_fill semantics).
    masked = (mask_ref[0] != 0)[None, :, :]
    scores = jnp.where(masked, jnp.float32(-1e9), scores)

    # Numerically stable softmax in f32; divide goes to the EUP via approx reciprocal.
    m = jnp.max(scores, axis=-1, keepdims=True)
    e = jnp.exp(scores - m)
    denom = jnp.sum(e, axis=-1, keepdims=True)
    attn = e * pl.reciprocal(denom, approx=True)                           # [H, TQ, S]
    attn_ref[0] = attn

    # context = attn @ V (batched over heads); merge heads to [TQ, H*d_v] via static
    # lane-slice stores, then one [TQ,512] x [512,512] output-projection matmul.
    ctx = jnp.einsum('hqk,hkd->hqd', attn.astype(jnp.bfloat16), v_scratch[...],
                     preferred_element_type=jnp.float32)                   # [H, TQ, d_v]
    for h in range(n_heads):
        ctx_scratch[:, h * d_v:(h + 1) * d_v] = ctx[h].astype(jnp.bfloat16)

    out = jnp.dot(ctx_scratch[...], wfc_ref[...],
                  preferred_element_type=jnp.float32) + resid              # [TQ, D]

    # LayerNorm(d_model), default gamma=1 / beta=0 (fresh nn.LayerNorm in the forward).
    mean = jnp.mean(out, axis=-1, keepdims=True)
    var = jnp.mean((out - mean) ** 2, axis=-1, keepdims=True)
    out_ref[0] = ((out - mean) * jax.lax.rsqrt(var + LN_EPS)).astype(out_ref.dtype)


def _pick_q_tile(S):
    if S <= 256:
        return S
    for t in (256, 128, 64, 32):
        if S % t == 0:
            return t
    return S  # TODO(synk): pad odd sequence lengths instead of falling back to un-tiled.


def multi_head_attention(input_Q, input_K, input_V, attn_mask,
                         W_Q, W_K, W_V, W_fc):
    """W_* are in PyTorch nn.Linear layout [out_features, in_features]."""
    B, S, D = input_Q.shape
    assert D == d_model

    # Fold 1/sqrt(d_k) into W_Q; transpose to [in, out] and cast to bf16 for the MXU
    # (accumulation stays f32 in-kernel).
    scale = 1.0 / math.sqrt(d_k)
    wq = (W_Q.T * scale).astype(jnp.bfloat16)     # [d_model, H*d_k]
    wk = W_K.T.astype(jnp.bfloat16)               # [d_model, H*d_k]
    wv = W_V.T.astype(jnp.bfloat16)               # [d_model, H*d_v]
    wfc = W_fc.T.astype(jnp.bfloat16)             # [H*d_v, d_model]

    mask_i8 = attn_mask.astype(jnp.int8)          # nonzero == masked; 1 byte/elem DMA

    TQ = _pick_q_tile(S)
    NQ = S // TQ

    out_shape = (
        jax.ShapeDtypeStruct((B, S, d_model), jnp.float32),
        jax.ShapeDtypeStruct((B, n_heads, S, S), jnp.float32),
    )

    out, attn = pl.pallas_call(
        mha_kernel,
        out_shape=out_shape,
        grid=(B, NQ),
        in_specs=[
            pl.BlockSpec((1, TQ, d_model), lambda b, q: (b, q, 0)),       # x_q (q-tiled)
            pl.BlockSpec((1, S, d_model), lambda b, q: (b, 0, 0)),        # x_k (full seq)
            pl.BlockSpec((1, S, d_model), lambda b, q: (b, 0, 0)),        # x_v (full seq)
            pl.BlockSpec((1, TQ, S), lambda b, q: (b, q, 0)),             # mask (int8)
            pl.BlockSpec((d_model, n_heads * d_k), lambda b, q: (0, 0)),  # W_Q (scaled)
            pl.BlockSpec((d_model, n_heads * d_k), lambda b, q: (0, 0)),  # W_K
            pl.BlockSpec((d_model, n_heads * d_v), lambda b, q: (0, 0)),  # W_V
            pl.BlockSpec((n_heads * d_v, d_model), lambda b, q: (0, 0)),  # W_fc
        ],
        out_specs=(
            pl.BlockSpec((1, TQ, d_model), lambda b, q: (b, q, 0)),
            pl.BlockSpec((1, n_heads, TQ, S), lambda b, q: (b, 0, q, 0)),
        ),
        scratch_shapes=[
            pltpu.VMEM((n_heads, S, d_k), jnp.bfloat16),    # K, head-major (per batch elem)
            pltpu.VMEM((n_heads, S, d_v), jnp.bfloat16),    # V, head-major (per batch elem)
            pltpu.VMEM((n_heads, TQ, d_k), jnp.bfloat16),   # Q, head-major (per q tile)
            pltpu.VMEM((TQ, n_heads * d_v), jnp.bfloat16),  # merged context
        ],
        compiler_params=pltpu.CompilerParams(
            dimension_semantics=("parallel", "arbitrary"),
            vmem_limit_bytes=48 * 1024 * 1024,
        ),
    )(input_Q, input_K, input_V, mask_i8, wq, wk, wv, wfc)

    return out, attn


def mha_reference(input_Q, input_K, input_V, attn_mask, W_Q, W_K, W_V, W_fc):
    """Pure-JAX f32 reference matching the PyTorch module."""
    B, S, _ = input_Q.shape
    Q = (input_Q @ W_Q.T).reshape(B, S, n_heads, d_k).transpose(0, 2, 1, 3)
    K = (input_K @ W_K.T).reshape(B, S, n_heads, d_k).transpose(0, 2, 1, 3)
    V = (input_V @ W_V.T).reshape(B, S, n_heads, d_v).transpose(0, 2, 1, 3)
    scores = (Q @ jnp.swapaxes(K, -1, -2)) / jnp.sqrt(jnp.float32(d_k))
    scores = jnp.where(attn_mask[:, None, :, :], jnp.float32(-1e9), scores)
    attn = jax.nn.softmax(scores, axis=-1)
    context = (attn @ V).transpose(0, 2, 1, 3).reshape(B, S, n_heads * d_v)
    out = context @ W_fc.T + input_Q
    mean = out.mean(-1, keepdims=True)
    var = ((out - mean) ** 2).mean(-1, keepdims=True)
    return (out - mean) * jax.lax.rsqrt(var + LN_EPS), attn


if __name__ == "__main__":
    B, S = 2, 8
    key = jax.random.PRNGKey(0)
    k1, k2, k3, k4, k5, k6, k7 = jax.random.split(key, 7)

    input_Q = jax.random.normal(k1, (B, S, d_model), dtype=jnp.float32)
    input_K = jax.random.normal(k2, (B, S, d_model), dtype=jnp.float32)
    input_V = jax.random.normal(k3, (B, S, d_model), dtype=jnp.float32)

    init_scale = 0.02
    W_Q = init_scale * jax.random.normal(k4, (n_heads * d_k, d_model), dtype=jnp.float32)
    W_K = init_scale * jax.random.normal(k5, (n_heads * d_k, d_model), dtype=jnp.float32)
    W_V = init_scale * jax.random.normal(k6, (n_heads * d_v, d_model), dtype=jnp.float32)
    W_fc = init_scale * jax.random.normal(k7, (d_model, n_heads * d_v), dtype=jnp.float32)

    causal = jnp.triu(jnp.ones((S, S), dtype=jnp.bool_), k=1)
    attn_mask = jnp.broadcast_to(causal, (B, S, S))

    out, attn = multi_head_attention(input_Q, input_K, input_V, attn_mask,
                                     W_Q, W_K, W_V, W_fc)
    jax.block_until_ready((out, attn))

    assert out.shape == (B, S, d_model)
    assert attn.shape == (B, n_heads, S, S)

    # Loose tolerance: kernel uses bf16 matmul operands (f32 accumulation) + approx reciprocal.
    out_ref, attn_probs_ref = mha_reference(input_Q, input_K, input_V, attn_mask,
                                            W_Q, W_K, W_V, W_fc)
    assert float(jnp.max(jnp.abs(out - out_ref))) < 1e-1
    assert float(jnp.max(jnp.abs(attn - attn_probs_ref))) < 2e-2

    print("KERNEL_OK")
</pallas_src>

<mosaic_0001>
module attributes {stable_mosaic.version = 11 : i64} {
  func.func @mha_kernel(%arg0: i32, %arg1: i32, %arg2: memref<1x8x512xf32, #tpu.memory_space<vmem>>, %arg3: memref<1x8x512xf32, #tpu.memory_space<vmem>>, %arg4: memref<1x8x512xf32, #tpu.memory_space<vmem>>, %arg5: memref<1x8x8xi8, #tpu.memory_space<vmem>>, %arg6: memref<512x512xbf16, #tpu.memory_space<vmem>>, %arg7: memref<512x512xbf16, #tpu.memory_space<vmem>>, %arg8: memref<512x512xbf16, #tpu.memory_space<vmem>>, %arg9: memref<512x512xbf16, #tpu.memory_space<vmem>>, %arg10: memref<1x8x512xf32, #tpu.memory_space<vmem>>, %arg11: memref<1x8x8x8xf32, #tpu.memory_space<vmem>>, %arg12: memref<8x8x64xbf16, #tpu.memory_space<vmem>>, %arg13: memref<8x8x64xbf16, #tpu.memory_space<vmem>>, %arg14: memref<8x8x64xbf16, #tpu.memory_space<vmem>>, %arg15: memref<8x512xbf16, #tpu.memory_space<vmem>>) attributes {dimension_semantics = [#tpu.dimension_semantics<parallel>, #tpu.dimension_semantics<arbitrary>], iteration_bounds = array<i64: 2, 1>, scalar_prefetch = 0 : i64, scratch_operands = 4 : i64, tpu.core_type = #tpu.core_type<tc>, window_params = [{transform_indices = @transform_0, window_bounds = array<i64: 1, 8, 512>}, {transform_indices = @transform_1, window_bounds = array<i64: 1, 8, 512>}, {transform_indices = @transform_2, window_bounds = array<i64: 1, 8, 512>}, {transform_indices = @transform_3, window_bounds = array<i64: 1, 8, 8>}, {pipeline_mode = #tpu.pipeline_mode<synchronous>, transform_indices = @transform_4, window_bounds = array<i64: 512, 512>}, {pipeline_mode = #tpu.pipeline_mode<synchronous>, transform_indices = @transform_5, window_bounds = array<i64: 512, 512>}, {pipeline_mode = #tpu.pipeline_mode<synchronous>, transform_indices = @transform_6, window_bounds = array<i64: 512, 512>}, {pipeline_mode = #tpu.pipeline_mode<synchronous>, transform_indices = @transform_7, window_bounds = array<i64: 512, 512>}, {transform_indices = @transform_8, window_bounds = array<i64: 1, 8, 512>}, {transform_indices = @transform_9, window_bounds = array<i64: 1, 8, 8, 8>}]} {
    %c0_i32 = arith.constant 0 : i32
    %0 = arith.cmpi eq, %arg1, %c0_i32 : i32
    %1 = arith.extui %0 : i1 to i32
    %c0_i32_0 = arith.constant 0 : i32
    %2 = arith.cmpi ne, %1, %c0_i32_0 : i32
    scf.if %2 {
      %c0_65 = arith.constant 0 : index
      %c0_66 = arith.constant 0 : index
      %c0_67 = arith.constant 0 : index
      %133 = vector.load %arg3[%c0_65, %c0_66, %c0_67] : memref<1x8x512xf32, #tpu.memory_space<vmem>>, vector<1x8x512xf32>
      %134 = vector.shape_cast %133 : vector<1x8x512xf32> to vector<8x512xf32>
      %135 = arith.truncf %134 : vector<8x512xf32> to vector<8x512xbf16>
      %c0_68 = arith.constant 0 : index
      %c0_69 = arith.constant 0 : index
      %c0_70 = arith.constant 0 : index
      %136 = vector.load %arg4[%c0_68, %c0_69, %c0_70] : memref<1x8x512xf32, #tpu.memory_space<vmem>>, vector<1x8x512xf32>
      %137 = vector.shape_cast %136 : vector<1x8x512xf32> to vector<8x512xf32>
      %138 = arith.truncf %137 : vector<8x512xf32> to vector<8x512xbf16>
      %c0_71 = arith.constant 0 : index
      %c0_72 = arith.constant 0 : index
      %139 = vector.load %arg7[%c0_71, %c0_72] : memref<512x512xbf16, #tpu.memory_space<vmem>>, vector<512x512xbf16>
      %cst_73 = arith.constant dense<0.000000e+00> : vector<8x512xf32>
      %140 = tpu.matmul %135, %139, %cst_73 {dimension_numbers = #tpu.dot_dimension_numbers<[1], [0], [0], [1], [0, 0, 1, 1], [], []>} : vector<8x512xbf16>, vector<512x512xbf16>, vector<8x512xf32> -> vector<8x512xf32>
      %c0_74 = arith.constant 0 : index
      %c0_75 = arith.constant 0 : index
      %141 = vector.load %arg8[%c0_74, %c0_75] : memref<512x512xbf16, #tpu.memory_space<vmem>>, vector<512x512xbf16>
      %cst_76 = arith.constant dense<0.000000e+00> : vector<8x512xf32>
      %142 = tpu.matmul %138, %141, %cst_76 {dimension_numbers = #tpu.dot_dimension_numbers<[1], [0], [0], [1], [0, 0, 1, 1], [], []>} : vector<8x512xbf16>, vector<512x512xbf16>, vector<8x512xf32> -> vector<8x512xf32>
      %143 = vector.extract_strided_slice %140 {offsets = [0, 0], sizes = [8, 64], strides = [1, 1]} : vector<8x512xf32> to vector<8x64xf32>
      %144 = arith.truncf %143 : vector<8x64xf32> to vector<8x64xbf16>
      %c0_77 = arith.constant 0 : index
      %c0_78 = arith.constant 0 : index
      %c0_79 = arith.constant 0 : index
      %145 = vector.load %arg12[%c0_77, %c0_78, %c0_79] : memref<8x8x64xbf16, #tpu.memory_space<vmem>>, vector<1x8x64xbf16>
      %146 = vector.shape_cast %145 : vector<1x8x64xbf16> to vector<8x64xbf16>
      %147 = vector.shape_cast %144 : vector<8x64xbf16> to vector<1x8x64xbf16>
      tpu.vector_store %arg12[%c0_77, %c0_78, %c0_79], %147 {strides = array<i32>} : memref<8x8x64xbf16, #tpu.memory_space<vmem>>, vector<1x8x64xbf16>,
      %148 = vector.extract_strided_slice %142 {offsets = [0, 0], sizes = [8, 64], strides = [1, 1]} : vector<8x512xf32> to vector<8x64xf32>
      %149 = arith.truncf %148 : vector<8x64xf32> to vector<8x64xbf16>
      %c0_80 = arith.constant 0 : index
      %c0_81 = arith.constant 0 : index
      %c0_82 = arith.constant 0 : index
      %150 = vector.load %arg13[%c0_80, %c0_81, %c0_82] : memref<8x8x64xbf16, #tpu.memory_space<vmem>>, vector<1x8x64xbf16>
      %151 = vector.shape_cast %150 : vector<1x8x64xbf16> to vector<8x64xbf16>
      %152 = vector.shape_cast %149 : vector<8x64xbf16> to vector<1x8x64xbf16>
      tpu.vector_store %arg13[%c0_80, %c0_81, %c0_82], %152 {strides = array<i32>} : memref<8x8x64xbf16, #tpu.memory_space<vmem>>, vector<1x8x64xbf16>,
      %153 = vector.extract_strided_slice %140 {offsets = [0, 64], sizes = [8, 64], strides = [1, 1]} : vector<8x512xf32> to vector<8x64xf32>
      %154 = arith.truncf %153 : vector<8x64xf32> to vector<8x64xbf16>
      %c1_83 = arith.constant 1 : index
      %c0_84 = arith.constant 0 : index
      %c0_85 = arith.constant 0 : index
      %155 = vector.load %arg12[%c1_83, %c0_84, %c0_85] : memref<8x8x64xbf16, #tpu.memory_space<vmem>>, vector<1x8x64xbf16>
      %156 = vector.shape_cast %155 : vector<1x8x64xbf16> to vector<8x64xbf16>
      %157 = vector.shape_cast %154 : vector<8x64xbf16> to vector<1x8x64xbf16>
      tpu.vector_store %arg12[%c1_83, %c0_84, %c0_85], %157 {strides = array<i32>} : memref<8x8x64xbf16, #tpu.memory_space<vmem>>, vector<1x8x64xbf16>,
      %158 = vector.extract_strided_slice %142 {offsets = [0, 64], sizes = [8, 64], strides = [1, 1]} : vector<8x512xf32> to vector<8x64xf32>
      %159 = arith.truncf %158 : vector<8x64xf32> to vector<8x64xbf16>
      %c1_86 = arith.constant 1 : index
      %c0_87 = arith.constant 0 : index
      %c0_88 = arith.constant 0 : index
      %160 = vector.load %arg13[%c1_86, %c0_87, %c0_88] : memref<8x8x64xbf16, #tpu.memory_space<vmem>>, vector<1x8x64xbf16>
      %161 = vector.shape_cast %160 : vector<1x8x64xbf16> to vector<8x64xbf16>
      %162 = vector.shape_cast %159 : vector<8x64xbf16> to vector<1x8x64xbf16>
      tpu.vector_store %arg13[%c1_86, %c0_87, %c0_88], %162 {strides = array<i32>} : memref<8x8x64xbf16, #tpu.memory_space<vmem>>, vector<1x8x64xbf16>,
      %163 = vector.extract_strided_slice %140 {offsets = [0, 128], sizes = [8, 64], strides = [1, 1]} : vector<8x512xf32> to vector<8x64xf32>
      %164 = arith.truncf %163 : vector<8x64xf32> to vector<8x64xbf16>
      %c2_89 = arith.constant 2 : index
      %c0_90 = arith.constant 0 : index
      %c0_91 = arith.constant 0 : index
      %165 = vector.load %arg12[%c2_89, %c0_90, %c0_91] : memref<8x8x64xbf16, #tpu.memory_space<vmem>>, vector<1x8x64xbf16>
      %166 = vector.shape_cast %165 : vector<1x8x64xbf16> to vector<8x64xbf16>
      %167 = vector.shape_cast %164 : vector<8x64xbf16> to vector<1x8x64xbf16>
      tpu.vector_store %arg12[%c2_89, %c0_90, %c0_91], %167 {strides = array<i32>} : memref<8x8x64xbf16, #tpu.memory_space<vmem>>, vector<1x8x64xbf16>,
      %168 = vector.extract_strided_slice %142 {offsets = [0, 128], sizes = [8, 64], strides = [1, 1]} : vector<8x512xf32> to vector<8x64xf32>
      %169 = arith.truncf %168 : vector<8x64xf32> to vector<8x64xbf16>
      %c2_92 = arith.constant 2 : index
      %c0_93 = arith.constant 0 : index
      %c0_94 = arith.constant 0 : index
      %170 = vector.load %arg13[%c2_92, %c0_93, %c0_94] : memref<8x8x64xbf16, #tpu.memory_space<vmem>>, vector<1x8x64xbf16>
      %171 = vector.shape_cast %170 : vector<1x8x64xbf16> to vector<8x64xbf16>
      %172 = vector.shape_cast %169 : vector<8x64xbf16> to vector<1x8x64xbf16>
      tpu.vector_store %arg13[%c2_92, %c0_93, %c0_94], %172 {strides = array<i32>} : memref<8x8x64xbf16, #tpu.memory_space<vmem>>, vector<1x8x64xbf16>,
      %173 = vector.extract_strided_slice %140 {offsets = [0, 192], sizes = [8, 64], strides = [1, 1]} : vector<8x512xf32> to vector<8x64xf32>
      %174 = arith.truncf %173 : vector<8x64xf32> to vector<8x64xbf16>
      %c3_95 = arith.constant 3 : index
      %c0_96 = arith.constant 0 : index
      %c0_97 = arith.constant 0 : index
      %175 = vector.load %arg12[%c3_95, %c0_96, %c0_97] : memref<8x8x64xbf16, #tpu.memory_space<vmem>>, vector<1x8x64xbf16>
      %176 = vector.shape_cast %175 : vector<1x8x64xbf16> to vector<8x64xbf16>
      %177 = vector.shape_cast %174 : vector<8x64xbf16> to vector<1x8x64xbf16>
      tpu.vector_store %arg12[%c3_95, %c0_96, %c0_97], %177 {strides = array<i32>} : memref<8x8x64xbf16, #tpu.memory_space<vmem>>, vector<1x8x64xbf16>,
      %178 = vector.extract_strided_slice %142 {offsets = [0, 192], sizes = [8, 64], strides = [1, 1]} : vector<8x512xf32> to vector<8x64xf32>
      %179 = arith.truncf %178 : vector<8x64xf32> to vector<8x64xbf16>
      %c3_98 = arith.constant 3 : index
      %c0_99 = arith.constant 0 : index
      %c0_100 = arith.constant 0 : index
      %180 = vector.load %arg13[%c3_98, %c0_99, %c0_100] : memref<8x8x64xbf16, #tpu.memory_space<vmem>>, vector<1x8x64xbf16>
      %181 = vector.shape_cast %180 : vector<1x8x64xbf16> to vector<8x64xbf16>
      %182 = vector.shape_cast %179 : vector<8x64xbf16> to vector<1x8x64xbf16>
      tpu.vector_store %arg13[%c3_98, %c0_99, %c0_100], %182 {strides = array<i32>} : memref<8x8x64xbf16, #tpu.memory_space<vmem>>, vector<1x8x64xbf16>,
      %183 = vector.extract_strided_slice %140 {offsets = [0, 256], sizes = [8, 64], strides = [1, 1]} : vector<8x512xf32> to vector<8x64xf32>
      %184 = arith.truncf %183 : vector<8x64xf32> to vector<8x64xbf16>
      %c4_101 = arith.constant 4 : index
      %c0_102 = arith.constant 0 : index
      %c0_103 = arith.constant 0 : index
      %185 = vector.load %arg12[%c4_101, %c0_102, %c0_103] : memref<8x8x64xbf16, #tpu.memory_space<vmem>>, vector<1x8x64xbf16>
      %186 = vector.shape_cast %185 : vector<1x8x64xbf16> to vector<8x64xbf16>
      %187 = vector.shape_cast %184 : vector<8x64xbf16> to vector<1x8x64xbf16>
      tpu.vector_store %arg12[%c4_101, %c0_102, %c0_103], %187 {strides = array<i32>} : memref<8x8x64xbf16, #tpu.memory_space<vmem>>, vector<1x8x64xbf16>,
      %188 = vector.extract_strided_slice %142 {offsets = [0, 256], sizes = [8, 64], strides = [1, 1]} : vector<8x512xf32> to vector<8x64xf32>
      %189 = arith.truncf %188 : vector<8x64xf32> to vector<8x64xbf16>
      %c4_104 = arith.constant 4 : index
      %c0_105 = arith.constant 0 : index
      %c0_106 = arith.constant 0 : index
      %190 = vector.load %arg13[%c4_104, %c0_105, %c0_106] : memref<8x8x64xbf16, #tpu.memory_space<vmem>>, vector<1x8x64xbf16>
      %191 = vector.shape_cast %190 : vector<1x8x64xbf16> to vector<8x64xbf16>
      %192 = vector.shape_cast %189 : vector<8x64xbf16> to vector<1x8x64xbf16>
      tpu.vector_store %arg13[%c4_104, %c0_105, %c0_106], %192 {strides = array<i32>} : memref<8x8x64xbf16, #tpu.memory_space<vmem>>, vector<1x8x64xbf16>,
      %193 = vector.extract_strided_slice %140 {offsets = [0, 320], sizes = [8, 64], strides = [1, 1]} : vector<8x512xf32> to vector<8x64xf32>
      %194 = arith.truncf %193 : vector<8x64xf32> to vector<8x64xbf16>
      %c5_107 = arith.constant 5 : index
      %c0_108 = arith.constant 0 : index
      %c0_109 = arith.constant 0 : index
      %195 = vector.load %arg12[%c5_107, %c0_108, %c0_109] : memref<8x8x64xbf16, #tpu.memory_space<vmem>>, vector<1x8x64xbf16>
      %196 = vector.shape_cast %195 : vector<1x8x64xbf16> to vector<8x64xbf16>
      %197 = vector.shape_cast %194 : vector<8x64xbf16> to vector<1x8x64xbf16>
      tpu.vector_store %arg12[%c5_107, %c0_108, %c0_109], %197 {strides = array<i32>} : memref<8x8x64xbf16, #tpu.memory_space<vmem>>, vector<1x8x64xbf16>,
      %198 = vector.extract_strided_slice %142 {offsets = [0, 320], sizes = [8, 64], strides = [1, 1]} : vector<8x512xf32> to vector<8x64xf32>
      %199 = arith.truncf %198 : vector<8x64xf32> to vector<8x64xbf16>
      %c5_110 = arith.constant 5 : index
      %c0_111 = arith.constant 0 : index
      %c0_112 = arith.constant 0 : index
      %200 = vector.load %arg13[%c5_110, %c0_111, %c0_112] : memref<8x8x64xbf16, #tpu.memory_space<vmem>>, vector<1x8x64xbf16>
      %201 = vector.shape_cast %200 : vector<1x8x64xbf16> to vector<8x64xbf16>
      %202 = vector.shape_cast %199 : vector<8x64xbf16> to vector<1x8x64xbf16>
      tpu.vector_store %arg13[%c5_110, %c0_111, %c0_112], %202 {strides = array<i32>} : memref<8x8x64xbf16, #tpu.memory_space<vmem>>, vector<1x8x64xbf16>,
      %203 = vector.extract_strided_slice %140 {offsets = [0, 384], sizes = [8, 64], strides = [1, 1]} : vector<8x512xf32> to vector<8x64xf32>
      %204 = arith.truncf %203 : vector<8x64xf32> to vector<8x64xbf16>
      %c6_113 = arith.constant 6 : index
      %c0_114 = arith.constant 0 : index
      %c0_115 = arith.constant 0 : index
      %205 = vector.load %arg12[%c6_113, %c0_114, %c0_115] : memref<8x8x64xbf16, #tpu.memory_space<vmem>>, vector<1x8x64xbf16>
      %206 = vector.shape_cast %205 : vector<1x8x64xbf16> to vector<8x64xbf16>
      %207 = vector.shape_cast %204 : vector<8x64xbf16> to vector<1x8x64xbf16>
      tpu.vector_store %arg12[%c6_113, %c0_114, %c0_115], %207 {strides = array<i32>} : memref<8x8x64xbf16, #tpu.memory_space<vmem>>, vector<1x8x64xbf16>,
      %208 = vector.extract_strided_slice %142 {offsets = [0, 384], sizes = [8, 64], strides = [1, 1]} : vector<8x512xf32> to vector<8x64xf32>
      %209 = arith.truncf %208 : vector<8x64xf32> to vector<8x64xbf16>
      %c6_116 = arith.constant 6 : index
      %c0_117 = arith.constant 0 : index
      %c0_118 = arith.constant 0 : index
      %210 = vector.load %arg13[%c6_116, %c0_117, %c0_118] : memref<8x8x64xbf16, #tpu.memory_space<vmem>>, vector<1x8x64xbf16>
      %211 = vector.shape_cast %210 : vector<1x8x64xbf16> to vector<8x64xbf16>
      %212 = vector.shape_cast %209 : vector<8x64xbf16> to vector<1x8x64xbf16>
      tpu.vector_store %arg13[%c6_116, %c0_117, %c0_118], %212 {strides = array<i32>} : memref<8x8x64xbf16, #tpu.memory_space<vmem>>, vector<1x8x64xbf16>,
      %213 = vector.extract_strided_slice %140 {offsets = [0, 448], sizes = [8, 64], strides = [1, 1]} : vector<8x512xf32> to vector<8x64xf32>
      %214 = arith.truncf %213 : vector<8x64xf32> to vector<8x64xbf16>
      %c7_119 = arith.constant 7 : index
      %c0_120 = arith.constant 0 : index
      %c0_121 = arith.constant 0 : index
      %215 = vector.load %arg12[%c7_119, %c0_120, %c0_121] : memref<8x8x64xbf16, #tpu.memory_space<vmem>>, vector<1x8x64xbf16>
      %216 = vector.shape_cast %215 : vector<1x8x64xbf16> to vector<8x64xbf16>
      %217 = vector.shape_cast %214 : vector<8x64xbf16> to vector<1x8x64xbf16>
      tpu.vector_store %arg12[%c7_119, %c0_120, %c0_121], %217 {strides = array<i32>} : memref<8x8x64xbf16, #tpu.memory_space<vmem>>, vector<1x8x64xbf16>,
      %218 = vector.extract_strided_slice %142 {offsets = [0, 448], sizes = [8, 64], strides = [1, 1]} : vector<8x512xf32> to vector<8x64xf32>
      %219 = arith.truncf %218 : vector<8x64xf32> to vector<8x64xbf16>
      %c7_122 = arith.constant 7 : index
      %c0_123 = arith.constant 0 : index
      %c0_124 = arith.constant 0 : index
      %220 = vector.load %arg13[%c7_122, %c0_123, %c0_124] : memref<8x8x64xbf16, #tpu.memory_space<vmem>>, vector<1x8x64xbf16>
      %221 = vector.shape_cast %220 : vector<1x8x64xbf16> to vector<8x64xbf16>
      %222 = vector.shape_cast %219 : vector<8x64xbf16> to vector<1x8x64xbf16>
      tpu.vector_store %arg13[%c7_122, %c0_123, %c0_124], %222 {strides = array<i32>} : memref<8x8x64xbf16, #tpu.memory_space<vmem>>, vector<1x8x64xbf16>,
    } else {
    }
    %c0 = arith.constant 0 : index
    %c0_1 = arith.constant 0 : index
    %c0_2 = arith.constant 0 : index
    %3 = vector.load %arg2[%c0, %c0_1, %c0_2] : memref<1x8x512xf32, #tpu.memory_space<vmem>>, vector<1x8x512xf32>
    %4 = vector.shape_cast %3 : vector<1x8x512xf32> to vector<8x512xf32>
    %5 = arith.truncf %4 : vector<8x512xf32> to vector<8x512xbf16>
    %c0_3 = arith.constant 0 : index
    %c0_4 = arith.constant 0 : index
    %6 = vector.load %arg6[%c0_3, %c0_4] : memref<512x512xbf16, #tpu.memory_space<vmem>>, vector<512x512xbf16>
    %cst = arith.constant dense<0.000000e+00> : vector<8x512xf32>
    %7 = tpu.matmul %5, %6, %cst {dimension_numbers = #tpu.dot_dimension_numbers<[1], [0], [0], [1], [0, 0, 1, 1], [], []>} : vector<8x512xbf16>, vector<512x512xbf16>, vector<8x512xf32> -> vector<8x512xf32>
    %8 = vector.extract_strided_slice %7 {offsets = [0, 0], sizes = [8, 64], strides = [1, 1]} : vector<8x512xf32> to vector<8x64xf32>
    %9 = arith.truncf %8 : vector<8x64xf32> to vector<8x64xbf16>
    %c0_5 = arith.constant 0 : index
    %c0_6 = arith.constant 0 : index
    %c0_7 = arith.constant 0 : index
    %10 = vector.load %arg14[%c0_5, %c0_6, %c0_7] : memref<8x8x64xbf16, #tpu.memory_space<vmem>>, vector<1x8x64xbf16>
    %11 = vector.shape_cast %10 : vector<1x8x64xbf16> to vector<8x64xbf16>
    %12 = vector.shape_cast %9 : vector<8x64xbf16> to vector<1x8x64xbf16>
    tpu.vector_store %arg14[%c0_5, %c0_6, %c0_7], %12 {strides = array<i32>} : memref<8x8x64xbf16, #tpu.memory_space<vmem>>, vector<1x8x64xbf16>,
    %13 = vector.extract_strided_slice %7 {offsets = [0, 64], sizes = [8, 64], strides = [1, 1]} : vector<8x512xf32> to vector<8x64xf32>
    %14 = arith.truncf %13 : vector<8x64xf32> to vector<8x64xbf16>
    %c1 = arith.constant 1 : index
    %c0_8 = arith.constant 0 : index
    %c0_9 = arith.constant 0 : index
    %15 = vector.load %arg14[%c1, %c0_8, %c0_9] : memref<8x8x64xbf16, #tpu.memory_space<vmem>>, vector<1x8x64xbf16>
    %16 = vector.shape_cast %15 : vector<1x8x64xbf16> to vector<8x64xbf16>
    %17 = vector.shape_cast %14 : vector<8x64xbf16> to vector<1x8x64xbf16>
    tpu.vector_store %arg14[%c1, %c0_8, %c0_9], %17 {strides = array<i32>} : memref<8x8x64xbf16, #tpu.memory_space<vmem>>, vector<1x8x64xbf16>,
    %18 = vector.extract_strided_slice %7 {offsets = [0, 128], sizes = [8, 64], strides = [1, 1]} : vector<8x512xf32> to vector<8x64xf32>
    %19 = arith.truncf %18 : vector<8x64xf32> to vector<8x64xbf16>
    %c2 = arith.constant 2 : index
    %c0_10 = arith.constant 0 : index
    %c0_11 = arith.constant 0 : index
    %20 = vector.load %arg14[%c2, %c0_10, %c0_11] : memref<8x8x64xbf16, #tpu.memory_space<vmem>>, vector<1x8x64xbf16>
    %21 = vector.shape_cast %20 : vector<1x8x64xbf16> to vector<8x64xbf16>
    %22 = vector.shape_cast %19 : vector<8x64xbf16> to vector<1x8x64xbf16>
    tpu.vector_store %arg14[%c2, %c0_10, %c0_11], %22 {strides = array<i32>} : memref<8x8x64xbf16, #tpu.memory_space<vmem>>, vector<1x8x64xbf16>,
    %23 = vector.extract_strided_slice %7 {offsets = [0, 192], sizes = [8, 64], strides = [1, 1]} : vector<8x512xf32> to vector<8x64xf32>
    %24 = arith.truncf %23 : vector<8x64xf32> to vector<8x64xbf16>
    %c3 = arith.constant 3 : index
    %c0_12 = arith.constant 0 : index
    %c0_13 = arith.constant 0 : index
    %25 = vector.load %arg14[%c3, %c0_12, %c0_13] : memref<8x8x64xbf16, #tpu.memory_space<vmem>>, vector<1x8x64xbf16>
    %26 = vector.shape_cast %25 : vector<1x8x64xbf16> to vector<8x64xbf16>
    %27 = vector.shape_cast %24 : vector<8x64xbf16> to vector<1x8x64xbf16>
    tpu.vector_store %arg14[%c3, %c0_12, %c0_13], %27 {strides = array<i32>} : memref<8x8x64xbf16, #tpu.memory_space<vmem>>, vector<1x8x64xbf16>,
    %28 = vector.extract_strided_slice %7 {offsets = [0, 256], sizes = [8, 64], strides = [1, 1]} : vector<8x512xf32> to vector<8x64xf32>
    %29 = arith.truncf %28 : vector<8x64xf32> to vector<8x64xbf16>
    %c4 = arith.constant 4 : index
    %c0_14 = arith.constant 0 : index
    %c0_15 = arith.constant 0 : index
    %30 = vector.load %arg14[%c4, %c0_14, %c0_15] : memref<8x8x64xbf16, #tpu.memory_space<vmem>>, vector<1x8x64xbf16>
    %31 = vector.shape_cast %30 : vector<1x8x64xbf16> to vector<8x64xbf16>
    %32 = vector.shape_cast %29 : vector<8x64xbf16> to vector<1x8x64xbf16>
    tpu.vector_store %arg14[%c4, %c0_14, %c0_15], %32 {strides = array<i32>} : memref<8x8x64xbf16, #tpu.memory_space<vmem>>, vector<1x8x64xbf16>,
    %33 = vector.extract_strided_slice %7 {offsets = [0, 320], sizes = [8, 64], strides = [1, 1]} : vector<8x512xf32> to vector<8x64xf32>
    %34 = arith.truncf %33 : vector<8x64xf32> to vector<8x64xbf16>
    %c5 = arith.constant 5 : index
    %c0_16 = arith.constant 0 : index
    %c0_17 = arith.constant 0 : index
    %35 = vector.load %arg14[%c5, %c0_16, %c0_17] : memref<8x8x64xbf16, #tpu.memory_space<vmem>>, vector<1x8x64xbf16>
    %36 = vector.shape_cast %35 : vector<1x8x64xbf16> to vector<8x64xbf16>
    %37 = vector.shape_cast %34 : vector<8x64xbf16> to vector<1x8x64xbf16>
    tpu.vector_store %arg14[%c5, %c0_16, %c0_17], %37 {strides = array<i32>} : memref<8x8x64xbf16, #tpu.memory_space<vmem>>, vector<1x8x64xbf16>,
    %38 = vector.extract_strided_slice %7 {offsets = [0, 384], sizes = [8, 64], strides = [1, 1]} : vector<8x512xf32> to vector<8x64xf32>
    %39 = arith.truncf %38 : vector<8x64xf32> to vector<8x64xbf16>
    %c6 = arith.constant 6 : index
    %c0_18 = arith.constant 0 : index
    %c0_19 = arith.constant 0 : index
    %40 = vector.load %arg14[%c6, %c0_18, %c0_19] : memref<8x8x64xbf16, #tpu.memory_space<vmem>>, vector<1x8x64xbf16>
    %41 = vector.shape_cast %40 : vector<1x8x64xbf16> to vector<8x64xbf16>
    %42 = vector.shape_cast %39 : vector<8x64xbf16> to vector<1x8x64xbf16>
    tpu.vector_store %arg14[%c6, %c0_18, %c0_19], %42 {strides = array<i32>} : memref<8x8x64xbf16, #tpu.memory_space<vmem>>, vector<1x8x64xbf16>,
    %43 = vector.extract_strided_slice %7 {offsets = [0, 448], sizes = [8, 64], strides = [1, 1]} : vector<8x512xf32> to vector<8x64xf32>
    %44 = arith.truncf %43 : vector<8x64xf32> to vector<8x64xbf16>
    %c7 = arith.constant 7 : index
    %c0_20 = arith.constant 0 : index
    %c0_21 = arith.constant 0 : index
    %45 = vector.load %arg14[%c7, %c0_20, %c0_21] : memref<8x8x64xbf16, #tpu.memory_space<vmem>>, vector<1x8x64xbf16>
    %46 = vector.shape_cast %45 : vector<1x8x64xbf16> to vector<8x64xbf16>
    %47 = vector.shape_cast %44 : vector<8x64xbf16> to vector<1x8x64xbf16>
    tpu.vector_store %arg14[%c7, %c0_20, %c0_21], %47 {strides = array<i32>} : memref<8x8x64xbf16, #tpu.memory_space<vmem>>, vector<1x8x64xbf16>,
    %c0_22 = arith.constant 0 : index
    %c0_23 = arith.constant 0 : index
    %c0_24 = arith.constant 0 : index
    %48 = vector.load %arg14[%c0_22, %c0_23, %c0_24] : memref<8x8x64xbf16, #tpu.memory_space<vmem>>, vector<8x8x64xbf16>
    %c0_25 = arith.constant 0 : index
    %c0_26 = arith.constant 0 : index
    %c0_27 = arith.constant 0 : index
    %49 = vector.load %arg12[%c0_25, %c0_26, %c0_27] : memref<8x8x64xbf16, #tpu.memory_space<vmem>>, vector<8x8x64xbf16>
    "tpu.trace_start"() <{level = 10 : i32, message = "hqd,hkd->hqk"}> : () -> ()
    %cst_28 = arith.constant dense<0.000000e+00> : vector<8x8x8xf32>
    %50 = tpu.matmul %48, %49, %cst_28 {dimension_numbers = #tpu.dot_dimension_numbers<[2], [2], [1], [1], [0, 0, 0, 1, 1, 1], [0], [0]>} : vector<8x8x64xbf16>, vector<8x8x64xbf16>, vector<8x8x8xf32> -> vector<8x8x8xf32>
    "tpu.trace_stop"() : () -> ()
    %c0_29 = arith.constant 0 : index
    %c0_30 = arith.constant 0 : index
    %c0_31 = arith.constant 0 : index
    %51 = vector.load %arg5[%c0_29, %c0_30, %c0_31] : memref<1x8x8xi8, #tpu.memory_space<vmem>>, vector<1x8x8xi8>
    %52 = vector.shape_cast %51 : vector<1x8x8xi8> to vector<8x8xi8>
    %c0_i8 = arith.constant 0 : i8
    %53 = vector.broadcast %c0_i8 : i8 to vector<8x8xi8>
    %54 = arith.cmpi ne, %52, %53 : vector<8x8xi8>
    %55 = vector.shape_cast %54 : vector<8x8xi1> to vector<1x8x8xi1>
    %cst_32 = arith.constant -1.000000e+09 : f32
    %56 = vector.shape_cast %55 : vector<1x8x8xi1> to vector<1x8x8xi1>
    %57 = vector.broadcast %56 : vector<1x8x8xi1> to vector<8x8x8xi1>
    %58 = vector.broadcast %cst_32 : f32 to vector<8x8x8xf32>
    %59 = arith.select %57, %58, %50 : vector<8x8x8xi1>, vector<8x8x8xf32>
    %cst_33 = arith.constant dense<0xFF800000> : vector<8x8xf32>
    %60 = vector.multi_reduction <maximumf>, %59, %cst_33 [2] : vector<8x8x8xf32> to vector<8x8xf32>
    %61 = vector.shape_cast %60 : vector<8x8xf32> to vector<8x8x1xf32>
    %62 = vector.broadcast %61 : vector<8x8x1xf32> to vector<8x8x8xf32>
    %63 = arith.subf %59, %62 : vector<8x8x8xf32>
    %64 = math.exp %63 : vector<8x8x8xf32>
    %cst_34 = arith.constant dense<0.000000e+00> : vector<8x8xf32>
    %65 = vector.multi_reduction <add>, %64, %cst_34 [2] : vector<8x8x8xf32> to vector<8x8xf32>
    %66 = vector.shape_cast %65 : vector<8x8xf32> to vector<8x8x1xf32>
    %67 = tpu.reciprocal %66 {approx = true} : vector<8x8x1xf32> -> vector<8x8x1xf32>
    %68 = vector.broadcast %67 : vector<8x8x1xf32> to vector<8x8x8xf32>
    %69 = arith.mulf %64, %68 : vector<8x8x8xf32>
    %c0_35 = arith.constant 0 : index
    %c0_36 = arith.constant 0 : index
    %c0_37 = arith.constant 0 : index
    %c0_38 = arith.constant 0 : index
    %70 = vector.load %arg11[%c0_35, %c0_36, %c0_37, %c0_38] : memref<1x8x8x8xf32, #tpu.memory_space<vmem>>, vector<1x8x8x8xf32>
    %71 = vector.shape_cast %70 : vector<1x8x8x8xf32> to vector<8x8x8xf32>
    %72 = vector.shape_cast %69 : vector<8x8x8xf32> to vector<1x8x8x8xf32>
    tpu.vector_store %arg11[%c0_35, %c0_36, %c0_37, %c0_38], %72 {strides = array<i32>} : memref<1x8x8x8xf32, #tpu.memory_space<vmem>>, vector<1x8x8x8xf32>,
    %73 = arith.truncf %69 : vector<8x8x8xf32> to vector<8x8x8xbf16>
    %c0_39 = arith.constant 0 : index
    %c0_40 = arith.constant 0 : index
    %c0_41 = arith.constant 0 : index
    %74 = vector.load %arg13[%c0_39, %c0_40, %c0_41] : memref<8x8x64xbf16, #tpu.memory_space<vmem>>, vector<8x8x64xbf16>
    "tpu.trace_start"() <{level = 10 : i32, message = "hqk,hkd->hqd"}> : () -> ()
    %cst_42 = arith.constant dense<0.000000e+00> : vector<8x8x64xf32>
    %75 = tpu.matmul %73, %74, %cst_42 {dimension_numbers = #tpu.dot_dimension_numbers<[2], [1], [1], [2], [0, 0, 0, 1, 1, 2], [0], [0]>} : vector<8x8x8xbf16>, vector<8x8x64xbf16>, vector<8x8x64xf32> -> vector<8x8x64xf32>
    "tpu.trace_stop"() : () -> ()
    %76 = vector.extract_strided_slice %75 {offsets = [0, 0, 0], sizes = [1, 8, 64], strides = [1, 1, 1]} : vector<8x8x64xf32> to vector<1x8x64xf32>
    %77 = vector.shape_cast %76 : vector<1x8x64xf32> to vector<8x64xf32>
    %78 = arith.truncf %77 : vector<8x64xf32> to vector<8x64xbf16>
    %c0_43 = arith.constant 0 : index
    %c0_44 = arith.constant 0 : index
    %79 = vector.load %arg15[%c0_43, %c0_44] : memref<8x512xbf16, #tpu.memory_space<vmem>>, vector<8x64xbf16>
    tpu.vector_store %arg15[%c0_43, %c0_44], %78 {strides = array<i32>} : memref<8x512xbf16, #tpu.memory_space<vmem>>, vector<8x64xbf16>,
    %80 = vector.extract_strided_slice %75 {offsets = [1, 0, 0], sizes = [1, 8, 64], strides = [1, 1, 1]} : vector<8x8x64xf32> to vector<1x8x64xf32>
    %81 = vector.shape_cast %80 : vector<1x8x64xf32> to vector<8x64xf32>
    %82 = arith.truncf %81 : vector<8x64xf32> to vector<8x64xbf16>
    %c0_45 = arith.constant 0 : index
    %c64 = arith.constant 64 : index
    %83 = vector.load %arg15[%c0_45, %c64] : memref<8x512xbf16, #tpu.memory_space<vmem>>, vector<8x64xbf16>
    tpu.vector_store %arg15[%c0_45, %c64], %82 {strides = array<i32>} : memref<8x512xbf16, #tpu.memory_space<vmem>>, vector<8x64xbf16>,
    %84 = vector.extract_strided_slice %75 {offsets = [2, 0, 0], sizes = [1, 8, 64], strides = [1, 1, 1]} : vector<8x8x64xf32> to vector<1x8x64xf32>
    %85 = vector.shape_cast %84 : vector<1x8x64xf32> to vector<8x64xf32>
    %86 = arith.truncf %85 : vector<8x64xf32> to vector<8x64xbf16>
    %c0_46 = arith.constant 0 : index
    %c128 = arith.constant 128 : index
    %87 = vector.load %arg15[%c0_46, %c128] : memref<8x512xbf16, #tpu.memory_space<vmem>>, vector<8x64xbf16>
    tpu.vector_store %arg15[%c0_46, %c128], %86 {strides = array<i32>} : memref<8x512xbf16, #tpu.memory_space<vmem>>, vector<8x64xbf16>,
    %88 = vector.extract_strided_slice %75 {offsets = [3, 0, 0], sizes = [1, 8, 64], strides = [1, 1, 1]} : vector<8x8x64xf32> to vector<1x8x64xf32>
    %89 = vector.shape_cast %88 : vector<1x8x64xf32> to vector<8x64xf32>
    %90 = arith.truncf %89 : vector<8x64xf32> to vector<8x64xbf16>
    %c0_47 = arith.constant 0 : index
    %c192 = arith.constant 192 : index
    %91 = vector.load %arg15[%c0_47, %c192] : memref<8x512xbf16, #tpu.memory_space<vmem>>, vector<8x64xbf16>
    tpu.vector_store %arg15[%c0_47, %c192], %90 {strides = array<i32>} : memref<8x512xbf16, #tpu.memory_space<vmem>>, vector<8x64xbf16>,
    %92 = vector.extract_strided_slice %75 {offsets = [4, 0, 0], sizes = [1, 8, 64], strides = [1, 1, 1]} : vector<8x8x64xf32> to vector<1x8x64xf32>
    %93 = vector.shape_cast %92 : vector<1x8x64xf32> to vector<8x64xf32>
    %94 = arith.truncf %93 : vector<8x64xf32> to vector<8x64xbf16>
    %c0_48 = arith.constant 0 : index
    %c256 = arith.constant 256 : index
    %95 = vector.load %arg15[%c0_48, %c256] : memref<8x512xbf16, #tpu.memory_space<vmem>>, vector<8x64xbf16>
    tpu.vector_store %arg15[%c0_48, %c256], %94 {strides = array<i32>} : memref<8x512xbf16, #tpu.memory_space<vmem>>, vector<8x64xbf16>,
    %96 = vector.extract_strided_slice %75 {offsets = [5, 0, 0], sizes = [1, 8, 64], strides = [1, 1, 1]} : vector<8x8x64xf32> to vector<1x8x64xf32>
    %97 = vector.shape_cast %96 : vector<1x8x64xf32> to vector<8x64xf32>
    %98 = arith.truncf %97 : vector<8x64xf32> to vector<8x64xbf16>
    %c0_49 = arith.constant 0 : index
    %c320 = arith.constant 320 : index
    %99 = vector.load %arg15[%c0_49, %c320] : memref<8x512xbf16, #tpu.memory_space<vmem>>, vector<8x64xbf16>
    tpu.vector_store %arg15[%c0_49, %c320], %98 {strides = array<i32>} : memref<8x512xbf16, #tpu.memory_space<vmem>>, vector<8x64xbf16>,
    %100 = vector.extract_strided_slice %75 {offsets = [6, 0, 0], sizes = [1, 8, 64], strides = [1, 1, 1]} : vector<8x8x64xf32> to vector<1x8x64xf32>
    %101 = vector.shape_cast %100 : vector<1x8x64xf32> to vector<8x64xf32>
    %102 = arith.truncf %101 : vector<8x64xf32> to vector<8x64xbf16>
    %c0_50 = arith.constant 0 : index
    %c384 = arith.constant 384 : index
    %103 = vector.load %arg15[%c0_50, %c384] : memref<8x512xbf16, #tpu.memory_space<vmem>>, vector<8x64xbf16>
    tpu.vector_store %arg15[%c0_50, %c384], %102 {strides = array<i32>} : memref<8x512xbf16, #tpu.memory_space<vmem>>, vector<8x64xbf16>,
    %104 = vector.extract_strided_slice %75 {offsets = [7, 0, 0], sizes = [1, 8, 64], strides = [1, 1, 1]} : vector<8x8x64xf32> to vector<1x8x64xf32>
    %105 = vector.shape_cast %104 : vector<1x8x64xf32> to vector<8x64xf32>
    %106 = arith.truncf %105 : vector<8x64xf32> to vector<8x64xbf16>
    %c0_51 = arith.constant 0 : index
    %c448 = arith.constant 448 : index
    %107 = vector.load %arg15[%c0_51, %c448] : memref<8x512xbf16, #tpu.memory_space<vmem>>, vector<8x64xbf16>
    tpu.vector_store %arg15[%c0_51, %c448], %106 {strides = array<i32>} : memref<8x512xbf16, #tpu.memory_space<vmem>>, vector<8x64xbf16>,
    %c0_52 = arith.constant 0 : index
    %c0_53 = arith.constant 0 : index
    %108 = vector.load %arg15[%c0_52, %c0_53] : memref<8x512xbf16, #tpu.memory_space<vmem>>, vector<8x512xbf16>
    %c0_54 = arith.constant 0 : index
    %c0_55 = arith.constant 0 : index
    %109 = vector.load %arg9[%c0_54, %c0_55] : memref<512x512xbf16, #tpu.memory_space<vmem>>, vector<512x512xbf16>
    %cst_56 = arith.constant dense<0.000000e+00> : vector<8x512xf32>
    %110 = tpu.matmul %108, %109, %cst_56 {dimension_numbers = #tpu.dot_dimension_numbers<[1], [0], [0], [1], [0, 0, 1, 1], [], []>} : vector<8x512xbf16>, vector<512x512xbf16>, vector<8x512xf32> -> vector<8x512xf32>
    %111 = arith.addf %110, %4 : vector<8x512xf32>
    %cst_57 = arith.constant dense<0.000000e+00> : vector<8xf32>
    %112 = vector.multi_reduction <add>, %111, %cst_57 [1] : vector<8x512xf32> to vector<8xf32>
    %113 = vector.shape_cast %112 : vector<8xf32> to vector<8x1xf32>
    %cst_58 = arith.constant 5.120000e+02 : f32
    %114 = vector.broadcast %cst_58 : f32 to vector<8x1xf32>
    %115 = arith.divf %113, %114 : vector<8x1xf32>
    %116 = vector.broadcast %115 : vector<8x1xf32> to vector<8x512xf32>
    %117 = arith.subf %111, %116 : vector<8x512xf32>
    %118 = arith.mulf %117, %117 : vector<8x512xf32>
    %cst_59 = arith.constant dense<0.000000e+00> : vector<8xf32>
    %119 = vector.multi_reduction <add>, %118, %cst_59 [1] : vector<8x512xf32> to vector<8xf32>
    %120 = vector.shape_cast %119 : vector<8xf32> to vector<8x1xf32>
    %cst_60 = arith.constant 5.120000e+02 : f32
    %121 = vector.broadcast %cst_60 : f32 to vector<8x1xf32>
    %122 = arith.divf %120, %121 : vector<8x1xf32>
    %123 = vector.broadcast %115 : vector<8x1xf32> to vector<8x512xf32>
    %124 = arith.subf %111, %123 : vector<8x512xf32>
    %cst_61 = arith.constant 9.99999974E-6 : f32
    %125 = vector.broadcast %cst_61 : f32 to vector<8x1xf32>
    %126 = arith.addf %122, %125 : vector<8x1xf32>
    %127 = math.rsqrt %126 : vector<8x1xf32>
    %128 = vector.broadcast %127 : vector<8x1xf32> to vector<8x512xf32>
    %129 = arith.mulf %124, %128 : vector<8x512xf32>
    %c0_62 = arith.constant 0 : index
    %c0_63 = arith.constant 0 : index
    %c0_64 = arith.constant 0 : index
    %130 = vector.load %arg10[%c0_62, %c0_63, %c0_64] : memref<1x8x512xf32, #tpu.memory_space<vmem>>, vector<1x8x512xf32>
    %131 = vector.shape_cast %130 : vector<1x8x512xf32> to vector<8x512xf32>
    %132 = vector.shape_cast %129 : vector<8x512xf32> to vector<1x8x512xf32>
    tpu.vector_store %arg10[%c0_62, %c0_63, %c0_64], %132 {strides = array<i32>} : memref<1x8x512xf32, #tpu.memory_space<vmem>>, vector<1x8x512xf32>,
    return
  }
  func.func @transform_0(%arg0: i32, %arg1: i32) -> (i32, i32, i32) {
    %c0_i32 = arith.constant 0 : i32
    %c0_i32_0 = arith.constant 0 : i32
    return %arg0, %arg1, %c0_i32 : i32, i32, i32
  }
  func.func @transform_1(%arg0: i32, %arg1: i32) -> (i32, i32, i32) {
    %c0_i32 = arith.constant 0 : i32
    %c0_i32_0 = arith.constant 0 : i32
    %c0_i32_1 = arith.constant 0 : i32
    return %arg0, %c0_i32, %c0_i32_0 : i32, i32, i32
  }
  func.func @transform_2(%arg0: i32, %arg1: i32) -> (i32, i32, i32) {
    %c0_i32 = arith.constant 0 : i32
    %c0_i32_0 = arith.constant 0 : i32
    %c0_i32_1 = arith.constant 0 : i32
    return %arg0, %c0_i32, %c0_i32_0 : i32, i32, i32
  }
  func.func @transform_3(%arg0: i32, %arg1: i32) -> (i32, i32, i32) {
    %c0_i32 = arith.constant 0 : i32
    %c0_i32_0 = arith.constant 0 : i32
    return %arg0, %arg1, %c0_i32 : i32, i32, i32
  }
  func.func @transform_4(%arg0: i32, %arg1: i32) -> (i32, i32) {
    %c0_i32 = arith.constant 0 : i32
    %c0_i32_0 = arith.constant 0 : i32
    %c0_i32_1 = arith.constant 0 : i32
    return %c0_i32, %c0_i32_0 : i32, i32
  }
  func.func @transform_5(%arg0: i32, %arg1: i32) -> (i32, i32) {
    %c0_i32 = arith.constant 0 : i32
    %c0_i32_0 = arith.constant 0 : i32
    %c0_i32_1 = arith.constant 0 : i32
    return %c0_i32, %c0_i32_0 : i32, i32
  }
  func.func @transform_6(%arg0: i32, %arg1: i32) -> (i32, i32) {
    %c0_i32 = arith.constant 0 : i32
    %c0_i32_0 = arith.constant 0 : i32
    %c0_i32_1 = arith.constant 0 : i32
    return %c0_i32, %c0_i32_0 : i32, i32
  }
  func.func @transform_7(%arg0: i32, %arg1: i32) -> (i32, i32) {
    %c0_i32 = arith.constant 0 : i32
    %c0_i32_0 = arith.constant 0 : i32
    %c0_i32_1 = arith.constant 0 : i32
    return %c0_i32, %c0_i32_0 : i32, i32
  }
  func.func @transform_8(%arg0: i32, %arg1: i32) -> (i32, i32, i32) {
    %c0_i32 = arith.constant 0 : i32
    %c0_i32_0 = arith.constant 0 : i32
    return %arg0, %arg1, %c0_i32 : i32, i32, i32
  }
  func.func @transform_9(%arg0: i32, %arg1: i32) -> (i32, i32, i32, i32) {
    %c0_i32 = arith.constant 0 : i32
    %c0_i32_0 = arith.constant 0 : i32
    %c0_i32_1 = arith.constant 0 : i32
    return %arg0, %c0_i32, %arg1, %c0_i32_0 : i32, i32, i32, i32
  }
}

</mosaic_0001>

<llo_original>
// kernel: tpu_custom_call.1
$region0: #{tpu_custom_call.1}
  #allocation0 [shape = 'u32[]', space=smem, size = 0x4, offset = 0x4, fixed_abs, tag = 'smem constant byte address 0x4 - core index']
  #allocation1 [shape = 'u32[144,128]{1,0:T(1,128)}', space=vmem, size = 0x12000, scoped, tag = 'internal scratch']
  #allocation2 [shape = 'bf16[8,8,64]{2,1,0:T(8,128)(2,1)}', space=vmem, size = 0x4000, scoped, tag = 'scratch operand']
  #allocation3 [shape = 'bf16[8,8,64]{2,1,0:T(8,128)(2,1)}', space=vmem, size = 0x4000, scoped, tag = 'scratch operand']
  #allocation4 [shape = 'bf16[8,8,64]{2,1,0:T(8,128)(2,1)}', space=vmem, size = 0x4000, scoped, tag = 'scratch operand']
  #allocation5 [shape = 'bf16[8,512]{1,0:T(8,128)(2,1)}', space=vmem, size = 0x2000, scoped, tag = 'scratch operand']
  %s0 = inlined_call_operand.hbm [shape: f32[2,8,512], index: 0, kind: input, shape index: {}]
  %s1 = inlined_call_operand.hbm [shape: f32[2,8,512], index: 1, kind: input, shape index: {}]
  %s2 = inlined_call_operand.hbm [shape: f32[2,8,512], index: 2, kind: input, shape index: {}]
  %s3 = inlined_call_operand.vmem [shape: s8[2,8,8], index: 3, kind: input, shape index: {}]
  %s4 = inlined_call_operand.hbm [shape: bf16[512,512], index: 4, kind: input, shape index: {}]
  %s5 = inlined_call_operand.hbm [shape: bf16[512,512], index: 5, kind: input, shape index: {}]
  %s6 = inlined_call_operand.hbm [shape: bf16[512,512], index: 6, kind: input, shape index: {}]
  %s7 = inlined_call_operand.hbm [shape: bf16[512,512], index: 7, kind: input, shape index: {}]
  %s8 = inlined_call_operand.hbm [shape: f32[2,8,512], index: 8, kind: output, shape index: {0}]
  %s9 = inlined_call_operand.hbm [shape: f32[2,8,8,8], index: 9, kind: output, shape index: {1}]
  %10 = xla_tuple %s8, %s9
  %s11 = sld [smem:[#allocation0]]
  $region105: #{tpu_custom_call.1} parent=0
    _
  %s13 = ssub.s32 1, %s11
  %s14 = scalar_select 0, %s13, %s11
  $region1: #{tpu_custom_call.1} parent=0
    #allocation6 [shape = 'u8[32768]{0}', space=vmem, size = 0x8000, scoped, tag = 'input window, operand 0']
    #allocation7 [shape = 's32[2]{0}', space=sflag, size = 0x8, scoped, tag = 'scoped memory for tpu_custom_call.1']
    #allocation8 [shape = 's32[2]{0}', space=sflag, size = 0x8, scoped, tag = 'scoped memory for tpu_custom_call.1']
    #allocation9 [shape = 'u8[32768]{0}', space=vmem, size = 0x8000, scoped, tag = 'input window, operand 1']
    #allocation10 [shape = 's32[2]{0}', space=sflag, size = 0x8, scoped, tag = 'scoped memory for tpu_custom_call.1']
    #allocation11 [shape = 'u8[32768]{0}', space=vmem, size = 0x8000, scoped, tag = 'input window, operand 2']
    #allocation12 [shape = 'u8[524288]{0}', space=vmem, size = 0x80000, scoped, tag = 'input window, operand 4, single buffered']
    #allocation13 [shape = 's32[1]{0}', space=sflag, size = 0x4, scoped, tag = 'scoped memory for tpu_custom_call.1']
    #allocation14 [shape = 'u8[524288]{0}', space=vmem, size = 0x80000, scoped, tag = 'input window, operand 5, single buffered']
    #allocation15 [shape = 'u8[524288]{0}', space=vmem, size = 0x80000, scoped, tag = 'input window, operand 6, single buffered']
    #allocation16 [shape = 's32[1]{0}', space=sflag, size = 0x4, scoped, tag = 'scoped memory for tpu_custom_call.1']
    #allocation17 [shape = 'u8[524288]{0}', space=vmem, size = 0x80000, scoped, tag = 'input window, operand 7, single buffered']
    #allocation18 [shape = 'u8[32768]{0}', space=vmem, size = 0x8000, scoped, tag = 'output window, operand 0']
    #allocation19 [shape = 'u8[65536]{0}', space=vmem, size = 0x10000, scoped, tag = 'output window, operand 1']
    #allocation20 [shape = 's32[2]{0}', space=sflag, size = 0x8, scoped, tag = 'scoped memory for tpu_custom_call.1']
    %15 = vsyncpa [#allocation7], 0
    %s16 = scalar_lea.sflag [#allocation7], 1
    %17 = vsyncpa %s16, 0
    %18 = vsyncpa [#allocation10], 0
    %s19 = scalar_lea.sflag [#allocation10], 1
    %20 = vsyncpa %s19, 0
    %21 = vsyncpa [#allocation13], 0
    %22 = vsyncpa [#allocation16], 0
    %23 = vsyncpa [#allocation8], 0
    %s24 = scalar_lea.sflag [#allocation8], 1
    %25 = vsyncpa %s24, 0
    %26 = vsyncpa [#allocation20], 0
    %s27 = scalar_lea.sflag [#allocation20], 1
    %28 = vsyncpa %s27, 0
    loop: start=0, step=1, limit=4
    $region2: #{tpu_custom_call.1} parent=1 // loop_pre_header
      _
    $region3: #{tpu_custom_call.1} parent=1 // loop_header
      %s30 = sphi 0, %s34
      %p31 = scmp.ge.s32.totalorder %s30, 4
      %s37 = sphi 0, %s49
      %s38 = sphi 0, %s45
      %s39 = sphi 0, %s37
      %s40 = sphi 0, %s38
      %s41 = sphi 0, %s39
      %s42 = sphi 0, %s40
      %s54 = sphi 0, %s56
      %s57 = sphi 0, %s54
      %s58 = sphi 0, %s57
      %s74 = sphi 0, %s58
      %s80 = sphi 0, %s82
      %s83 = sphi 0, %s80
      %s84 = sphi 0, %s83
      %s100 = sphi 0, %s84
      %s106 = sphi 0, %s108
      %s109 = sphi 0, %s106
      %s110 = sphi 0, %s109
      %s126 = sphi 0, %s110
      %s134 = sphi 0, %s136
      %s137 = sphi 0, %s134
      %s138 = sphi 0, %s137
      %s154 = sphi 0, %s138
      %s158 = sphi 0, %s158
      %s160 = sphi 0, %s158
      %s161 = sphi 0, %s160
      %s175 = sphi 0, %s161
      %s179 = sphi 0, %s179
      %s181 = sphi 0, %s179
      %s182 = sphi 0, %s181
      %s196 = sphi 0, %s182
      %s200 = sphi 0, %s200
      %s202 = sphi 0, %s200
      %s203 = sphi 0, %s202
      %s217 = sphi 0, %s203
      %s221 = sphi 0, %s221
      %s223 = sphi 0, %s221
      %s224 = sphi 0, %s223
      %s238 = sphi 0, %s224
      %s246 = sphi 0, %s248
      %s249 = sphi 0, %s246
      %s250 = sphi 0, %s249
      %s266 = sphi 0, %s250
      %s274 = sphi 0, %s276
      %s277 = sphi 0, %s274
      %s278 = sphi 0, %s277
      %s294 = sphi 0, %s278
    $region4: #{tpu_custom_call.1} parent=1 // loop_header_branch
      %33 = sbr.rel (%p31) target = $region8
    $region5: #{tpu_custom_call.1} parent=1 // loop_body
      %s35 = ssub.s32 %s30, 1
      %s36 = ssub.s32 %s30, 2
      %s43 = sadd.s32 1, %s38
      %p44 = scmp.ge.s32.totalorder %s43, 1
      %s45 = scalar_select %p44, 0, %s43
      %s46 = sadd.s32 1, %s37
      %s47 = scalar_select %p44, %s46, %s37
      %p48 = scmp.ge.s32.totalorder %s47, 2
      %s49 = scalar_select %p48, 0, %s47
      %s50 = ssub.s32 %s37, %s49
      %s51 = ssub.s32 %s38, %s45
      %s52 = sor.u32 %s50, %s51
      %p53 = scmp.eq.s32.totalorder %s52, 0
      %s55 = sadd.s32 %s54, 1
      %s56 = scalar_select %p53, %s54, %s55
      %p59 = pneg %p53
      %p60 = scmp.eq.s32.totalorder %s30, 1
      %p61 = por %p59, %p60
      %p62 = scmp.ne.s32.totalorder %s54, %s57
      %p63 = scmp.eq.s32.totalorder %s30, 0
      %p64 = por %p62, %p63
      %p65 = scmp.ne.s32.totalorder %s54, %s57
      %p66 = scmp.eq.s32.totalorder %s35, 1
      %p67 = por %p65, %p66
      %p68 = scmp.ne.s32.totalorder %s57, %s58
      %p69 = scmp.eq.s32.totalorder %s35, 0
      %p70 = por %p68, %p69
      %p71 = scmp.ne.s32.totalorder %s57, %s58
      %p72 = scmp.eq.s32.totalorder %s36, 1
      %p73 = por %p71, %p72
      %p75 = scmp.ne.s32.totalorder %s58, %s74
      %p76 = scmp.eq.s32.totalorder %s36, 0
      %p77 = por %p75, %p76
      %s78 = ssub.s32 %s37, %s49
      %p79 = scmp.eq.s32.totalorder %s78, 0
      %s81 = sadd.s32 %s80, 1
      %s82 = scalar_select %p79, %s80, %s81
      %p85 = pneg %p79
      %p86 = scmp.eq.s32.totalorder %s30, 1
      %p87 = por %p85, %p86
      %p88 = scmp.ne.s32.totalorder %s80, %s83
      %p89 = scmp.eq.s32.totalorder %s30, 0
      %p90 = por %p88, %p89
      %p91 = scmp.ne.s32.totalorder %s80, %s83
      %p92 = scmp.eq.s32.totalorder %s35, 1
      %p93 = por %p91, %p92
      %p94 = scmp.ne.s32.totalorder %s83, %s84
      %p95 = scmp.eq.s32.totalorder %s35, 0
      %p96 = por %p94, %p95
      %p97 = scmp.ne.s32.totalorder %s83, %s84
      %p98 = scmp.eq.s32.totalorder %s36, 1
      %p99 = por %p97, %p98
      %p101 = scmp.ne.s32.totalorder %s84, %s100
      %p102 = scmp.eq.s32.totalorder %s36, 0
      %p103 = por %p101, %p102
      %s104 = ssub.s32 %s37, %s49
      %p105 = scmp.eq.s32.totalorder %s104, 0
      %s107 = sadd.s32 %s106, 1
      %s108 = scalar_select %p105, %s106, %s107
      %p111 = pneg %p105
      %p112 = scmp.eq.s32.totalorder %s30, 1
      %p113 = por %p111, %p112
      %p114 = scmp.ne.s32.totalorder %s106, %s109
      %p115 = scmp.eq.s32.totalorder %s30, 0
      %p116 = por %p114, %p115
      %p117 = scmp.ne.s32.totalorder %s106, %s109
      %p118 = scmp.eq.s32.totalorder %s35, 1
      %p119 = por %p117, %p118
      %p120 = scmp.ne.s32.totalorder %s109, %s110
      %p121 = scmp.eq.s32.totalorder %s35, 0
      %p122 = por %p120, %p121
      %p123 = scmp.ne.s32.totalorder %s109, %s110
      %p124 = scmp.eq.s32.totalorder %s36, 1
      %p125 = por %p123, %p124
      %p127 = scmp.ne.s32.totalorder %s110, %s126
      %p128 = scmp.eq.s32.totalorder %s36, 0
      %p129 = por %p127, %p128
      %s130 = ssub.s32 %s37, %s49
      %s131 = ssub.s32 %s38, %s45
      %s132 = sor.u32 %s130, %s131
      %p133 = scmp.eq.s32.totalorder %s132, 0
      %s135 = sadd.s32 %s134, 1
      %s136 = scalar_select %p133, %s134, %s135
      %p139 = pneg %p133
      %p140 = scmp.eq.s32.totalorder %s30, 1
      %p141 = por %p139, %p140
      %p142 = scmp.ne.s32.totalorder %s134, %s137
      %p143 = scmp.eq.s32.totalorder %s30, 0
      %p144 = por %p142, %p143
      %p145 = scmp.ne.s32.totalorder %s134, %s137
      %p146 = scmp.eq.s32.totalorder %s35, 1
      %p147 = por %p145, %p146
      %p148 = scmp.ne.s32.totalorder %s137, %s138
      %p149 = scmp.eq.s32.totalorder %s35, 0
      %p150 = por %p148, %p149
      %p151 = scmp.ne.s32.totalorder %s137, %s138
      %p152 = scmp.eq.s32.totalorder %s36, 1
      %p153 = por %p151, %p152
      %p155 = scmp.ne.s32.totalorder %s138, %s154
      %p156 = scmp.eq.s32.totalorder %s36, 0
      %p157 = por %p155, %p156
      %s159 = sadd.s32 %s158, 1
      %p162 = scmp.eq.s32.totalorder %s30, 1
      %p163 = scmp.ne.s32.totalorder %s158, %s160
      %p164 = scmp.eq.s32.totalorder %s30, 0
      %p165 = por %p163, %p164
      %p166 = scmp.ne.s32.totalorder %s158, %s160
      %p167 = scmp.eq.s32.totalorder %s35, 1
      %p168 = por %p166, %p167
      %p169 = scmp.ne.s32.totalorder %s160, %s161
      %p170 = scmp.eq.s32.totalorder %s35, 0
      %p171 = por %p169, %p170
      %p172 = scmp.ne.s32.totalorder %s160, %s161
      %p173 = scmp.eq.s32.totalorder %s36, 1
      %p174 = por %p172, %p173
      %p176 = scmp.ne.s32.totalorder %s161, %s175
      %p177 = scmp.eq.s32.totalorder %s36, 0
      %p178 = por %p176, %p177
      %s180 = sadd.s32 %s179, 1
      %p183 = scmp.eq.s32.totalorder %s30, 1
      %p184 = scmp.ne.s32.totalorder %s179, %s181
      %p185 = scmp.eq.s32.totalorder %s30, 0
      %p186 = por %p184, %p185
      %p187 = scmp.ne.s32.totalorder %s179, %s181
      %p188 = scmp.eq.s32.totalorder %s35, 1
      %p189 = por %p187, %p188
      %p190 = scmp.ne.s32.totalorder %s181, %s182
      %p191 = scmp.eq.s32.totalorder %s35, 0
      %p192 = por %p190, %p191
      %p193 = scmp.ne.s32.totalorder %s181, %s182
      %p194 = scmp.eq.s32.totalorder %s36, 1
      %p195 = por %p193, %p194
      %p197 = scmp.ne.s32.totalorder %s182, %s196
      %p198 = scmp.eq.s32.totalorder %s36, 0
      %p199 = por %p197, %p198
      %s201 = sadd.s32 %s200, 1
      %p204 = scmp.eq.s32.totalorder %s30, 1
      %p205 = scmp.ne.s32.totalorder %s200, %s202
      %p206 = scmp.eq.s32.totalorder %s30, 0
      %p207 = por %p205, %p206
      %p208 = scmp.ne.s32.totalorder %s200, %s202
      %p209 = scmp.eq.s32.totalorder %s35, 1
      %p210 = por %p208, %p209
      %p211 = scmp.ne.s32.totalorder %s202, %s203
      %p212 = scmp.eq.s32.totalorder %s35, 0
      %p213 = por %p211, %p212
      %p214 = scmp.ne.s32.totalorder %s202, %s203
      %p215 = scmp.eq.s32.totalorder %s36, 1
      %p216 = por %p214, %p215
      %p218 = scmp.ne.s32.totalorder %s203, %s217
      %p219 = scmp.eq.s32.totalorder %s36, 0
      %p220 = por %p218, %p219
      %s222 = sadd.s32 %s221, 1
      %p225 = scmp.eq.s32.totalorder %s30, 1
      %p226 = scmp.ne.s32.totalorder %s221, %s223
      %p227 = scmp.eq.s32.totalorder %s30, 0
      %p228 = por %p226, %p227
      %p229 = scmp.ne.s32.totalorder %s221, %s223
      %p230 = scmp.eq.s32.totalorder %s35, 1
      %p231 = por %p229, %p230
      %p232 = scmp.ne.s32.totalorder %s223, %s224
      %p233 = scmp.eq.s32.totalorder %s35, 0
      %p234 = por %p232, %p233
      %p235 = scmp.ne.s32.totalorder %s223, %s224
      %p236 = scmp.eq.s32.totalorder %s36, 1
      %p237 = por %p235, %p236
      %p239 = scmp.ne.s32.totalorder %s224, %s238
      %p240 = scmp.eq.s32.totalorder %s36, 0
      %p241 = por %p239, %p240
      %s242 = ssub.s32 %s37, %s49
      %s243 = ssub.s32 %s38, %s45
      %s244 = sor.u32 %s242, %s243
      %p245 = scmp.eq.s32.totalorder %s244, 0
      %s247 = sadd.s32 %s246, 1
      %s248 = scalar_select %p245, %s246, %s247
      %p251 = pneg %p245
      %p252 = scmp.eq.s32.totalorder %s30, 1
      %p253 = por %p251, %p252
      %p254 = scmp.ne.s32.totalorder %s246, %s249
      %p255 = scmp.eq.s32.totalorder %s30, 0
      %p256 = por %p254, %p255
      %p257 = scmp.ne.s32.totalorder %s246, %s249
      %p258 = scmp.eq.s32.totalorder %s35, 1
      %p259 = por %p257, %p258
      %p260 = scmp.ne.s32.totalorder %s249, %s250
      %p261 = scmp.eq.s32.totalorder %s35, 0
      %p262 = por %p260, %p261
      %p263 = scmp.ne.s32.totalorder %s249, %s250
      %p264 = scmp.eq.s32.totalorder %s36, 1
      %p265 = por %p263, %p264
      %p267 = scmp.ne.s32.totalorder %s250, %s266
      %p268 = scmp.eq.s32.totalorder %s36, 0
      %p269 = por %p267, %p268
      %s270 = ssub.s32 %s37, %s49
      %s271 = ssub.s32 %s38, %s45
      %s272 = sor.u32 %s270, %s271
      %p273 = scmp.eq.s32.totalorder %s272, 0
      %s275 = sadd.s32 %s274, 1
      %s276 = scalar_select %p273, %s274, %s275
      %p279 = pneg %p273
      %p280 = scmp.eq.s32.totalorder %s30, 1
      %p281 = por %p279, %p280
      %p282 = scmp.ne.s32.totalorder %s274, %s277
      %p283 = scmp.eq.s32.totalorder %s30, 0
      %p284 = por %p282, %p283
      %p285 = scmp.ne.s32.totalorder %s274, %s277
      %p286 = scmp.eq.s32.totalorder %s35, 1
      %p287 = por %p285, %p286
      %p288 = scmp.ne.s32.totalorder %s277, %s278
      %p289 = scmp.eq.s32.totalorder %s35, 0
      %p290 = por %p288, %p289
      %p291 = scmp.ne.s32.totalorder %s277, %s278
      %p292 = scmp.eq.s32.totalorder %s36, 1
      %p293 = por %p291, %p292
      %p295 = scmp.ne.s32.totalorder %s278, %s294
      %p296 = scmp.eq.s32.totalorder %s36, 0
      %p297 = por %p295, %p296
      %p298 = scmp.le.s32.totalorder 1, %s30
      %p299 = scmp.lt.s32.totalorder %s30, 3
      %p300 = pnand %p298, %p299
      %p301 = pneg %p300
      // Predicated region
      $region9: #{tpu_custom_call.1} parent=5 // pred_check
        _
      $region10: #{tpu_custom_call.1} parent=5 // pred_check_branch
        %303 = sbr.rel (%p300) target = $region12
      $region11: #{tpu_custom_call.1} parent=5 // pred_region
        %s304 = ssub.s32 %s30, 1
        // Predicated region
        $region13: #{tpu_custom_call.1} parent=11 // pred_check
          %p305 = pneg %p171
        $region14: #{tpu_custom_call.1} parent=11 // pred_check_branch
          %307 = sbr.rel (%p305) target = $region16
        $region15: #{tpu_custom_call.1} parent=11 // pred_region
          %s309 = ssub.s32 16384, 16384
          %310 = vsyncadd [#allocation13], %s309
          %s311 = sshll.u32 [#allocation12], 4
          %s312 = int_to_ptr.vmem [resolvable:$true] %s311
          %317 = dma.hbm_to_vmem [thread:$0]  %s4, 16384, %s312, [#allocation13], 256, 256, 16
        $region16: #{tpu_custom_call.1} parent=11 // pred_fallthru
          _
        // Predicated region
        $region17: #{tpu_custom_call.1} parent=11 // pred_check
          %p318 = pneg %p192
        $region18: #{tpu_custom_call.1} parent=11 // pred_check_branch
          %320 = sbr.rel (%p318) target = $region20
        $region19: #{tpu_custom_call.1} parent=11 // pred_region
          %s322 = ssub.s32 16384, 16384
          %323 = vsyncadd [#allocation13], %s322
          %s324 = sshll.u32 [#allocation14], 4
          %s325 = int_to_ptr.vmem [resolvable:$true] %s324
          %330 = dma.hbm_to_vmem [thread:$0]  %s5, 16384, %s325, [#allocation13], 256, 256, 16
        $region20: #{tpu_custom_call.1} parent=11 // pred_fallthru
          _
        // Predicated region
        $region21: #{tpu_custom_call.1} parent=11 // pred_check
          %p331 = pneg %p213
        $region22: #{tpu_custom_call.1} parent=11 // pred_check_branch
          %333 = sbr.rel (%p331) target = $region24
        $region23: #{tpu_custom_call.1} parent=11 // pred_region
          %s335 = ssub.s32 16384, 16384
          %336 = vsyncadd [#allocation16], %s335
          %s337 = sshll.u32 [#allocation15], 4
          %s338 = int_to_ptr.vmem [resolvable:$true] %s337
          %343 = dma.hbm_to_vmem [thread:$0]  %s6, 16384, %s338, [#allocation16], 256, 256, 16
        $region24: #{tpu_custom_call.1} parent=11 // pred_fallthru
          _
        // Predicated region
        $region25: #{tpu_custom_call.1} parent=11 // pred_check
          %p344 = pneg %p234
        $region26: #{tpu_custom_call.1} parent=11 // pred_check_branch
          %346 = sbr.rel (%p344) target = $region28
        $region27: #{tpu_custom_call.1} parent=11 // pred_region
          %s348 = ssub.s32 16384, 16384
          %349 = vsyncadd [#allocation16], %s348
          %s350 = sshll.u32 [#allocation17], 4
          %s351 = int_to_ptr.vmem [resolvable:$true] %s350
          %356 = dma.hbm_to_vmem [thread:$0]  %s7, 16384, %s351, [#allocation16], 256, 256, 16
        $region28: #{tpu_custom_call.1} parent=11 // pred_fallthru
          _
      $region12: #{tpu_custom_call.1} parent=5 // pred_fallthru
        _
      %p357 = scmp.lt.s32.totalorder %s30, 2
      // Predicated region
      $region29: #{tpu_custom_call.1} parent=5 // pred_check
        %p358 = pneg %p357
      $region30: #{tpu_custom_call.1} parent=5 // pred_check_branch
        %360 = sbr.rel (%p358) target = $region32
      $region31: #{tpu_custom_call.1} parent=5 // pred_region
        // Predicated region
        $region33: #{tpu_custom_call.1} parent=31 // pred_check
          %p361 = pneg %p64
        $region34: #{tpu_custom_call.1} parent=31 // pred_check_branch
          %363 = sbr.rel (%p361) target = $region36
        $region35: #{tpu_custom_call.1} parent=31 // pred_region
          %s364 = sand.u32 %s54, 1
          %s365 = scalar_lea.sflag [#allocation7], %s364
          %s366 = sand.u32 %s54, 1
          %s367 = smul.addr %s366, 32
          %s368 = scalar_lea.vmem [#allocation6], %s367
          %s370 = ssub.s32 512, 512
          %371 = vsyncadd %s365, %s370
          %s372 = smul.addr %s38, 4
          %s373 = smul.addr %s37, 4
          %s374 = sadd.s32 %s372, %s373
          %s375 = smul.addr %s374, 128
          %s376 = scalar_lea.hbm %s0, %s375
          %s378 = sshll.u32 %s368, 4
          %s379 = int_to_ptr.vmem [resolvable:$true] %s378
          %381 = dma.hbm_to_vmem [thread:$0]  %s376, 512, %s379, %s365
        $region36: #{tpu_custom_call.1} parent=31 // pred_fallthru
          _
        // Predicated region
        $region37: #{tpu_custom_call.1} parent=31 // pred_check
          %p382 = pneg %p90
        $region38: #{tpu_custom_call.1} parent=31 // pred_check_branch
          %384 = sbr.rel (%p382) target = $region40
        $region39: #{tpu_custom_call.1} parent=31 // pred_region
          %s385 = sand.u32 %s30, 1
          %s386 = scalar_lea.sflag [#allocation10], %s385
          %s387 = sand.u32 %s80, 1
          %s388 = smul.addr %s387, 32
          %s389 = scalar_lea.vmem [#allocation9], %s388
          %s391 = ssub.s32 512, 512
          %392 = vsyncadd %s386, %s391
          %s393 = smul.addr %s37, 4
          %s394 = smul.addr %s393, 128
          %s395 = scalar_lea.hbm %s1, %s394
          %s397 = sshll.u32 %s389, 4
          %s398 = int_to_ptr.vmem [resolvable:$true] %s397
          %400 = dma.hbm_to_vmem [thread:$0]  %s395, 512, %s398, %s386
        $region40: #{tpu_custom_call.1} parent=31 // pred_fallthru
          _
        // Predicated region
        $region41: #{tpu_custom_call.1} parent=31 // pred_check
          %p401 = pneg %p116
        $region42: #{tpu_custom_call.1} parent=31 // pred_check_branch
          %403 = sbr.rel (%p401) target = $region44
        $region43: #{tpu_custom_call.1} parent=31 // pred_region
          %s404 = sand.u32 %s30, 1
          %s405 = scalar_lea.sflag [#allocation10], %s404
          %s406 = sand.u32 %s106, 1
          %s407 = smul.addr %s406, 32
          %s408 = scalar_lea.vmem [#allocation11], %s407
          %s410 = ssub.s32 512, 512
          %411 = vsyncadd %s405, %s410
          %s412 = smul.addr %s37, 4
          %s413 = smul.addr %s412, 128
          %s414 = scalar_lea.hbm %s2, %s413
          %s416 = sshll.u32 %s408, 4
          %s417 = int_to_ptr.vmem [resolvable:$true] %s416
          %419 = dma.hbm_to_vmem [thread:$0]  %s414, 512, %s417, %s405
        $region44: #{tpu_custom_call.1} parent=31 // pred_fallthru
          _
        // Predicated region
        $region45: #{tpu_custom_call.1} parent=31 // pred_check
          %p420 = pneg %p144
        $region46: #{tpu_custom_call.1} parent=31 // pred_check_branch
          %422 = sbr.rel (%p420) target = $region48
        $region47: #{tpu_custom_call.1} parent=31 // pred_region
          %p423 = scmp.lt.s32.totalorder %s37, 1
          %s424 = scalar_select %p423, %s37, 1
          %p425 = scmp.lt.s32.totalorder %s38, 0
          %s426 = scalar_select %p425, %s38, 0
          %s427 = sadd.s32 %s426, %s424
          %s428 = smul.addr %s427, 2
          %s429 = scalar_lea.vmem %s3, %s428
        $region48: #{tpu_custom_call.1} parent=31 // pred_fallthru
          _
      $region32: #{tpu_custom_call.1} parent=5 // pred_fallthru
        _
      %p430 = scmp.le.s32.totalorder 1, %s30
      %p431 = scmp.lt.s32.totalorder %s30, 3
      %p432 = pnand %p430, %p431
      %p433 = pneg %p432
      // Predicated region
      $region49: #{tpu_custom_call.1} parent=5 // pred_check
        _
      $region50: #{tpu_custom_call.1} parent=5 // pred_check_branch
        %435 = sbr.rel (%p432) target = $region52
      $region51: #{tpu_custom_call.1} parent=5 // pred_region
        %s436 = ssub.s32 %s30, 1
        %s437 = sand.u32 %s57, 1
        %s438 = scalar_lea.sflag [#allocation7], %s437
        %s439 = sand.u32 %s57, 1
        %s440 = smul.addr %s439, 32
        %s441 = scalar_lea.vmem [#allocation6], %s440
        // Predicated region
        $region53: #{tpu_custom_call.1} parent=51 // pred_check
          %p442 = pneg %p70
        $region54: #{tpu_custom_call.1} parent=51 // pred_check_branch
          %444 = sbr.rel (%p442) target = $region56
        $region55: #{tpu_custom_call.1} parent=51 // pred_region
          %445 = dma.done %s438, 512
        $region56: #{tpu_custom_call.1} parent=51 // pred_fallthru
          _
        %s446 = sand.u32 %s35, 1
        %s447 = scalar_lea.sflag [#allocation10], %s446
        %s448 = sand.u32 %s83, 1
        %s449 = smul.addr %s448, 32
        %s450 = scalar_lea.vmem [#allocation9], %s449
        // Predicated region
        $region57: #{tpu_custom_call.1} parent=51 // pred_check
          %p451 = pneg %p96
        $region58: #{tpu_custom_call.1} parent=51 // pred_check_branch
          %453 = sbr.rel (%p451) target = $region60
        $region59: #{tpu_custom_call.1} parent=51 // pred_region
          %454 = dma.done %s447, 512
        $region60: #{tpu_custom_call.1} parent=51 // pred_fallthru
          _
        %s455 = sand.u32 %s35, 1
        %s456 = scalar_lea.sflag [#allocation10], %s455
        %s457 = sand.u32 %s109, 1
        %s458 = smul.addr %s457, 32
        %s459 = scalar_lea.vmem [#allocation11], %s458
        // Predicated region
        $region61: #{tpu_custom_call.1} parent=51 // pred_check
          %p460 = pneg %p122
        $region62: #{tpu_custom_call.1} parent=51 // pred_check_branch
          %462 = sbr.rel (%p460) target = $region64
        $region63: #{tpu_custom_call.1} parent=51 // pred_region
          %463 = dma.done %s456, 512
        $region64: #{tpu_custom_call.1} parent=51 // pred_fallthru
          _
        // Predicated region
        $region65: #{tpu_custom_call.1} parent=51 // pred_check
          %p464 = pneg %p171
        $region66: #{tpu_custom_call.1} parent=51 // pred_check_branch
          %466 = sbr.rel (%p464) target = $region68
        $region67: #{tpu_custom_call.1} parent=51 // pred_region
          %467 = dma.done [#allocation13], 16384
        $region68: #{tpu_custom_call.1} parent=51 // pred_fallthru
          _
        // Predicated region
        $region69: #{tpu_custom_call.1} parent=51 // pred_check
          %p468 = pneg %p192
        $region70: #{tpu_custom_call.1} parent=51 // pred_check_branch
          %470 = sbr.rel (%p468) target = $region72
        $region71: #{tpu_custom_call.1} parent=51 // pred_region
          %471 = dma.done [#allocation13], 16384
        $region72: #{tpu_custom_call.1} parent=51 // pred_fallthru
          _
        // Predicated region
        $region73: #{tpu_custom_call.1} parent=51 // pred_check
          %p472 = pneg %p213
        $region74: #{tpu_custom_call.1} parent=51 // pred_check_branch
          %474 = sbr.rel (%p472) target = $region76
        $region75: #{tpu_custom_call.1} parent=51 // pred_region
          %475 = dma.done [#allocation16], 16384
        $region76: #{tpu_custom_call.1} parent=51 // pred_fallthru
          _
        // Predicated region
        $region77: #{tpu_custom_call.1} parent=51 // pred_check
          %p476 = pneg %p234
        $region78: #{tpu_custom_call.1} parent=51 // pred_check_branch
          %478 = sbr.rel (%p476) target = $region80
        $region79: #{tpu_custom_call.1} parent=51 // pred_region
          %479 = dma.done [#allocation16], 16384
        $region80: #{tpu_custom_call.1} parent=51 // pred_fallthru
          _
        %s480 = sand.u32 %s57, 1
        %s481 = scalar_lea.sflag [#allocation7], %s480
        %s482 = sand.u32 %s57, 1
        %s483 = smul.addr %s482, 32
        %s484 = scalar_lea.vmem [#allocation6], %s483
        %p485 = pneg %p70
        %p486 = pneg %p67
        %s487 = sand.u32 %s35, 1
        %s488 = scalar_lea.sflag [#allocation10], %s487
        %s489 = sand.u32 %s83, 1
        %s490 = smul.addr %s489, 32
        %s491 = scalar_lea.vmem [#allocation9], %s490
        %p492 = pneg %p96
        %p493 = pneg %p93
        %s494 = sand.u32 %s35, 1
        %s495 = scalar_lea.sflag [#allocation10], %s494
        %s496 = sand.u32 %s109, 1
        %s497 = smul.addr %s496, 32
        %s498 = scalar_lea.vmem [#allocation11], %s497
        %p499 = pneg %p122
        %p500 = pneg %p119
        %p501 = scmp.lt.s32.totalorder %s39, 1
        %s502 = scalar_select %p501, %s39, 1
        %p503 = scmp.lt.s32.totalorder %s40, 0
        %s504 = scalar_select %p503, %s40, 0
        %s505 = sadd.s32 %s504, %s502
        %s506 = smul.addr %s505, 2
        %s507 = scalar_lea.vmem %s3, %s506
        %p508 = pneg %p150
        %p509 = pneg %p147
        %p510 = pneg %p171
        %p511 = pneg %p168
        %p512 = pneg %p192
        %p513 = pneg %p189
        %p514 = pneg %p213
        %p515 = pneg %p210
        %p516 = pneg %p234
        %p517 = pneg %p231
        %p518 = pneg %p262
        %p519 = pneg %p259
        %s520 = sand.u32 %s249, 1
        %s521 = scalar_lea.sflag [#allocation8], %s520
        %s522 = sand.u32 %s249, 1
        %s523 = smul.addr %s522, 32
        %s524 = scalar_lea.vmem [#allocation18], %s523
        %p525 = pneg %p290
        %p526 = pneg %p287
        %s527 = sand.u32 %s277, 1
        %s528 = scalar_lea.sflag [#allocation20], %s527
        %s529 = sand.u32 %s277, 1
        %s530 = smul.addr %s529, 64
        %s531 = scalar_lea.vmem [#allocation19], %s530
        %p532 = scmp.lt.s32.totalorder %s39, 1
        %s533 = scalar_select %p532, %s39, 1
        %p534 = scmp.lt.s32.totalorder %s40, 0
        %s535 = scalar_select %p534, %s40, 0
        %s536 = sadd.s32 %s535, %s533
        %s537 = smul.addr %s536, 2
        %s538 = scalar_lea.vmem %s3, %s537
        %p542 = scmp.eq.s32.totalorder %s40, 0
        // Predicated region
        $region81: #{tpu_custom_call.1} parent=51 // pred_check
          %p543 = pneg %p542
        $region82: #{tpu_custom_call.1} parent=51 // pred_check_branch
          %545 = sbr.rel (%p543) target = $region84
        $region83: #{tpu_custom_call.1} parent=51 // pred_region
          %v546 = vld [vmem:[%s450] sm:$0xff]
          %v547 = vld [vmem:[%s450 + $0x8] sm:$0xff]
          %v548 = vld [vmem:[%s450 + $0x10] sm:$0xff]
          %v549 = vld [vmem:[%s450 + $0x18] sm:$0xff]
          %v550 = vpack.c.bf16 %v546, %v546
          %v551 = vpack.c.bf16 %v547, %v547
          %v552 = vpack.c.bf16 %v548, %v548
          %v553 = vpack.c.bf16 %v549, %v549
          %v554 = vld [vmem:[%s459] sm:$0xff]
          %v555 = vld [vmem:[%s459 + $0x8] sm:$0xff]
          %v556 = vld [vmem:[%s459 + $0x10] sm:$0xff]
          %v557 = vld [vmem:[%s459 + $0x18] sm:$0xff]
          %v558 = vpack.c.bf16 %v554, %v554
          %v559 = vpack.c.bf16 %v555, %v555
          %v560 = vpack.c.bf16 %v556, %v556
          %v561 = vpack.c.bf16 %v557, %v557
          %v562 = vld [vmem:[#allocation14] sm:$0xff]
          %v563 = vld [vmem:[#allocation14 + $0x8] sm:$0xff]
          %v564 = vld [vmem:[#allocation14 + $0x10] sm:$0xff]
          %v565 = vld [vmem:[#allocation14 + $0x18] sm:$0xff]
          %v566 = vld [vmem:[#allocation14 + $0x20] sm:$0xff]
          %v567 = vld [vmem:[#allocation14 + $0x28] sm:$0xff]
          %v568 = vld [vmem:[#allocation14 + $0x30] sm:$0xff]
          %v569 = vld [vmem:[#allocation14 + $0x38] sm:$0xff]
          %v570 = vld [vmem:[#allocation14 + $0x40] sm:$0xff]
          %v571 = vld [vmem:[#allocation14 + $0x48] sm:$0xff]
          %v572 = vld [vmem:[#allocation14 + $0x50] sm:$0xff]
          %v573 = vld [vmem:[#allocation14 + $0x58] sm:$0xff]
          %v574 = vld [vmem:[#allocation14 + $0x60] sm:$0xff]
          %v575 = vld [vmem:[#allocation14 + $0x68] sm:$0xff]
          %v576 = vld [vmem:[#allocation14 + $0x70] sm:$0xff]
          %v577 = vld [vmem:[#allocation14 + $0x78] sm:$0xff]
          %v578 = vld [vmem:[#allocation14 + $0x80] sm:$0xff]
          %v579 = vld [vmem:[#allocation14 + $0x88] sm:$0xff]
          %v580 = vld [vmem:[#allocation14 + $0x90] sm:$0xff]
          %v581 = vld [vmem:[#allocation14 + $0x98] sm:$0xff]
          %v582 = vld [vmem:[#allocation14 + $0xa0] sm:$0xff]
          %v583 = vld [vmem:[#allocation14 + $0xa8] sm:$0xff]
          %v584 = vld [vmem:[#allocation14 + $0xb0] sm:$0xff]
          %v585 = vld [vmem:[#allocation14 + $0xb8] sm:$0xff]
          %v586 = vld [vmem:[#allocation14 + $0xc0] sm:$0xff]
          %v587 = vld [vmem:[#allocation14 + $0xc8] sm:$0xff]
          %v588 = vld [vmem:[#allocation14 + $0xd0] sm:$0xff]
          %v589 = vld [vmem:[#allocation14 + $0xd8] sm:$0xff]
          %v590 = vld [vmem:[#allocation14 + $0xe0] sm:$0xff]
          %v591 = vld [vmem:[#allocation14 + $0xe8] sm:$0xff]
          %v592 = vld [vmem:[#allocation14 + $0xf0] sm:$0xff]
          %v593 = vld [vmem:[#allocation14 + $0xf8] sm:$0xff]
          %v594 = vld [vmem:[#allocation14 + $0x100] sm:$0xff]
          %v595 = vld [vmem:[#allocation14 + $0x108] sm:$0xff]
          %v596 = vld [vmem:[#allocation14 + $0x110] sm:$0xff]
          %v597 = vld [vmem:[#allocation14 + $0x118] sm:$0xff]
          %v598 = vld [vmem:[#allocation14 + $0x120] sm:$0xff]
          %v599 = vld [vmem:[#allocation14 + $0x128] sm:$0xff]
          %v600 = vld [vmem:[#allocation14 + $0x130] sm:$0xff]
          %v601 = vld [vmem:[#allocation14 + $0x138] sm:$0xff]
          %v602 = vld [vmem:[#allocation14 + $0x140] sm:$0xff]
          %v603 = vld [vmem:[#allocation14 + $0x148] sm:$0xff]
          %v604 = vld [vmem:[#allocation14 + $0x150] sm:$0xff]
          %v605 = vld [vmem:[#allocation14 + $0x158] sm:$0xff]
          %v606 = vld [vmem:[#allocation14 + $0x160] sm:$0xff]
          %v607 = vld [vmem:[#allocation14 + $0x168] sm:$0xff]
          %v608 = vld [vmem:[#allocation14 + $0x170] sm:$0xff]
          %v609 = vld [vmem:[#allocation14 + $0x178] sm:$0xff]
          %v610 = vld [vmem:[#allocation14 + $0x180] sm:$0xff]
          %v611 = vld [vmem:[#allocation14 + $0x188] sm:$0xff]
          %v612 = vld [vmem:[#allocation14 + $0x190] sm:$0xff]
          %v613 = vld [vmem:[#allocation14 + $0x198] sm:$0xff]
          %v614 = vld [vmem:[#allocation14 + $0x1a0] sm:$0xff]
          %v615 = vld [vmem:[#allocation14 + $0x1a8] sm:$0xff]
          %v616 = vld [vmem:[#allocation14 + $0x1b0] sm:$0xff]
          %v617 = vld [vmem:[#allocation14 + $0x1b8] sm:$0xff]
          %v618 = vld [vmem:[#allocation14 + $0x1c0] sm:$0xff]
          %v619 = vld [vmem:[#allocation14 + $0x1c8] sm:$0xff]
          %v620 = vld [vmem:[#allocation14 + $0x1d0] sm:$0xff]
          %v621 = vld [vmem:[#allocation14 + $0x1d8] sm:$0xff]
          %v622 = vld [vmem:[#allocation14 + $0x1e0] sm:$0xff]
          %v623 = vld [vmem:[#allocation14 + $0x1e8] sm:$0xff]
          %v624 = vld [vmem:[#allocation14 + $0x1f0] sm:$0xff]
          %v625 = vld [vmem:[#allocation14 + $0x1f8] sm:$0xff]
          %v626 = vld [vmem:[#allocation14 + $0x200] sm:$0xff]
          %v627 = vld [vmem:[#allocation14 + $0x208] sm:$0xff]
          %v628 = vld [vmem:[#allocation14 + $0x210] sm:$0xff]
          %v629 = vld [vmem:[#allocation14 + $0x218] sm:$0xff]
          %v630 = vld [vmem:[#allocation14 + $0x220] sm:$0xff]
          %v631 = vld [vmem:[#allocation14 + $0x228] sm:$0xff]
          %v632 = vld [vmem:[#allocation14 + $0x230] sm:$0xff]
          %v633 = vld [vmem:[#allocation14 + $0x238] sm:$0xff]
          %v634 = vld [vmem:[#allocation14 + $0x240] sm:$0xff]
          %v635 = vld [vmem:[#allocation14 + $0x248] sm:$0xff]
          %v636 = vld [vmem:[#allocation14 + $0x250] sm:$0xff]
          %v637 = vld [vmem:[#allocation14 + $0x258] sm:$0xff]
          %v638 = vld [vmem:[#allocation14 + $0x260] sm:$0xff]
          %v639 = vld [vmem:[#allocation14 + $0x268] sm:$0xff]
          %v640 = vld [vmem:[#allocation14 + $0x270] sm:$0xff]
          %v641 = vld [vmem:[#allocation14 + $0x278] sm:$0xff]
          %v642 = vld [vmem:[#allocation14 + $0x280] sm:$0xff]
          %v643 = vld [vmem:[#allocation14 + $0x288] sm:$0xff]
          %v644 = vld [vmem:[#allocation14 + $0x290] sm:$0xff]
          %v645 = vld [vmem:[#allocation14 + $0x298] sm:$0xff]
          %v646 = vld [vmem:[#allocation14 + $0x2a0] sm:$0xff]
          %v647 = vld [vmem:[#allocation14 + $0x2a8] sm:$0xff]
          %v648 = vld [vmem:[#allocation14 + $0x2b0] sm:$0xff]
          %v649 = vld [vmem:[#allocation14 + $0x2b8] sm:$0xff]
          %v650 = vld [vmem:[#allocation14 + $0x2c0] sm:$0xff]
          %v651 = vld [vmem:[#allocation14 + $0x2c8] sm:$0xff]
          %v652 = vld [vmem:[#allocation14 + $0x2d0] sm:$0xff]
          %v653 = vld [vmem:[#allocation14 + $0x2d8] sm:$0xff]
          %v654 = vld [vmem:[#allocation14 + $0x2e0] sm:$0xff]
          %v655 = vld [vmem:[#allocation14 + $0x2e8] sm:$0xff]
          %v656 = vld [vmem:[#allocation14 + $0x2f0] sm:$0xff]
          %v657 = vld [vmem:[#allocation14 + $0x2f8] sm:$0xff]
          %v658 = vld [vmem:[#allocation14 + $0x300] sm:$0xff]
          %v659 = vld [vmem:[#allocation14 + $0x308] sm:$0xff]
          %v660 = vld [vmem:[#allocation14 + $0x310] sm:$0xff]
          %v661 = vld [vmem:[#allocation14 + $0x318] sm:$0xff]
          %v662 = vld [vmem:[#allocation14 + $0x320] sm:$0xff]
          %v663 = vld [vmem:[#allocation14 + $0x328] sm:$0xff]
          %v664 = vld [vmem:[#allocation14 + $0x330] sm:$0xff]
          %v665 = vld [vmem:[#allocation14 + $0x338] sm:$0xff]
          %v666 = vld [vmem:[#allocation14 + $0x340] sm:$0xff]
          %v667 = vld [vmem:[#allocation14 + $0x348] sm:$0xff]
          %v668 = vld [vmem:[#allocation14 + $0x350] sm:$0xff]
          %v669 = vld [vmem:[#allocation14 + $0x358] sm:$0xff]
          %v670 = vld [vmem:[#allocation14 + $0x360] sm:$0xff]
          %v671 = vld [vmem:[#allocation14 + $0x368] sm:$0xff]
          %v672 = vld [vmem:[#allocation14 + $0x370] sm:$0xff]
          %v673 = vld [vmem:[#allocation14 + $0x378] sm:$0xff]
          %v674 = vld [vmem:[#allocation14 + $0x380] sm:$0xff]
          %v675 = vld [vmem:[#allocation14 + $0x388] sm:$0xff]
          %v676 = vld [vmem:[#allocation14 + $0x390] sm:$0xff]
          %v677 = vld [vmem:[#allocation14 + $0x398] sm:$0xff]
          %v678 = vld [vmem:[#allocation14 + $0x3a0] sm:$0xff]
          %v679 = vld [vmem:[#allocation14 + $0x3a8] sm:$0xff]
          %v680 = vld [vmem:[#allocation14 + $0x3b0] sm:$0xff]
          %v681 = vld [vmem:[#allocation14 + $0x3b8] sm:$0xff]
          %v682 = vld [vmem:[#allocation14 + $0x3c0] sm:$0xff]
          %v683 = vld [vmem:[#allocation14 + $0x3c8] sm:$0xff]
          %v684 = vld [vmem:[#allocation14 + $0x3d0] sm:$0xff]
          %v685 = vld [vmem:[#allocation14 + $0x3d8] sm:$0xff]
          %v686 = vld [vmem:[#allocation14 + $0x3e0] sm:$0xff]
          %v687 = vld [vmem:[#allocation14 + $0x3e8] sm:$0xff]
          %v688 = vld [vmem:[#allocation14 + $0x3f0] sm:$0xff]
          %v689 = vld [vmem:[#allocation14 + $0x3f8] sm:$0xff]
          %v818 = vunpack.c.l.b16 %v562
          %v819 = vunpack.c.h.b16 %v562
          %v820 = vunpack.c.l.b16 %v563
          %v821 = vunpack.c.h.b16 %v563
          %v822 = vunpack.c.l.b16 %v564
          %v823 = vunpack.c.h.b16 %v564
          %v824 = vunpack.c.l.b16 %v565
          %v825 = vunpack.c.h.b16 %v565
          %v826 = vunpack.c.l.b16 %v566
          %v827 = vunpack.c.h.b16 %v566
          %v828 = vunpack.c.l.b16 %v567
          %v829 = vunpack.c.h.b16 %v567
          %v830 = vunpack.c.l.b16 %v568
          %v831 = vunpack.c.h.b16 %v568
          %v832 = vunpack.c.l.b16 %v569
          %v833 = vunpack.c.h.b16 %v569
          %v834 = vunpack.c.l.b16 %v570
          %v835 = vunpack.c.h.b16 %v570
          %v836 = vunpack.c.l.b16 %v571
          %v837 = vunpack.c.h.b16 %v571
          %v838 = vunpack.c.l.b16 %v572
          %v839 = vunpack.c.h.b16 %v572
          %v840 = vunpack.c.l.b16 %v573
          %v841 = vunpack.c.h.b16 %v573
          %v842 = vunpack.c.l.b16 %v574
          %v843 = vunpack.c.h.b16 %v574
          %v844 = vunpack.c.l.b16 %v575
          %v845 = vunpack.c.h.b16 %v575
          %v846 = vunpack.c.l.b16 %v576
          %v847 = vunpack.c.h.b16 %v576
          %v848 = vunpack.c.l.b16 %v577
          %v849 = vunpack.c.h.b16 %v577
          %v850 = vunpack.c.l.b16 %v578
          %v851 = vunpack.c.h.b16 %v578
          %v852 = vunpack.c.l.b16 %v579
          %v853 = vunpack.c.h.b16 %v579
          %v854 = vunpack.c.l.b16 %v580
          %v855 = vunpack.c.h.b16 %v580
          %v856 = vunpack.c.l.b16 %v581
          %v857 = vunpack.c.h.b16 %v581
          %v858 = vunpack.c.l.b16 %v582
          %v859 = vunpack.c.h.b16 %v582
          %v860 = vunpack.c.l.b16 %v583
          %v861 = vunpack.c.h.b16 %v583
          %v862 = vunpack.c.l.b16 %v584
          %v863 = vunpack.c.h.b16 %v584
          %v864 = vunpack.c.l.b16 %v585
          %v865 = vunpack.c.h.b16 %v585
          %v866 = vunpack.c.l.b16 %v586
          %v867 = vunpack.c.h.b16 %v586
          %v868 = vunpack.c.l.b16 %v587
          %v869 = vunpack.c.h.b16 %v587
          %v870 = vunpack.c.l.b16 %v588
          %v871 = vunpack.c.h.b16 %v588
          %v872 = vunpack.c.l.b16 %v589
          %v873 = vunpack.c.h.b16 %v589
          %v874 = vunpack.c.l.b16 %v590
          %v875 = vunpack.c.h.b16 %v590
          %v876 = vunpack.c.l.b16 %v591
          %v877 = vunpack.c.h.b16 %v591
          %v878 = vunpack.c.l.b16 %v592
          %v879 = vunpack.c.h.b16 %v592
          %v880 = vunpack.c.l.b16 %v593
          %v881 = vunpack.c.h.b16 %v593
          %v882 = vunpack.c.l.b16 %v594
          %v883 = vunpack.c.h.b16 %v594
          %v884 = vunpack.c.l.b16 %v595
          %v885 = vunpack.c.h.b16 %v595
          %v886 = vunpack.c.l.b16 %v596
          %v887 = vunpack.c.h.b16 %v596
          %v888 = vunpack.c.l.b16 %v597
          %v889 = vunpack.c.h.b16 %v597
          %v890 = vunpack.c.l.b16 %v598
          %v891 = vunpack.c.h.b16 %v598
          %v892 = vunpack.c.l.b16 %v599
          %v893 = vunpack.c.h.b16 %v599
          %v894 = vunpack.c.l.b16 %v600
          %v895 = vunpack.c.h.b16 %v600
          %v896 = vunpack.c.l.b16 %v601
          %v897 = vunpack.c.h.b16 %v601
          %v898 = vunpack.c.l.b16 %v602
          %v899 = vunpack.c.h.b16 %v602
          %v900 = vunpack.c.l.b16 %v603
          %v901 = vunpack.c.h.b16 %v603
          %v902 = vunpack.c.l.b16 %v604
          %v903 = vunpack.c.h.b16 %v604
          %v904 = vunpack.c.l.b16 %v605
          %v905 = vunpack.c.h.b16 %v605
          %v906 = vunpack.c.l.b16 %v606
          %v907 = vunpack.c.h.b16 %v606
          %v908 = vunpack.c.l.b16 %v607
          %v909 = vunpack.c.h.b16 %v607
          %v910 = vunpack.c.l.b16 %v608
          %v911 = vunpack.c.h.b16 %v608
          %v912 = vunpack.c.l.b16 %v609
          %v913 = vunpack.c.h.b16 %v609
          %v914 = vunpack.c.l.b16 %v610
          %v915 = vunpack.c.h.b16 %v610
          %v916 = vunpack.c.l.b16 %v611
          %v917 = vunpack.c.h.b16 %v611
          %v918 = vunpack.c.l.b16 %v612
          %v919 = vunpack.c.h.b16 %v612
          %v920 = vunpack.c.l.b16 %v613
          %v921 = vunpack.c.h.b16 %v613
          %v922 = vunpack.c.l.b16 %v614
          %v923 = vunpack.c.h.b16 %v614
          %v924 = vunpack.c.l.b16 %v615
          %v925 = vunpack.c.h.b16 %v615
          %v926 = vunpack.c.l.b16 %v616
          %v927 = vunpack.c.h.b16 %v616
          %v928 = vunpack.c.l.b16 %v617
          %v929 = vunpack.c.h.b16 %v617
          %v930 = vunpack.c.l.b16 %v618
          %v931 = vunpack.c.h.b16 %v618
          %v932 = vunpack.c.l.b16 %v619
          %v933 = vunpack.c.h.b16 %v619
          %v934 = vunpack.c.l.b16 %v620
          %v935 = vunpack.c.h.b16 %v620
          %v936 = vunpack.c.l.b16 %v621
          %v937 = vunpack.c.h.b16 %v621
          %v938 = vunpack.c.l.b16 %v622
          %v939 = vunpack.c.h.b16 %v622
          %v940 = vunpack.c.l.b16 %v623
          %v941 = vunpack.c.h.b16 %v623
          %v942 = vunpack.c.l.b16 %v624
          %v943 = vunpack.c.h.b16 %v624
          %v944 = vunpack.c.l.b16 %v625
          %v945 = vunpack.c.h.b16 %v625
          %v946 = vunpack.c.l.b16 %v626
          %v947 = vunpack.c.h.b16 %v626
          %v948 = vunpack.c.l.b16 %v627
          %v949 = vunpack.c.h.b16 %v627
          %v950 = vunpack.c.l.b16 %v628
          %v951 = vunpack.c.h.b16 %v628
          %v952 = vunpack.c.l.b16 %v629
          %v953 = vunpack.c.h.b16 %v629
          %v954 = vunpack.c.l.b16 %v630
          %v955 = vunpack.c.h.b16 %v630
          %v956 = vunpack.c.l.b16 %v631
          %v957 = vunpack.c.h.b16 %v631
          %v958 = vunpack.c.l.b16 %v632
          %v959 = vunpack.c.h.b16 %v632
          %v960 = vunpack.c.l.b16 %v633
          %v961 = vunpack.c.h.b16 %v633
          %v962 = vunpack.c.l.b16 %v634
          %v963 = vunpack.c.h.b16 %v634
          %v964 = vunpack.c.l.b16 %v635
          %v965 = vunpack.c.h.b16 %v635
          %v966 = vunpack.c.l.b16 %v636
          %v967 = vunpack.c.h.b16 %v636
          %v968 = vunpack.c.l.b16 %v637
          %v969 = vunpack.c.h.b16 %v637
          %v970 = vunpack.c.l.b16 %v638
          %v971 = vunpack.c.h.b16 %v638
          %v972 = vunpack.c.l.b16 %v639
          %v973 = vunpack.c.h.b16 %v639
          %v974 = vunpack.c.l.b16 %v640
          %v975 = vunpack.c.h.b16 %v640
          %v976 = vunpack.c.l.b16 %v641
          %v977 = vunpack.c.h.b16 %v641
          %v978 = vunpack.c.l.b16 %v642
          %v979 = vunpack.c.h.b16 %v642
          %v980 = vunpack.c.l.b16 %v643
          %v981 = vunpack.c.h.b16 %v643
          %v982 = vunpack.c.l.b16 %v644
          %v983 = vunpack.c.h.b16 %v644
          %v984 = vunpack.c.l.b16 %v645
          %v985 = vunpack.c.h.b16 %v645
          %v986 = vunpack.c.l.b16 %v646
          %v987 = vunpack.c.h.b16 %v646
          %v988 = vunpack.c.l.b16 %v647
          %v989 = vunpack.c.h.b16 %v647
          %v990 = vunpack.c.l.b16 %v648
          %v991 = vunpack.c.h.b16 %v648
          %v992 = vunpack.c.l.b16 %v649
          %v993 = vunpack.c.h.b16 %v649
          %v994 = vunpack.c.l.b16 %v650
          %v995 = vunpack.c.h.b16 %v650
          %v996 = vunpack.c.l.b16 %v651
          %v997 = vunpack.c.h.b16 %v651
          %v998 = vunpack.c.l.b16 %v652
          %v999 = vunpack.c.h.b16 %v652
          %v1000 = vunpack.c.l.b16 %v653
          %v1001 = vunpack.c.h.b16 %v653
          %v1002 = vunpack.c.l.b16 %v654
          %v1003 = vunpack.c.h.b16 %v654
          %v1004 = vunpack.c.l.b16 %v655
          %v1005 = vunpack.c.h.b16 %v655
          %v1006 = vunpack.c.l.b16 %v656
          %v1007 = vunpack.c.h.b16 %v656
          %v1008 = vunpack.c.l.b16 %v657
          %v1009 = vunpack.c.h.b16 %v657
          %v1010 = vunpack.c.l.b16 %v658
          %v1011 = vunpack.c.h.b16 %v658
          %v1012 = vunpack.c.l.b16 %v659
          %v1013 = vunpack.c.h.b16 %v659
          %v1014 = vunpack.c.l.b16 %v660
          %v1015 = vunpack.c.h.b16 %v660
          %v1016 = vunpack.c.l.b16 %v661
          %v1017 = vunpack.c.h.b16 %v661
          %v1018 = vunpack.c.l.b16 %v662
          %v1019 = vunpack.c.h.b16 %v662
          %v1020 = vunpack.c.l.b16 %v663
          %v1021 = vunpack.c.h.b16 %v663
          %v1022 = vunpack.c.l.b16 %v664
          %v1023 = vunpack.c.h.b16 %v664
          %v1024 = vunpack.c.l.b16 %v665
          %v1025 = vunpack.c.h.b16 %v665
          %v1026 = vunpack.c.l.b16 %v666
          %v1027 = vunpack.c.h.b16 %v666
          %v1028 = vunpack.c.l.b16 %v667
          %v1029 = vunpack.c.h.b16 %v667
          %v1030 = vunpack.c.l.b16 %v668
          %v1031 = vunpack.c.h.b16 %v668
          %v1032 = vunpack.c.l.b16 %v669
          %v1033 = vunpack.c.h.b16 %v669
          %v1034 = vunpack.c.l.b16 %v670
          %v1035 = vunpack.c.h.b16 %v670
          %v1036 = vunpack.c.l.b16 %v671
          %v1037 = vunpack.c.h.b16 %v671
          %v1038 = vunpack.c.l.b16 %v672
          %v1039 = vunpack.c.h.b16 %v672
          %v1040 = vunpack.c.l.b16 %v673
          %v1041 = vunpack.c.h.b16 %v673
          %v1042 = vunpack.c.l.b16 %v674
          %v1043 = vunpack.c.h.b16 %v674
          %v1044 = vunpack.c.l.b16 %v675
          %v1045 = vunpack.c.h.b16 %v675
          %v1046 = vunpack.c.l.b16 %v676
          %v1047 = vunpack.c.h.b16 %v676
          %v1048 = vunpack.c.l.b16 %v677
          %v1049 = vunpack.c.h.b16 %v677
          %v1050 = vunpack.c.l.b16 %v678
          %v1051 = vunpack.c.h.b16 %v678
          %v1052 = vunpack.c.l.b16 %v679
          %v1053 = vunpack.c.h.b16 %v679
          %v1054 = vunpack.c.l.b16 %v680
          %v1055 = vunpack.c.h.b16 %v680
          %v1056 = vunpack.c.l.b16 %v681
          %v1057 = vunpack.c.h.b16 %v681
          %v1058 = vunpack.c.l.b16 %v682
          %v1059 = vunpack.c.h.b16 %v682
          %v1060 = vunpack.c.l.b16 %v683
          %v1061 = vunpack.c.h.b16 %v683
          %v1062 = vunpack.c.l.b16 %v684
          %v1063 = vunpack.c.h.b16 %v684
          %v1064 = vunpack.c.l.b16 %v685
          %v1065 = vunpack.c.h.b16 %v685
          %v1066 = vunpack.c.l.b16 %v686
          %v1067 = vunpack.c.h.b16 %v686
          %v1068 = vunpack.c.l.b16 %v687
          %v1069 = vunpack.c.h.b16 %v687
          %v1070 = vunpack.c.l.b16 %v688
          %v1071 = vunpack.c.h.b16 %v688
          %v1072 = vunpack.c.l.b16 %v689
          %v1073 = vunpack.c.h.b16 %v689
          %v1074 = vpack.c.b16 %v822, %v818
          %v1075 = vpack.c.b16 %v823, %v819
          %v1076 = vpack.c.b16 %v824, %v820
          %v1077 = vpack.c.b16 %v825, %v821
          %v1078 = vpack.c.b16 %v830, %v826
          %v1079 = vpack.c.b16 %v831, %v827
          %v1080 = vpack.c.b16 %v832, %v828
          %v1081 = vpack.c.b16 %v833, %v829
          %v1082 = vpack.c.b16 %v838, %v834
          %v1083 = vpack.c.b16 %v839, %v835
          %v1084 = vpack.c.b16 %v840, %v836
          %v1085 = vpack.c.b16 %v841, %v837
          %v1086 = vpack.c.b16 %v846, %v842
          %v1087 = vpack.c.b16 %v847, %v843
          %v1088 = vpack.c.b16 %v848, %v844
          %v1089 = vpack.c.b16 %v849, %v845
          %v1090 = vpack.c.b16 %v854, %v850
          %v1091 = vpack.c.b16 %v855, %v851
          %v1092 = vpack.c.b16 %v856, %v852
          %v1093 = vpack.c.b16 %v857, %v853
          %v1094 = vpack.c.b16 %v862, %v858
          %v1095 = vpack.c.b16 %v863, %v859
          %v1096 = vpack.c.b16 %v864, %v860
          %v1097 = vpack.c.b16 %v865, %v861
          %v1098 = vpack.c.b16 %v870, %v866
          %v1099 = vpack.c.b16 %v871, %v867
          %v1100 = vpack.c.b16 %v872, %v868
          %v1101 = vpack.c.b16 %v873, %v869
          %v1102 = vpack.c.b16 %v878, %v874
          %v1103 = vpack.c.b16 %v879, %v875
          %v1104 = vpack.c.b16 %v880, %v876
          %v1105 = vpack.c.b16 %v881, %v877
          %v1106 = vpack.c.b16 %v886, %v882
          %v1107 = vpack.c.b16 %v887, %v883
          %v1108 = vpack.c.b16 %v888, %v884
          %v1109 = vpack.c.b16 %v889, %v885
          %v1110 = vpack.c.b16 %v894, %v890
          %v1111 = vpack.c.b16 %v895, %v891
          %v1112 = vpack.c.b16 %v896, %v892
          %v1113 = vpack.c.b16 %v897, %v893
          %v1114 = vpack.c.b16 %v902, %v898
          %v1115 = vpack.c.b16 %v903, %v899
          %v1116 = vpack.c.b16 %v904, %v900
          %v1117 = vpack.c.b16 %v905, %v901
          %v1118 = vpack.c.b16 %v910, %v906
          %v1119 = vpack.c.b16 %v911, %v907
          %v1120 = vpack.c.b16 %v912, %v908
          %v1121 = vpack.c.b16 %v913, %v909
          %v1122 = vpack.c.b16 %v918, %v914
          %v1123 = vpack.c.b16 %v919, %v915
          %v1124 = vpack.c.b16 %v920, %v916
          %v1125 = vpack.c.b16 %v921, %v917
          %v1126 = vpack.c.b16 %v926, %v922
          %v1127 = vpack.c.b16 %v927, %v923
          %v1128 = vpack.c.b16 %v928, %v924
          %v1129 = vpack.c.b16 %v929, %v925
          %v1130 = vpack.c.b16 %v934, %v930
          %v1131 = vpack.c.b16 %v935, %v931
          %v1132 = vpack.c.b16 %v936, %v932
          %v1133 = vpack.c.b16 %v937, %v933
          %v1134 = vpack.c.b16 %v942, %v938
          %v1135 = vpack.c.b16 %v943, %v939
          %v1136 = vpack.c.b16 %v944, %v940
          %v1137 = vpack.c.b16 %v945, %v941
          %v1138 = vpack.c.b16 %v950, %v946
          %v1139 = vpack.c.b16 %v951, %v947
          %v1140 = vpack.c.b16 %v952, %v948
          %v1141 = vpack.c.b16 %v953, %v949
          %v1142 = vpack.c.b16 %v958, %v954
          %v1143 = vpack.c.b16 %v959, %v955
          %v1144 = vpack.c.b16 %v960, %v956
          %v1145 = vpack.c.b16 %v961, %v957
          %v1146 = vpack.c.b16 %v966, %v962
          %v1147 = vpack.c.b16 %v967, %v963
          %v1148 = vpack.c.b16 %v968, %v964
          %v1149 = vpack.c.b16 %v969, %v965
          %v1150 = vpack.c.b16 %v974, %v970
          %v1151 = vpack.c.b16 %v975, %v971
          %v1152 = vpack.c.b16 %v976, %v972
          %v1153 = vpack.c.b16 %v977, %v973
          %v1154 = vpack.c.b16 %v982, %v978
          %v1155 = vpack.c.b16 %v983, %v979
          %v1156 = vpack.c.b16 %v984, %v980
          %v1157 = vpack.c.b16 %v985, %v981
          %v1158 = vpack.c.b16 %v990, %v986
          %v1159 = vpack.c.b16 %v991, %v987
          %v1160 = vpack.c.b16 %v992, %v988
          %v1161 = vpack.c.b16 %v993, %v989
          %v1162 = vpack.c.b16 %v998, %v994
          %v1163 = vpack.c.b16 %v999, %v995
          %v1164 = vpack.c.b16 %v1000, %v996
          %v1165 = vpack.c.b16 %v1001, %v997
          %v1166 = vpack.c.b16 %v1006, %v1002
          %v1167 = vpack.c.b16 %v1007, %v1003
          %v1168 = vpack.c.b16 %v1008, %v1004
          %v1169 = vpack.c.b16 %v1009, %v1005
          %v1170 = vpack.c.b16 %v1014, %v1010
          %v1171 = vpack.c.b16 %v1015, %v1011
          %v1172 = vpack.c.b16 %v1016, %v1012
          %v1173 = vpack.c.b16 %v1017, %v1013
          %v1174 = vpack.c.b16 %v1022, %v1018
          %v1175 = vpack.c.b16 %v1023, %v1019
          %v1176 = vpack.c.b16 %v1024, %v1020
          %v1177 = vpack.c.b16 %v1025, %v1021
          %v1178 = vpack.c.b16 %v1030, %v1026
          %v1179 = vpack.c.b16 %v1031, %v1027
          %v1180 = vpack.c.b16 %v1032, %v1028
          %v1181 = vpack.c.b16 %v1033, %v1029
          %v1182 = vpack.c.b16 %v1038, %v1034
          %v1183 = vpack.c.b16 %v1039, %v1035
          %v1184 = vpack.c.b16 %v1040, %v1036
          %v1185 = vpack.c.b16 %v1041, %v1037
          %v1186 = vpack.c.b16 %v1046, %v1042
          %v1187 = vpack.c.b16 %v1047, %v1043
          %v1188 = vpack.c.b16 %v1048, %v1044
          %v1189 = vpack.c.b16 %v1049, %v1045
          %v1190 = vpack.c.b16 %v1054, %v1050
          %v1191 = vpack.c.b16 %v1055, %v1051
          %v1192 = vpack.c.b16 %v1056, %v1052
          %v1193 = vpack.c.b16 %v1057, %v1053
          %v1194 = vpack.c.b16 %v1062, %v1058
          %v1195 = vpack.c.b16 %v1063, %v1059
          %v1196 = vpack.c.b16 %v1064, %v1060
          %v1197 = vpack.c.b16 %v1065, %v1061
          %v1198 = vpack.c.b16 %v1070, %v1066
          %v1199 = vpack.c.b16 %v1071, %v1067
          %v1200 = vpack.c.b16 %v1072, %v1068
          %v1201 = vpack.c.b16 %v1073, %v1069
          %1330 = vmatprep.subr.bf16.mxu0 %v1103
          %1331 = vmatpush1.bf16.msra.mxu0 %v1102
          %1332 = vmatprep.subr.bf16.mxu0 %v1099
          %1333 = vmatpush1.bf16.msra.mxu0 %v1098
          %1334 = vmatprep.subr.bf16.mxu0 %v1095
          %1335 = vmatpush1.bf16.msra.mxu0 %v1094
          %1336 = vmatprep.subr.bf16.mxu0 %v1091
          %1337 = vmatpush1.bf16.msra.mxu0 %v1090
          %1338 = vmatprep.subr.bf16.mxu0 %v1087
          %1339 = vmatpush1.bf16.msra.mxu0 %v1086
          %1340 = vmatprep.subr.bf16.mxu0 %v1083
          %1341 = vmatpush1.bf16.msra.mxu0 %v1082
          %1342 = vmatprep.subr.bf16.mxu0 %v1079
          %1343 = vmatpush1.bf16.msra.mxu0 %v1078
          %1344 = vmatprep.subr.bf16.mxu0 %v1075
          %1345 = vmatpush1.bf16.msra.mxu0 %v1074
          %1346 = vmatprep.subr.bf16.mxu0 %v1135
          %1347 = vmatpush2.bf16.msra.mxu0 %v1134
          %1348 = vmatprep.subr.bf16.mxu0 %v1131
          %1349 = vmatpush2.bf16.msra.mxu0 %v1130
          %1350 = vmatprep.subr.bf16.mxu0 %v1127
          %1351 = vmatpush2.bf16.msra.mxu0 %v1126
          %1352 = vmatprep.subr.bf16.mxu0 %v1123
          %1353 = vmatpush2.bf16.msra.mxu0 %v1122
          %1354 = vmatprep.subr.bf16.mxu0 %v1119
          %1355 = vmatpush2.bf16.msra.mxu0 %v1118
          %1356 = vmatprep.subr.bf16.mxu0 %v1115
          %1357 = vmatpush2.bf16.msra.mxu0 %v1114
          %1358 = vmatprep.subr.bf16.mxu0 %v1111
          %1359 = vmatpush2.bf16.msra.mxu0 %v1110
          %1360 = vmatprep.subr.bf16.mxu0 %v1107
          %1361 = vmatpush2.bf16.msra.mxu0 %v1106
          %1362 = vmatprep.mubr.bf16.mxu0 %v551
          %1363 = vmatmul.mubr.bf16.gmra.mxu0 %v550
          %v1364 = vpop.f32.mrf.mxu0
          %v1365 = vadd.f32 0.0, %v1364
          %v1366 = vpop.f32.mrf.mxu0
          %v1367 = vadd.f32 0.0, %v1366
          %v1368 = vpop.f32.mrf.mxu0
          %v1369 = vpop.f32.mrf.mxu0
          %1370 = vdwg.mxu0
          %1371 = vmatprep.subr.bf16.mxu0 %v1167
          %1372 = vmatpush1.bf16.msra.mxu0 %v1166
          %1373 = vmatprep.subr.bf16.mxu0 %v1163
          %1374 = vmatpush1.bf16.msra.mxu0 %v1162
          %1375 = vmatprep.subr.bf16.mxu0 %v1159
          %1376 = vmatpush1.bf16.msra.mxu0 %v1158
          %1377 = vmatprep.subr.bf16.mxu0 %v1155
          %1378 = vmatpush1.bf16.msra.mxu0 %v1154
          %1379 = vmatprep.subr.bf16.mxu0 %v1151
          %1380 = vmatpush1.bf16.msra.mxu0 %v1150
          %1381 = vmatprep.subr.bf16.mxu0 %v1147
          %1382 = vmatpush1.bf16.msra.mxu0 %v1146
          %1383 = vmatprep.subr.bf16.mxu0 %v1143
          %1384 = vmatpush1.bf16.msra.mxu0 %v1142
          %1385 = vmatprep.subr.bf16.mxu0 %v1139
          %1386 = vmatpush1.bf16.msra.mxu0 %v1138
          %1387 = vmatprep.subr.bf16.mxu0 %v1199
          %1388 = vmatpush2.bf16.msra.mxu0 %v1198
          %1389 = vmatprep.subr.bf16.mxu0 %v1195
          %1390 = vmatpush2.bf16.msra.mxu0 %v1194
          %1391 = vmatprep.subr.bf16.mxu0 %v1191
          %1392 = vmatpush2.bf16.msra.mxu0 %v1190
          %1393 = vmatprep.subr.bf16.mxu0 %v1187
          %1394 = vmatpush2.bf16.msra.mxu0 %v1186
          %1395 = vmatprep.subr.bf16.mxu0 %v1183
          %1396 = vmatpush2.bf16.msra.mxu0 %v1182
          %1397 = vmatprep.subr.bf16.mxu0 %v1179
          %1398 = vmatpush2.bf16.msra.mxu0 %v1178
          %1399 = vmatprep.subr.bf16.mxu0 %v1175
          %1400 = vmatpush2.bf16.msra.mxu0 %v1174
          %1401 = vmatprep.subr.bf16.mxu0 %v1171
          %1402 = vmatpush2.bf16.msra.mxu0 %v1170
          %1403 = vmatprep.mubr.bf16.mxu0 %v553
          %1404 = vmatmul.mubr.bf16.gmra.mxu0 %v552
          %v1405 = vpop.f32.mrf.mxu0
          %v1406 = vadd.f32 %v1365, %v1405
          %v1407 = vpop.f32.mrf.mxu0
          %v1408 = vadd.f32 %v1367, %v1407
          %v1409 = vpop.f32.mrf.mxu0
          %v1410 = vpop.f32.mrf.mxu0
          %1411 = vdwg.mxu0
          %1412 = vmatprep.subr.bf16.mxu0 %v1105
          %1413 = vmatpush1.bf16.msra.mxu0 %v1104
          %1414 = vmatprep.subr.bf16.mxu0 %v1101
          %1415 = vmatpush1.bf16.msra.mxu0 %v1100
          %1416 = vmatprep.subr.bf16.mxu0 %v1097
          %1417 = vmatpush1.bf16.msra.mxu0 %v1096
          %1418 = vmatprep.subr.bf16.mxu0 %v1093
          %1419 = vmatpush1.bf16.msra.mxu0 %v1092
          %1420 = vmatprep.subr.bf16.mxu0 %v1089
          %1421 = vmatpush1.bf16.msra.mxu0 %v1088
          %1422 = vmatprep.subr.bf16.mxu0 %v1085
          %1423 = vmatpush1.bf16.msra.mxu0 %v1084
          %1424 = vmatprep.subr.bf16.mxu0 %v1081
          %1425 = vmatpush1.bf16.msra.mxu0 %v1080
          %1426 = vmatprep.subr.bf16.mxu0 %v1077
          %1427 = vmatpush1.bf16.msra.mxu0 %v1076
          %1428 = vmatprep.subr.bf16.mxu0 %v1137
          %1429 = vmatpush2.bf16.msra.mxu0 %v1136
          %1430 = vmatprep.subr.bf16.mxu0 %v1133
          %1431 = vmatpush2.bf16.msra.mxu0 %v1132
          %1432 = vmatprep.subr.bf16.mxu0 %v1129
          %1433 = vmatpush2.bf16.msra.mxu0 %v1128
          %1434 = vmatprep.subr.bf16.mxu0 %v1125
          %1435 = vmatpush2.bf16.msra.mxu0 %v1124
          %1436 = vmatprep.subr.bf16.mxu0 %v1121
          %1437 = vmatpush2.bf16.msra.mxu0 %v1120
          %1438 = vmatprep.subr.bf16.mxu0 %v1117
          %1439 = vmatpush2.bf16.msra.mxu0 %v1116
          %1440 = vmatprep.subr.bf16.mxu0 %v1113
          %1441 = vmatpush2.bf16.msra.mxu0 %v1112
          %1442 = vmatprep.subr.bf16.mxu0 %v1109
          %1443 = vmatpush2.bf16.msra.mxu0 %v1108
          %1444 = vmatprep.mubr.bf16.mxu0 %v551
          %1445 = vmatmul.mubr.bf16.gmra.mxu0 %v550
          %v1446 = vpop.f32.mrf.mxu0
          %v1447 = vadd.f32 0.0, %v1446
          %v1448 = vpop.f32.mrf.mxu0
          %v1449 = vadd.f32 0.0, %v1448
          %v1450 = vpop.f32.mrf.mxu0
          %v1451 = vpop.f32.mrf.mxu0
          %1452 = vdwg.mxu0
          %1453 = vmatprep.subr.bf16.mxu0 %v1169
          %1454 = vmatpush1.bf16.msra.mxu0 %v1168
          %1455 = vmatprep.subr.bf16.mxu0 %v1165
          %1456 = vmatpush1.bf16.msra.mxu0 %v1164
          %1457 = vmatprep.subr.bf16.mxu0 %v1161
          %1458 = vmatpush1.bf16.msra.mxu0 %v1160
          %1459 = vmatprep.subr.bf16.mxu0 %v1157
          %1460 = vmatpush1.bf16.msra.mxu0 %v1156
          %1461 = vmatprep.subr.bf16.mxu0 %v1153
          %1462 = vmatpush1.bf16.msra.mxu0 %v1152
          %1463 = vmatprep.subr.bf16.mxu0 %v1149
          %1464 = vmatpush1.bf16.msra.mxu0 %v1148
          %1465 = vmatprep.subr.bf16.mxu0 %v1145
          %1466 = vmatpush1.bf16.msra.mxu0 %v1144
          %1467 = vmatprep.subr.bf16.mxu0 %v1141
          %1468 = vmatpush1.bf16.msra.mxu0 %v1140
          %1469 = vmatprep.subr.bf16.mxu0 %v1201
          %1470 = vmatpush2.bf16.msra.mxu0 %v1200
          %1471 = vmatprep.subr.bf16.mxu0 %v1197
          %1472 = vmatpush2.bf16.msra.mxu0 %v1196
          %1473 = vmatprep.subr.bf16.mxu0 %v1193
          %1474 = vmatpush2.bf16.msra.mxu0 %v1192
          %1475 = vmatprep.subr.bf16.mxu0 %v1189
          %1476 = vmatpush2.bf16.msra.mxu0 %v1188
          %1477 = vmatprep.subr.bf16.mxu0 %v1185
          %1478 = vmatpush2.bf16.msra.mxu0 %v1184
          %1479 = vmatprep.subr.bf16.mxu0 %v1181
          %1480 = vmatpush2.bf16.msra.mxu0 %v1180
          %1481 = vmatprep.subr.bf16.mxu0 %v1177
          %1482 = vmatpush2.bf16.msra.mxu0 %v1176
          %1483 = vmatprep.subr.bf16.mxu0 %v1173
          %1484 = vmatpush2.bf16.msra.mxu0 %v1172
          %1485 = vmatprep.mubr.bf16.mxu0 %v553
          %1486 = vmatmul.mubr.bf16.gmra.mxu0 %v552
          %v1487 = vpop.f32.mrf.mxu0
          %v1488 = vadd.f32 %v1447, %v1487
          %v1489 = vpop.f32.mrf.mxu0
          %v1490 = vadd.f32 %v1449, %v1489
          %v1491 = vpop.f32.mrf.mxu0
          %v1492 = vpop.f32.mrf.mxu0
          %1493 = vdwg.mxu0
          %v1494 = vld [vmem:[#allocation15] sm:$0xff]
          %v1495 = vld [vmem:[#allocation15 + $0x8] sm:$0xff]
          %v1496 = vld [vmem:[#allocation15 + $0x10] sm:$0xff]
          %v1497 = vld [vmem:[#allocation15 + $0x18] sm:$0xff]
          %v1498 = vld [vmem:[#allocation15 + $0x20] sm:$0xff]
          %v1499 = vld [vmem:[#allocation15 + $0x28] sm:$0xff]
          %v1500 = vld [vmem:[#allocation15 + $0x30] sm:$0xff]
          %v1501 = vld [vmem:[#allocation15 + $0x38] sm:$0xff]
          %v1502 = vld [vmem:[#allocation15 + $0x40] sm:$0xff]
          %v1503 = vld [vmem:[#allocation15 + $0x48] sm:$0xff]
          %v1504 = vld [vmem:[#allocation15 + $0x50] sm:$0xff]
          %v1505 = vld [vmem:[#allocation15 + $0x58] sm:$0xff]
          %v1506 = vld [vmem:[#allocation15 + $0x60] sm:$0xff]
          %v1507 = vld [vmem:[#allocation15 + $0x68] sm:$0xff]
          %v1508 = vld [vmem:[#allocation15 + $0x70] sm:$0xff]
          %v1509 = vld [vmem:[#allocation15 + $0x78] sm:$0xff]
          %v1510 = vld [vmem:[#allocation15 + $0x80] sm:$0xff]
          %v1511 = vld [vmem:[#allocation15 + $0x88] sm:$0xff]
          %v1512 = vld [vmem:[#allocation15 + $0x90] sm:$0xff]
          %v1513 = vld [vmem:[#allocation15 + $0x98] sm:$0xff]
          %v1514 = vld [vmem:[#allocation15 + $0xa0] sm:$0xff]
          %v1515 = vld [vmem:[#allocation15 + $0xa8] sm:$0xff]
          %v1516 = vld [vmem:[#allocation15 + $0xb0] sm:$0xff]
          %v1517 = vld [vmem:[#allocation15 + $0xb8] sm:$0xff]
          %v1518 = vld [vmem:[#allocation15 + $0xc0] sm:$0xff]
          %v1519 = vld [vmem:[#allocation15 + $0xc8] sm:$0xff]
          %v1520 = vld [vmem:[#allocation15 + $0xd0] sm:$0xff]
          %v1521 = vld [vmem:[#allocation15 + $0xd8] sm:$0xff]
          %v1522 = vld [vmem:[#allocation15 + $0xe0] sm:$0xff]
          %v1523 = vld [vmem:[#allocation15 + $0xe8] sm:$0xff]
          %v1524 = vld [vmem:[#allocation15 + $0xf0] sm:$0xff]
          %v1525 = vld [vmem:[#allocation15 + $0xf8] sm:$0xff]
          %v1526 = vld [vmem:[#allocation15 + $0x100] sm:$0xff]
          %v1527 = vld [vmem:[#allocation15 + $0x108] sm:$0xff]
          %v1528 = vld [vmem:[#allocation15 + $0x110] sm:$0xff]
          %v1529 = vld [vmem:[#allocation15 + $0x118] sm:$0xff]
          %v1530 = vld [vmem:[#allocation15 + $0x120] sm:$0xff]
          %v1531 = vld [vmem:[#allocation15 + $0x128] sm:$0xff]
          %v1532 = vld [vmem:[#allocation15 + $0x130] sm:$0xff]
          %v1533 = vld [vmem:[#allocation15 + $0x138] sm:$0xff]
          %v1534 = vld [vmem:[#allocation15 + $0x140] sm:$0xff]
          %v1535 = vld [vmem:[#allocation15 + $0x148] sm:$0xff]
          %v1536 = vld [vmem:[#allocation15 + $0x150] sm:$0xff]
          %v1537 = vld [vmem:[#allocation15 + $0x158] sm:$0xff]
          %v1538 = vld [vmem:[#allocation15 + $0x160] sm:$0xff]
          %v1539 = vld [vmem:[#allocation15 + $0x168] sm:$0xff]
          %v1540 = vld [vmem:[#allocation15 + $0x170] sm:$0xff]
          %v1541 = vld [vmem:[#allocation15 + $0x178] sm:$0xff]
          %v1542 = vld [vmem:[#allocation15 + $0x180] sm:$0xff]
          %v1543 = vld [vmem:[#allocation15 + $0x188] sm:$0xff]
          %v1544 = vld [vmem:[#allocation15 + $0x190] sm:$0xff]
          %v1545 = vld [vmem:[#allocation15 + $0x198] sm:$0xff]
          %v1546 = vld [vmem:[#allocation15 + $0x1a0] sm:$0xff]
          %v1547 = vld [vmem:[#allocation15 + $0x1a8] sm:$0xff]
          %v1548 = vld [vmem:[#allocation15 + $0x1b0] sm:$0xff]
          %v1549 = vld [vmem:[#allocation15 + $0x1b8] sm:$0xff]
          %v1550 = vld [vmem:[#allocation15 + $0x1c0] sm:$0xff]
          %v1551 = vld [vmem:[#allocation15 + $0x1c8] sm:$0xff]
          %v1552 = vld [vmem:[#allocation15 + $0x1d0] sm:$0xff]
          %v1553 = vld [vmem:[#allocation15 + $0x1d8] sm:$0xff]
          %v1554 = vld [vmem:[#allocation15 + $0x1e0] sm:$0xff]
          %v1555 = vld [vmem:[#allocation15 + $0x1e8] sm:$0xff]
          %v1556 = vld [vmem:[#allocation15 + $0x1f0] sm:$0xff]
          %v1557 = vld [vmem:[#allocation15 + $0x1f8] sm:$0xff]
          %v1558 = vld [vmem:[#allocation15 + $0x200] sm:$0xff]
          %v1559 = vld [vmem:[#allocation15 + $0x208] sm:$0xff]
          %v1560 = vld [vmem:[#allocation15 + $0x210] sm:$0xff]
          %v1561 = vld [vmem:[#allocation15 + $0x218] sm:$0xff]
          %v1562 = vld [vmem:[#allocation15 + $0x220] sm:$0xff]
          %v1563 = vld [vmem:[#allocation15 + $0x228] sm:$0xff]
          %v1564 = vld [vmem:[#allocation15 + $0x230] sm:$0xff]
          %v1565 = vld [vmem:[#allocation15 + $0x238] sm:$0xff]
          %v1566 = vld [vmem:[#allocation15 + $0x240] sm:$0xff]
          %v1567 = vld [vmem:[#allocation15 + $0x248] sm:$0xff]
          %v1568 = vld [vmem:[#allocation15 + $0x250] sm:$0xff]
          %v1569 = vld [vmem:[#allocation15 + $0x258] sm:$0xff]
          %v1570 = vld [vmem:[#allocation15 + $0x260] sm:$0xff]
          %v1571 = vld [vmem:[#allocation15 + $0x268] sm:$0xff]
          %v1572 = vld [vmem:[#allocation15 + $0x270] sm:$0xff]
          %v1573 = vld [vmem:[#allocation15 + $0x278] sm:$0xff]
          %v1574 = vld [vmem:[#allocation15 + $0x280] sm:$0xff]
          %v1575 = vld [vmem:[#allocation15 + $0x288] sm:$0xff]
          %v1576 = vld [vmem:[#allocation15 + $0x290] sm:$0xff]
          %v1577 = vld [vmem:[#allocation15 + $0x298] sm:$0xff]
          %v1578 = vld [vmem:[#allocation15 + $0x2a0] sm:$0xff]
          %v1579 = vld [vmem:[#allocation15 + $0x2a8] sm:$0xff]
          %v1580 = vld [vmem:[#allocation15 + $0x2b0] sm:$0xff]
          %v1581 = vld [vmem:[#allocation15 + $0x2b8] sm:$0xff]
          %v1582 = vld [vmem:[#allocation15 + $0x2c0] sm:$0xff]
          %v1583 = vld [vmem:[#allocation15 + $0x2c8] sm:$0xff]
          %v1584 = vld [vmem:[#allocation15 + $0x2d0] sm:$0xff]
          %v1585 = vld [vmem:[#allocation15 + $0x2d8] sm:$0xff]
          %v1586 = vld [vmem:[#allocation15 + $0x2e0] sm:$0xff]
          %v1587 = vld [vmem:[#allocation15 + $0x2e8] sm:$0xff]
          %v1588 = vld [vmem:[#allocation15 + $0x2f0] sm:$0xff]
          %v1589 = vld [vmem:[#allocation15 + $0x2f8] sm:$0xff]
          %v1590 = vld [vmem:[#allocation15 + $0x300] sm:$0xff]
          %v1591 = vld [vmem:[#allocation15 + $0x308] sm:$0xff]
          %v1592 = vld [vmem:[#allocation15 + $0x310] sm:$0xff]
          %v1593 = vld [vmem:[#allocation15 + $0x318] sm:$0xff]
          %v1594 = vld [vmem:[#allocation15 + $0x320] sm:$0xff]
          %v1595 = vld [vmem:[#allocation15 + $0x328] sm:$0xff]
          %v1596 = vld [vmem:[#allocation15 + $0x330] sm:$0xff]
          %v1597 = vld [vmem:[#allocation15 + $0x338] sm:$0xff]
          %v1598 = vld [vmem:[#allocation15 + $0x340] sm:$0xff]
          %v1599 = vld [vmem:[#allocation15 + $0x348] sm:$0xff]
          %v1600 = vld [vmem:[#allocation15 + $0x350] sm:$0xff]
          %v1601 = vld [vmem:[#allocation15 + $0x358] sm:$0xff]
          %v1602 = vld [vmem:[#allocation15 + $0x360] sm:$0xff]
          %v1603 = vld [vmem:[#allocation15 + $0x368] sm:$0xff]
          %v1604 = vld [vmem:[#allocation15 + $0x370] sm:$0xff]
          %v1605 = vld [vmem:[#allocation15 + $0x378] sm:$0xff]
          %v1606 = vld [vmem:[#allocation15 + $0x380] sm:$0xff]
          %v1607 = vld [vmem:[#allocation15 + $0x388] sm:$0xff]
          %v1608 = vld [vmem:[#allocation15 + $0x390] sm:$0xff]
          %v1609 = vld [vmem:[#allocation15 + $0x398] sm:$0xff]
          %v1610 = vld [vmem:[#allocation15 + $0x3a0] sm:$0xff]
          %v1611 = vld [vmem:[#allocation15 + $0x3a8] sm:$0xff]
          %v1612 = vld [vmem:[#allocation15 + $0x3b0] sm:$0xff]
          %v1613 = vld [vmem:[#allocation15 + $0x3b8] sm:$0xff]
          %v1614 = vld [vmem:[#allocation15 + $0x3c0] sm:$0xff]
          %v1615 = vld [vmem:[#allocation15 + $0x3c8] sm:$0xff]
          %v1616 = vld [vmem:[#allocation15 + $0x3d0] sm:$0xff]
          %v1617 = vld [vmem:[#allocation15 + $0x3d8] sm:$0xff]
          %v1618 = vld [vmem:[#allocation15 + $0x3e0] sm:$0xff]
          %v1619 = vld [vmem:[#allocation15 + $0x3e8] sm:$0xff]
          %v1620 = vld [vmem:[#allocation15 + $0x3f0] sm:$0xff]
          %v1621 = vld [vmem:[#allocation15 + $0x3f8] sm:$0xff]
          %v1750 = vunpack.c.l.b16 %v1494
          %v1751 = vunpack.c.h.b16 %v1494
          %v1752 = vunpack.c.l.b16 %v1495
          %v1753 = vunpack.c.h.b16 %v1495
          %v1754 = vunpack.c.l.b16 %v1496
          %v1755 = vunpack.c.h.b16 %v1496
          %v1756 = vunpack.c.l.b16 %v1497
          %v1757 = vunpack.c.h.b16 %v1497
          %v1758 = vunpack.c.l.b16 %v1498
          %v1759 = vunpack.c.h.b16 %v1498
          %v1760 = vunpack.c.l.b16 %v1499
          %v1761 = vunpack.c.h.b16 %v1499
          %v1762 = vunpack.c.l.b16 %v1500
          %v1763 = vunpack.c.h.b16 %v1500
          %v1764 = vunpack.c.l.b16 %v1501
          %v1765 = vunpack.c.h.b16 %v1501
          %v1766 = vunpack.c.l.b16 %v1502
          %v1767 = vunpack.c.h.b16 %v1502
          %v1768 = vunpack.c.l.b16 %v1503
          %v1769 = vunpack.c.h.b16 %v1503
          %v1770 = vunpack.c.l.b16 %v1504
          %v1771 = vunpack.c.h.b16 %v1504
          %v1772 = vunpack.c.l.b16 %v1505
          %v1773 = vunpack.c.h.b16 %v1505
          %v1774 = vunpack.c.l.b16 %v1506
          %v1775 = vunpack.c.h.b16 %v1506
          %v1776 = vunpack.c.l.b16 %v1507
          %v1777 = vunpack.c.h.b16 %v1507
          %v1778 = vunpack.c.l.b16 %v1508
          %v1779 = vunpack.c.h.b16 %v1508
          %v1780 = vunpack.c.l.b16 %v1509
          %v1781 = vunpack.c.h.b16 %v1509
          %v1782 = vunpack.c.l.b16 %v1510
          %v1783 = vunpack.c.h.b16 %v1510
          %v1784 = vunpack.c.l.b16 %v1511
          %v1785 = vunpack.c.h.b16 %v1511
          %v1786 = vunpack.c.l.b16 %v1512
          %v1787 = vunpack.c.h.b16 %v1512
          %v1788 = vunpack.c.l.b16 %v1513
          %v1789 = vunpack.c.h.b16 %v1513
          %v1790 = vunpack.c.l.b16 %v1514
          %v1791 = vunpack.c.h.b16 %v1514
          %v1792 = vunpack.c.l.b16 %v1515
          %v1793 = vunpack.c.h.b16 %v1515
          %v1794 = vunpack.c.l.b16 %v1516
          %v1795 = vunpack.c.h.b16 %v1516
          %v1796 = vunpack.c.l.b16 %v1517
          %v1797 = vunpack.c.h.b16 %v1517
          %v1798 = vunpack.c.l.b16 %v1518
          %v1799 = vunpack.c.h.b16 %v1518
          %v1800 = vunpack.c.l.b16 %v1519
          %v1801 = vunpack.c.h.b16 %v1519
          %v1802 = vunpack.c.l.b16 %v1520
          %v1803 = vunpack.c.h.b16 %v1520
          %v1804 = vunpack.c.l.b16 %v1521
          %v1805 = vunpack.c.h.b16 %v1521
          %v1806 = vunpack.c.l.b16 %v1522
          %v1807 = vunpack.c.h.b16 %v1522
          %v1808 = vunpack.c.l.b16 %v1523
          %v1809 = vunpack.c.h.b16 %v1523
          %v1810 = vunpack.c.l.b16 %v1524
          %v1811 = vunpack.c.h.b16 %v1524
          %v1812 = vunpack.c.l.b16 %v1525
          %v1813 = vunpack.c.h.b16 %v1525
          %v1814 = vunpack.c.l.b16 %v1526
          %v1815 = vunpack.c.h.b16 %v1526
          %v1816 = vunpack.c.l.b16 %v1527
          %v1817 = vunpack.c.h.b16 %v1527
          %v1818 = vunpack.c.l.b16 %v1528
          %v1819 = vunpack.c.h.b16 %v1528
          %v1820 = vunpack.c.l.b16 %v1529
          %v1821 = vunpack.c.h.b16 %v1529
          %v1822 = vunpack.c.l.b16 %v1530
          %v1823 = vunpack.c.h.b16 %v1530
          %v1824 = vunpack.c.l.b16 %v1531
          %v1825 = vunpack.c.h.b16 %v1531
          %v1826 = vunpack.c.l.b16 %v1532
          %v1827 = vunpack.c.h.b16 %v1532
          %v1828 = vunpack.c.l.b16 %v1533
          %v1829 = vunpack.c.h.b16 %v1533
          %v1830 = vunpack.c.l.b16 %v1534
          %v1831 = vunpack.c.h.b16 %v1534
          %v1832 = vunpack.c.l.b16 %v1535
          %v1833 = vunpack.c.h.b16 %v1535
          %v1834 = vunpack.c.l.b16 %v1536
          %v1835 = vunpack.c.h.b16 %v1536
          %v1836 = vunpack.c.l.b16 %v1537
          %v1837 = vunpack.c.h.b16 %v1537
          %v1838 = vunpack.c.l.b16 %v1538
          %v1839 = vunpack.c.h.b16 %v1538
          %v1840 = vunpack.c.l.b16 %v1539
          %v1841 = vunpack.c.h.b16 %v1539
          %v1842 = vunpack.c.l.b16 %v1540
          %v1843 = vunpack.c.h.b16 %v1540
          %v1844 = vunpack.c.l.b16 %v1541
          %v1845 = vunpack.c.h.b16 %v1541
          %v1846 = vunpack.c.l.b16 %v1542
          %v1847 = vunpack.c.h.b16 %v1542
          %v1848 = vunpack.c.l.b16 %v1543
          %v1849 = vunpack.c.h.b16 %v1543
          %v1850 = vunpack.c.l.b16 %v1544
          %v1851 = vunpack.c.h.b16 %v1544
          %v1852 = vunpack.c.l.b16 %v1545
          %v1853 = vunpack.c.h.b16 %v1545
          %v1854 = vunpack.c.l.b16 %v1546
          %v1855 = vunpack.c.h.b16 %v1546
          %v1856 = vunpack.c.l.b16 %v1547
          %v1857 = vunpack.c.h.b16 %v1547
          %v1858 = vunpack.c.l.b16 %v1548
          %v1859 = vunpack.c.h.b16 %v1548
          %v1860 = vunpack.c.l.b16 %v1549
          %v1861 = vunpack.c.h.b16 %v1549
          %v1862 = vunpack.c.l.b16 %v1550
          %v1863 = vunpack.c.h.b16 %v1550
          %v1864 = vunpack.c.l.b16 %v1551
          %v1865 = vunpack.c.h.b16 %v1551
          %v1866 = vunpack.c.l.b16 %v1552
          %v1867 = vunpack.c.h.b16 %v1552
          %v1868 = vunpack.c.l.b16 %v1553
          %v1869 = vunpack.c.h.b16 %v1553
          %v1870 = vunpack.c.l.b16 %v1554
          %v1871 = vunpack.c.h.b16 %v1554
          %v1872 = vunpack.c.l.b16 %v1555
          %v1873 = vunpack.c.h.b16 %v1555
          %v1874 = vunpack.c.l.b16 %v1556
          %v1875 = vunpack.c.h.b16 %v1556
          %v1876 = vunpack.c.l.b16 %v1557
          %v1877 = vunpack.c.h.b16 %v1557
          %v1878 = vunpack.c.l.b16 %v1558
          %v1879 = vunpack.c.h.b16 %v1558
          %v1880 = vunpack.c.l.b16 %v1559
          %v1881 = vunpack.c.h.b16 %v1559
          %v1882 = vunpack.c.l.b16 %v1560
          %v1883 = vunpack.c.h.b16 %v1560
          %v1884 = vunpack.c.l.b16 %v1561
          %v1885 = vunpack.c.h.b16 %v1561
          %v1886 = vunpack.c.l.b16 %v1562
          %v1887 = vunpack.c.h.b16 %v1562
          %v1888 = vunpack.c.l.b16 %v1563
          %v1889 = vunpack.c.h.b16 %v1563
          %v1890 = vunpack.c.l.b16 %v1564
          %v1891 = vunpack.c.h.b16 %v1564
          %v1892 = vunpack.c.l.b16 %v1565
          %v1893 = vunpack.c.h.b16 %v1565
          %v1894 = vunpack.c.l.b16 %v1566
          %v1895 = vunpack.c.h.b16 %v1566
          %v1896 = vunpack.c.l.b16 %v1567
          %v1897 = vunpack.c.h.b16 %v1567
          %v1898 = vunpack.c.l.b16 %v1568
          %v1899 = vunpack.c.h.b16 %v1568
          %v1900 = vunpack.c.l.b16 %v1569
          %v1901 = vunpack.c.h.b16 %v1569
          %v1902 = vunpack.c.l.b16 %v1570
          %v1903 = vunpack.c.h.b16 %v1570
          %v1904 = vunpack.c.l.b16 %v1571
          %v1905 = vunpack.c.h.b16 %v1571
          %v1906 = vunpack.c.l.b16 %v1572
          %v1907 = vunpack.c.h.b16 %v1572
          %v1908 = vunpack.c.l.b16 %v1573
          %v1909 = vunpack.c.h.b16 %v1573
          %v1910 = vunpack.c.l.b16 %v1574
          %v1911 = vunpack.c.h.b16 %v1574
          %v1912 = vunpack.c.l.b16 %v1575
          %v1913 = vunpack.c.h.b16 %v1575
          %v1914 = vunpack.c.l.b16 %v1576
          %v1915 = vunpack.c.h.b16 %v1576
          %v1916 = vunpack.c.l.b16 %v1577
          %v1917 = vunpack.c.h.b16 %v1577
          %v1918 = vunpack.c.l.b16 %v1578
          %v1919 = vunpack.c.h.b16 %v1578
          %v1920 = vunpack.c.l.b16 %v1579
          %v1921 = vunpack.c.h.b16 %v1579
          %v1922 = vunpack.c.l.b16 %v1580
          %v1923 = vunpack.c.h.b16 %v1580
          %v1924 = vunpack.c.l.b16 %v1581
          %v1925 = vunpack.c.h.b16 %v1581
          %v1926 = vunpack.c.l.b16 %v1582
          %v1927 = vunpack.c.h.b16 %v1582
          %v1928 = vunpack.c.l.b16 %v1583
          %v1929 = vunpack.c.h.b16 %v1583
          %v1930 = vunpack.c.l.b16 %v1584
          %v1931 = vunpack.c.h.b16 %v1584
          %v1932 = vunpack.c.l.b16 %v1585
          %v1933 = vunpack.c.h.b16 %v1585
          %v1934 = vunpack.c.l.b16 %v1586
          %v1935 = vunpack.c.h.b16 %v1586
          %v1936 = vunpack.c.l.b16 %v1587
          %v1937 = vunpack.c.h.b16 %v1587
          %v1938 = vunpack.c.l.b16 %v1588
          %v1939 = vunpack.c.h.b16 %v1588
          %v1940 = vunpack.c.l.b16 %v1589
          %v1941 = vunpack.c.h.b16 %v1589
          %v1942 = vunpack.c.l.b16 %v1590
          %v1943 = vunpack.c.h.b16 %v1590
          %v1944 = vunpack.c.l.b16 %v1591
          %v1945 = vunpack.c.h.b16 %v1591
          %v1946 = vunpack.c.l.b16 %v1592
          %v1947 = vunpack.c.h.b16 %v1592
          %v1948 = vunpack.c.l.b16 %v1593
          %v1949 = vunpack.c.h.b16 %v1593
          %v1950 = vunpack.c.l.b16 %v1594
          %v1951 = vunpack.c.h.b16 %v1594
          %v1952 = vunpack.c.l.b16 %v1595
          %v1953 = vunpack.c.h.b16 %v1595
          %v1954 = vunpack.c.l.b16 %v1596
          %v1955 = vunpack.c.h.b16 %v1596
          %v1956 = vunpack.c.l.b16 %v1597
          %v1957 = vunpack.c.h.b16 %v1597
          %v1958 = vunpack.c.l.b16 %v1598
          %v1959 = vunpack.c.h.b16 %v1598
          %v1960 = vunpack.c.l.b16 %v1599
          %v1961 = vunpack.c.h.b16 %v1599
          %v1962 = vunpack.c.l.b16 %v1600
          %v1963 = vunpack.c.h.b16 %v1600
          %v1964 = vunpack.c.l.b16 %v1601
          %v1965 = vunpack.c.h.b16 %v1601
          %v1966 = vunpack.c.l.b16 %v1602
          %v1967 = vunpack.c.h.b16 %v1602
          %v1968 = vunpack.c.l.b16 %v1603
          %v1969 = vunpack.c.h.b16 %v1603
          %v1970 = vunpack.c.l.b16 %v1604
          %v1971 = vunpack.c.h.b16 %v1604
          %v1972 = vunpack.c.l.b16 %v1605
          %v1973 = vunpack.c.h.b16 %v1605
          %v1974 = vunpack.c.l.b16 %v1606
          %v1975 = vunpack.c.h.b16 %v1606
          %v1976 = vunpack.c.l.b16 %v1607
          %v1977 = vunpack.c.h.b16 %v1607
          %v1978 = vunpack.c.l.b16 %v1608
          %v1979 = vunpack.c.h.b16 %v1608
          %v1980 = vunpack.c.l.b16 %v1609
          %v1981 = vunpack.c.h.b16 %v1609
          %v1982 = vunpack.c.l.b16 %v1610
          %v1983 = vunpack.c.h.b16 %v1610
          %v1984 = vunpack.c.l.b16 %v1611
          %v1985 = vunpack.c.h.b16 %v1611
          %v1986 = vunpack.c.l.b16 %v1612
          %v1987 = vunpack.c.h.b16 %v1612
          %v1988 = vunpack.c.l.b16 %v1613
          %v1989 = vunpack.c.h.b16 %v1613
          %v1990 = vunpack.c.l.b16 %v1614
          %v1991 = vunpack.c.h.b16 %v1614
          %v1992 = vunpack.c.l.b16 %v1615
          %v1993 = vunpack.c.h.b16 %v1615
          %v1994 = vunpack.c.l.b16 %v1616
          %v1995 = vunpack.c.h.b16 %v1616
          %v1996 = vunpack.c.l.b16 %v1617
          %v1997 = vunpack.c.h.b16 %v1617
          %v1998 = vunpack.c.l.b16 %v1618
          %v1999 = vunpack.c.h.b16 %v1618
          %v2000 = vunpack.c.l.b16 %v1619
          %v2001 = vunpack.c.h.b16 %v1619
          %v2002 = vunpack.c.l.b16 %v1620
          %v2003 = vunpack.c.h.b16 %v1620
          %v2004 = vunpack.c.l.b16 %v1621
          %v2005 = vunpack.c.h.b16 %v1621
          %v2006 = vpack.c.b16 %v1754, %v1750
          %v2007 = vpack.c.b16 %v1755, %v1751
          %v2008 = vpack.c.b16 %v1756, %v1752
          %v2009 = vpack.c.b16 %v1757, %v1753
          %v2010 = vpack.c.b16 %v1762, %v1758
          %v2011 = vpack.c.b16 %v1763, %v1759
          %v2012 = vpack.c.b16 %v1764, %v1760
          %v2013 = vpack.c.b16 %v1765, %v1761
          %v2014 = vpack.c.b16 %v1770, %v1766
          %v2015 = vpack.c.b16 %v1771, %v1767
          %v2016 = vpack.c.b16 %v1772, %v1768
          %v2017 = vpack.c.b16 %v1773, %v1769
          %v2018 = vpack.c.b16 %v1778, %v1774
          %v2019 = vpack.c.b16 %v1779, %v1775
          %v2020 = vpack.c.b16 %v1780, %v1776
          %v2021 = vpack.c.b16 %v1781, %v1777
          %v2022 = vpack.c.b16 %v1786, %v1782
          %v2023 = vpack.c.b16 %v1787, %v1783
          %v2024 = vpack.c.b16 %v1788, %v1784
          %v2025 = vpack.c.b16 %v1789, %v1785
          %v2026 = vpack.c.b16 %v1794, %v1790
          %v2027 = vpack.c.b16 %v1795, %v1791
          %v2028 = vpack.c.b16 %v1796, %v1792
          %v2029 = vpack.c.b16 %v1797, %v1793
          %v2030 = vpack.c.b16 %v1802, %v1798
          %v2031 = vpack.c.b16 %v1803, %v1799
          %v2032 = vpack.c.b16 %v1804, %v1800
          %v2033 = vpack.c.b16 %v1805, %v1801
          %v2034 = vpack.c.b16 %v1810, %v1806
          %v2035 = vpack.c.b16 %v1811, %v1807
          %v2036 = vpack.c.b16 %v1812, %v1808
          %v2037 = vpack.c.b16 %v1813, %v1809
          %v2038 = vpack.c.b16 %v1818, %v1814
          %v2039 = vpack.c.b16 %v1819, %v1815
          %v2040 = vpack.c.b16 %v1820, %v1816
          %v2041 = vpack.c.b16 %v1821, %v1817
          %v2042 = vpack.c.b16 %v1826, %v1822
          %v2043 = vpack.c.b16 %v1827, %v1823
          %v2044 = vpack.c.b16 %v1828, %v1824
          %v2045 = vpack.c.b16 %v1829, %v1825
          %v2046 = vpack.c.b16 %v1834, %v1830
          %v2047 = vpack.c.b16 %v1835, %v1831
          %v2048 = vpack.c.b16 %v1836, %v1832
          %v2049 = vpack.c.b16 %v1837, %v1833
          %v2050 = vpack.c.b16 %v1842, %v1838
          %v2051 = vpack.c.b16 %v1843, %v1839
          %v2052 = vpack.c.b16 %v1844, %v1840
          %v2053 = vpack.c.b16 %v1845, %v1841
          %v2054 = vpack.c.b16 %v1850, %v1846
          %v2055 = vpack.c.b16 %v1851, %v1847
          %v2056 = vpack.c.b16 %v1852, %v1848
          %v2057 = vpack.c.b16 %v1853, %v1849
          %v2058 = vpack.c.b16 %v1858, %v1854
          %v2059 = vpack.c.b16 %v1859, %v1855
          %v2060 = vpack.c.b16 %v1860, %v1856
          %v2061 = vpack.c.b16 %v1861, %v1857
          %v2062 = vpack.c.b16 %v1866, %v1862
          %v2063 = vpack.c.b16 %v1867, %v1863
          %v2064 = vpack.c.b16 %v1868, %v1864
          %v2065 = vpack.c.b16 %v1869, %v1865
          %v2066 = vpack.c.b16 %v1874, %v1870
          %v2067 = vpack.c.b16 %v1875, %v1871
          %v2068 = vpack.c.b16 %v1876, %v1872
          %v2069 = vpack.c.b16 %v1877, %v1873
          %v2070 = vpack.c.b16 %v1882, %v1878
          %v2071 = vpack.c.b16 %v1883, %v1879
          %v2072 = vpack.c.b16 %v1884, %v1880
          %v2073 = vpack.c.b16 %v1885, %v1881
          %v2074 = vpack.c.b16 %v1890, %v1886
          %v2075 = vpack.c.b16 %v1891, %v1887
          %v2076 = vpack.c.b16 %v1892, %v1888
          %v2077 = vpack.c.b16 %v1893, %v1889
          %v2078 = vpack.c.b16 %v1898, %v1894
          %v2079 = vpack.c.b16 %v1899, %v1895
          %v2080 = vpack.c.b16 %v1900, %v1896
          %v2081 = vpack.c.b16 %v1901, %v1897
          %v2082 = vpack.c.b16 %v1906, %v1902
          %v2083 = vpack.c.b16 %v1907, %v1903
          %v2084 = vpack.c.b16 %v1908, %v1904
          %v2085 = vpack.c.b16 %v1909, %v1905
          %v2086 = vpack.c.b16 %v1914, %v1910
          %v2087 = vpack.c.b16 %v1915, %v1911
          %v2088 = vpack.c.b16 %v1916, %v1912
          %v2089 = vpack.c.b16 %v1917, %v1913
          %v2090 = vpack.c.b16 %v1922, %v1918
          %v2091 = vpack.c.b16 %v1923, %v1919
          %v2092 = vpack.c.b16 %v1924, %v1920
          %v2093 = vpack.c.b16 %v1925, %v1921
          %v2094 = vpack.c.b16 %v1930, %v1926
          %v2095 = vpack.c.b16 %v1931, %v1927
          %v2096 = vpack.c.b16 %v1932, %v1928
          %v2097 = vpack.c.b16 %v1933, %v1929
          %v2098 = vpack.c.b16 %v1938, %v1934
          %v2099 = vpack.c.b16 %v1939, %v1935
          %v2100 = vpack.c.b16 %v1940, %v1936
          %v2101 = vpack.c.b16 %v1941, %v1937
          %v2102 = vpack.c.b16 %v1946, %v1942
          %v2103 = vpack.c.b16 %v1947, %v1943
          %v2104 = vpack.c.b16 %v1948, %v1944
          %v2105 = vpack.c.b16 %v1949, %v1945
          %v2106 = vpack.c.b16 %v1954, %v1950
          %v2107 = vpack.c.b16 %v1955, %v1951
          %v2108 = vpack.c.b16 %v1956, %v1952
          %v2109 = vpack.c.b16 %v1957, %v1953
          %v2110 = vpack.c.b16 %v1962, %v1958
          %v2111 = vpack.c.b16 %v1963, %v1959
          %v2112 = vpack.c.b16 %v1964, %v1960
          %v2113 = vpack.c.b16 %v1965, %v1961
          %v2114 = vpack.c.b16 %v1970, %v1966
          %v2115 = vpack.c.b16 %v1971, %v1967
          %v2116 = vpack.c.b16 %v1972, %v1968
          %v2117 = vpack.c.b16 %v1973, %v1969
          %v2118 = vpack.c.b16 %v1978, %v1974
          %v2119 = vpack.c.b16 %v1979, %v1975
          %v2120 = vpack.c.b16 %v1980, %v1976
          %v2121 = vpack.c.b16 %v1981, %v1977
          %v2122 = vpack.c.b16 %v1986, %v1982
          %v2123 = vpack.c.b16 %v1987, %v1983
          %v2124 = vpack.c.b16 %v1988, %v1984
          %v2125 = vpack.c.b16 %v1989, %v1985
          %v2126 = vpack.c.b16 %v1994, %v1990
          %v2127 = vpack.c.b16 %v1995, %v1991
          %v2128 = vpack.c.b16 %v1996, %v1992
          %v2129 = vpack.c.b16 %v1997, %v1993
          %v2130 = vpack.c.b16 %v2002, %v1998
          %v2131 = vpack.c.b16 %v2003, %v1999
          %v2132 = vpack.c.b16 %v2004, %v2000
          %v2133 = vpack.c.b16 %v2005, %v2001
          %2262 = vmatprep.subr.bf16.mxu0 %v2035
          %2263 = vmatpush1.bf16.msra.mxu0 %v2034
          %2264 = vmatprep.subr.bf16.mxu0 %v2031
          %2265 = vmatpush1.bf16.msra.mxu0 %v2030
          %2266 = vmatprep.subr.bf16.mxu0 %v2027
          %2267 = vmatpush1.bf16.msra.mxu0 %v2026
          %2268 = vmatprep.subr.bf16.mxu0 %v2023
          %2269 = vmatpush1.bf16.msra.mxu0 %v2022
          %2270 = vmatprep.subr.bf16.mxu0 %v2019
          %2271 = vmatpush1.bf16.msra.mxu0 %v2018
          %2272 = vmatprep.subr.bf16.mxu0 %v2015
          %2273 = vmatpush1.bf16.msra.mxu0 %v2014
          %2274 = vmatprep.subr.bf16.mxu0 %v2011
          %2275 = vmatpush1.bf16.msra.mxu0 %v2010
          %2276 = vmatprep.subr.bf16.mxu0 %v2007
          %2277 = vmatpush1.bf16.msra.mxu0 %v2006
          %2278 = vmatprep.subr.bf16.mxu0 %v2067
          %2279 = vmatpush2.bf16.msra.mxu0 %v2066
          %2280 = vmatprep.subr.bf16.mxu0 %v2063
          %2281 = vmatpush2.bf16.msra.mxu0 %v2062
          %2282 = vmatprep.subr.bf16.mxu0 %v2059
          %2283 = vmatpush2.bf16.msra.mxu0 %v2058
          %2284 = vmatprep.subr.bf16.mxu0 %v2055
          %2285 = vmatpush2.bf16.msra.mxu0 %v2054
          %2286 = vmatprep.subr.bf16.mxu0 %v2051
          %2287 = vmatpush2.bf16.msra.mxu0 %v2050
          %2288 = vmatprep.subr.bf16.mxu0 %v2047
          %2289 = vmatpush2.bf16.msra.mxu0 %v2046
          %2290 = vmatprep.subr.bf16.mxu0 %v2043
          %2291 = vmatpush2.bf16.msra.mxu0 %v2042
          %2292 = vmatprep.subr.bf16.mxu0 %v2039
          %2293 = vmatpush2.bf16.msra.mxu0 %v2038
          %2294 = vmatprep.mubr.bf16.mxu0 %v559
          %2295 = vmatmul.mubr.bf16.gmra.mxu0 %v558
          %v2296 = vpop.f32.mrf.mxu0
          %v2297 = vadd.f32 0.0, %v2296
          %v2298 = vpop.f32.mrf.mxu0
          %v2299 = vadd.f32 0.0, %v2298
          %v2300 = vpop.f32.mrf.mxu0
          %v2301 = vpop.f32.mrf.mxu0
          %2302 = vdwg.mxu0
          %2303 = vmatprep.subr.bf16.mxu0 %v2099
          %2304 = vmatpush1.bf16.msra.mxu0 %v2098
          %2305 = vmatprep.subr.bf16.mxu0 %v2095
          %2306 = vmatpush1.bf16.msra.mxu0 %v2094
          %2307 = vmatprep.subr.bf16.mxu0 %v2091
          %2308 = vmatpush1.bf16.msra.mxu0 %v2090
          %2309 = vmatprep.subr.bf16.mxu0 %v2087
          %2310 = vmatpush1.bf16.msra.mxu0 %v2086
          %2311 = vmatprep.subr.bf16.mxu0 %v2083
          %2312 = vmatpush1.bf16.msra.mxu0 %v2082
          %2313 = vmatprep.subr.bf16.mxu0 %v2079
          %2314 = vmatpush1.bf16.msra.mxu0 %v2078
          %2315 = vmatprep.subr.bf16.mxu0 %v2075
          %2316 = vmatpush1.bf16.msra.mxu0 %v2074
          %2317 = vmatprep.subr.bf16.mxu0 %v2071
          %2318 = vmatpush1.bf16.msra.mxu0 %v2070
          %2319 = vmatprep.subr.bf16.mxu0 %v2131
          %2320 = vmatpush2.bf16.msra.mxu0 %v2130
          %2321 = vmatprep.subr.bf16.mxu0 %v2127
          %2322 = vmatpush2.bf16.msra.mxu0 %v2126
          %2323 = vmatprep.subr.bf16.mxu0 %v2123
          %2324 = vmatpush2.bf16.msra.mxu0 %v2122
          %2325 = vmatprep.subr.bf16.mxu0 %v2119
          %2326 = vmatpush2.bf16.msra.mxu0 %v2118
          %2327 = vmatprep.subr.bf16.mxu0 %v2115
          %2328 = vmatpush2.bf16.msra.mxu0 %v2114
          %2329 = vmatprep.subr.bf16.mxu0 %v2111
          %2330 = vmatpush2.bf16.msra.mxu0 %v2110
          %2331 = vmatprep.subr.bf16.mxu0 %v2107
          %2332 = vmatpush2.bf16.msra.mxu0 %v2106
          %2333 = vmatprep.subr.bf16.mxu0 %v2103
          %2334 = vmatpush2.bf16.msra.mxu0 %v2102
          %2335 = vmatprep.mubr.bf16.mxu0 %v561
          %2336 = vmatmul.mubr.bf16.gmra.mxu0 %v560
          %v2337 = vpop.f32.mrf.mxu0
          %v2338 = vadd.f32 %v2297, %v2337
          %v2339 = vpop.f32.mrf.mxu0
          %v2340 = vadd.f32 %v2299, %v2339
          %v2341 = vpop.f32.mrf.mxu0
          %v2342 = vpop.f32.mrf.mxu0
          %2343 = vdwg.mxu0
          %2344 = vmatprep.subr.bf16.mxu0 %v2037
          %2345 = vmatpush1.bf16.msra.mxu0 %v2036
          %2346 = vmatprep.subr.bf16.mxu0 %v2033
          %2347 = vmatpush1.bf16.msra.mxu0 %v2032
          %2348 = vmatprep.subr.bf16.mxu0 %v2029
          %2349 = vmatpush1.bf16.msra.mxu0 %v2028
          %2350 = vmatprep.subr.bf16.mxu0 %v2025
          %2351 = vmatpush1.bf16.msra.mxu0 %v2024
          %2352 = vmatprep.subr.bf16.mxu0 %v2021
          %2353 = vmatpush1.bf16.msra.mxu0 %v2020
          %2354 = vmatprep.subr.bf16.mxu0 %v2017
          %2355 = vmatpush1.bf16.msra.mxu0 %v2016
          %2356 = vmatprep.subr.bf16.mxu0 %v2013
          %2357 = vmatpush1.bf16.msra.mxu0 %v2012
          %2358 = vmatprep.subr.bf16.mxu0 %v2009
          %2359 = vmatpush1.bf16.msra.mxu0 %v2008
          %2360 = vmatprep.subr.bf16.mxu0 %v2069
          %2361 = vmatpush2.bf16.msra.mxu0 %v2068
          %2362 = vmatprep.subr.bf16.mxu0 %v2065
          %2363 = vmatpush2.bf16.msra.mxu0 %v2064
          %2364 = vmatprep.subr.bf16.mxu0 %v2061
          %2365 = vmatpush2.bf16.msra.mxu0 %v2060
          %2366 = vmatprep.subr.bf16.mxu0 %v2057
          %2367 = vmatpush2.bf16.msra.mxu0 %v2056
          %2368 = vmatprep.subr.bf16.mxu0 %v2053
          %2369 = vmatpush2.bf16.msra.mxu0 %v2052
          %2370 = vmatprep.subr.bf16.mxu0 %v2049
          %2371 = vmatpush2.bf16.msra.mxu0 %v2048
          %2372 = vmatprep.subr.bf16.mxu0 %v2045
          %2373 = vmatpush2.bf16.msra.mxu0 %v2044
          %2374 = vmatprep.subr.bf16.mxu0 %v2041
          %2375 = vmatpush2.bf16.msra.mxu0 %v2040
          %2376 = vmatprep.mubr.bf16.mxu0 %v559
          %2377 = vmatmul.mubr.bf16.gmra.mxu0 %v558
          %v2378 = vpop.f32.mrf.mxu0
          %v2379 = vadd.f32 0.0, %v2378
          %v2380 = vpop.f32.mrf.mxu0
          %v2381 = vadd.f32 0.0, %v2380
          %v2382 = vpop.f32.mrf.mxu0
          %v2383 = vpop.f32.mrf.mxu0
          %2384 = vdwg.mxu0
          %2385 = vmatprep.subr.bf16.mxu0 %v2101
          %2386 = vmatpush1.bf16.msra.mxu0 %v2100
          %2387 = vmatprep.subr.bf16.mxu0 %v2097
          %2388 = vmatpush1.bf16.msra.mxu0 %v2096
          %2389 = vmatprep.subr.bf16.mxu0 %v2093
          %2390 = vmatpush1.bf16.msra.mxu0 %v2092
          %2391 = vmatprep.subr.bf16.mxu0 %v2089
          %2392 = vmatpush1.bf16.msra.mxu0 %v2088
          %2393 = vmatprep.subr.bf16.mxu0 %v2085
          %2394 = vmatpush1.bf16.msra.mxu0 %v2084
          %2395 = vmatprep.subr.bf16.mxu0 %v2081
          %2396 = vmatpush1.bf16.msra.mxu0 %v2080
          %2397 = vmatprep.subr.bf16.mxu0 %v2077
          %2398 = vmatpush1.bf16.msra.mxu0 %v2076
          %2399 = vmatprep.subr.bf16.mxu0 %v2073
          %2400 = vmatpush1.bf16.msra.mxu0 %v2072
          %2401 = vmatprep.subr.bf16.mxu0 %v2133
          %2402 = vmatpush2.bf16.msra.mxu0 %v2132
          %2403 = vmatprep.subr.bf16.mxu0 %v2129
          %2404 = vmatpush2.bf16.msra.mxu0 %v2128
          %2405 = vmatprep.subr.bf16.mxu0 %v2125
          %2406 = vmatpush2.bf16.msra.mxu0 %v2124
          %2407 = vmatprep.subr.bf16.mxu0 %v2121
          %2408 = vmatpush2.bf16.msra.mxu0 %v2120
          %2409 = vmatprep.subr.bf16.mxu0 %v2117
          %2410 = vmatpush2.bf16.msra.mxu0 %v2116
          %2411 = vmatprep.subr.bf16.mxu0 %v2113
          %2412 = vmatpush2.bf16.msra.mxu0 %v2112
          %2413 = vmatprep.subr.bf16.mxu0 %v2109
          %2414 = vmatpush2.bf16.msra.mxu0 %v2108
          %2415 = vmatprep.subr.bf16.mxu0 %v2105
          %2416 = vmatpush2.bf16.msra.mxu0 %v2104
          %2417 = vmatprep.mubr.bf16.mxu0 %v561
          %2418 = vmatmul.mubr.bf16.gmra.mxu0 %v560
          %v2419 = vpop.f32.mrf.mxu0
          %v2420 = vadd.f32 %v2379, %v2419
          %v2421 = vpop.f32.mrf.mxu0
          %v2422 = vadd.f32 %v2381, %v2421
          %v2423 = vpop.f32.mrf.mxu0
          %v2424 = vpop.f32.mrf.mxu0
          %2425 = vdwg.mxu0
          %v2426 = vpack.c.bf16 %v1406, %v1406
          %vm2427 = vcmask 519168
          %2428 = vst.msk [vmem:[#allocation2] sm:$0xf] %vm2427, %v2426
          %v2429 = vpack.c.bf16 %v2338, %v2338
          %2430 = vst.msk [vmem:[#allocation3] sm:$0xf] %vm2427, %v2429
          %v2432 = vunpack.c.l.b16 %v2426
          %v2433 = vpack.c.b16 %v2432, %v2432
          %2434 = vrot.lane.b32.xlu0 %v2433, 64
          %v2435 = vpop.permute.xlu0 %2434
          %s2437 = scalar_lea.vmem [#allocation2], 4
          %2438 = vst.msk [vmem:[%s2437] sm:$0xf] %vm2427, %v2435
          %v2440 = vunpack.c.l.b16 %v2429
          %v2441 = vpack.c.b16 %v2440, %v2440
          %2442 = vrot.lane.b32.xlu0 %v2441, 64
          %v2443 = vpop.permute.xlu0 %2442
          %s2445 = scalar_lea.vmem [#allocation3], 4
          %2446 = vst.msk [vmem:[%s2445] sm:$0xf] %vm2427, %v2443
          %v2447 = vpack.c.bf16 %v1408, %v1408
          %s2448 = scalar_lea.vmem [#allocation2], 8
          %2449 = vst.msk [vmem:[%s2448] sm:$0xf] %vm2427, %v2447
          %v2450 = vpack.c.bf16 %v2340, %v2340
          %s2451 = scalar_lea.vmem [#allocation3], 8
          %2452 = vst.msk [vmem:[%s2451] sm:$0xf] %vm2427, %v2450
          %v2454 = vunpack.c.l.b16 %v2447
          %v2455 = vpack.c.b16 %v2454, %v2454
          %2456 = vrot.lane.b32.xlu0 %v2455, 64
          %v2457 = vpop.permute.xlu0 %2456
          %s2459 = scalar_lea.vmem [#allocation2], 12
          %2460 = vst.msk [vmem:[%s2459] sm:$0xf] %vm2427, %v2457
          %v2462 = vunpack.c.l.b16 %v2450
          %v2463 = vpack.c.b16 %v2462, %v2462
          %2464 = vrot.lane.b32.xlu0 %v2463, 64
          %v2465 = vpop.permute.xlu0 %2464
          %s2467 = scalar_lea.vmem [#allocation3], 12
          %2468 = vst.msk [vmem:[%s2467] sm:$0xf] %vm2427, %v2465
          %v2469 = vpack.c.bf16 %v1488, %v1488
          %s2470 = scalar_lea.vmem [#allocation2], 16
          %2471 = vst.msk [vmem:[%s2470] sm:$0xf] %vm2427, %v2469
          %v2472 = vpack.c.bf16 %v2420, %v2420
          %s2473 = scalar_lea.vmem [#allocation3], 16
          %2474 = vst.msk [vmem:[%s2473] sm:$0xf] %vm2427, %v2472
          %v2476 = vunpack.c.l.b16 %v2469
          %v2477 = vpack.c.b16 %v2476, %v2476
          %2478 = vrot.lane.b32.xlu0 %v2477, 64
          %v2479 = vpop.permute.xlu0 %2478
          %s2481 = scalar_lea.vmem [#allocation2], 20
          %2482 = vst.msk [vmem:[%s2481] sm:$0xf] %vm2427, %v2479
          %v2484 = vunpack.c.l.b16 %v2472
          %v2485 = vpack.c.b16 %v2484, %v2484
          %2486 = vrot.lane.b32.xlu0 %v2485, 64
          %v2487 = vpop.permute.xlu0 %2486
          %s2489 = scalar_lea.vmem [#allocation3], 20
          %2490 = vst.msk [vmem:[%s2489] sm:$0xf] %vm2427, %v2487
          %v2491 = vpack.c.bf16 %v1490, %v1490
          %s2492 = scalar_lea.vmem [#allocation2], 24
          %2493 = vst.msk [vmem:[%s2492] sm:$0xf] %vm2427, %v2491
          %v2494 = vpack.c.bf16 %v2422, %v2422
          %s2495 = scalar_lea.vmem [#allocation3], 24
          %2496 = vst.msk [vmem:[%s2495] sm:$0xf] %vm2427, %v2494
          %v2498 = vunpack.c.l.b16 %v2491
          %v2499 = vpack.c.b16 %v2498, %v2498
          %2500 = vrot.lane.b32.xlu0 %v2499, 64
          %v2501 = vpop.permute.xlu0 %2500
          %s2503 = scalar_lea.vmem [#allocation2], 28
          %2504 = vst.msk [vmem:[%s2503] sm:$0xf] %vm2427, %v2501
          %v2506 = vunpack.c.l.b16 %v2494
          %v2507 = vpack.c.b16 %v2506, %v2506
          %2508 = vrot.lane.b32.xlu0 %v2507, 64
          %v2509 = vpop.permute.xlu0 %2508
          %s2511 = scalar_lea.vmem [#allocation3], 28
          %2512 = vst.msk [vmem:[%s2511] sm:$0xf] %vm2427, %v2509
        $region84: #{tpu_custom_call.1} parent=51 // pred_fallthru
          _
        %v2513 = vld [vmem:[%s441] sm:$0xff]
        %v2514 = vld [vmem:[%s441 + $0x8] sm:$0xff]
        %v2515 = vld [vmem:[%s441 + $0x10] sm:$0xff]
        %v2516 = vld [vmem:[%s441 + $0x18] sm:$0xff]
        %v2517 = vpack.c.bf16 %v2513, %v2513
        %v2518 = vpack.c.bf16 %v2514, %v2514
        %v2519 = vpack.c.bf16 %v2515, %v2515
        %v2520 = vpack.c.bf16 %v2516, %v2516
        %v2521 = vld [vmem:[#allocation12] sm:$0xff]
        %v2522 = vld [vmem:[#allocation12 + $0x8] sm:$0xff]
        %v2523 = vld [vmem:[#allocation12 + $0x10] sm:$0xff]
        %v2524 = vld [vmem:[#allocation12 + $0x18] sm:$0xff]
        %v2525 = vld [vmem:[#allocation12 + $0x20] sm:$0xff]
        %v2526 = vld [vmem:[#allocation12 + $0x28] sm:$0xff]
        %v2527 = vld [vmem:[#allocation12 + $0x30] sm:$0xff]
        %v2528 = vld [vmem:[#allocation12 + $0x38] sm:$0xff]
        %v2529 = vld [vmem:[#allocation12 + $0x40] sm:$0xff]
        %v2530 = vld [vmem:[#allocation12 + $0x48] sm:$0xff]
        %v2531 = vld [vmem:[#allocation12 + $0x50] sm:$0xff]
        %v2532 = vld [vmem:[#allocation12 + $0x58] sm:$0xff]
        %v2533 = vld [vmem:[#allocation12 + $0x60] sm:$0xff]
        %v2534 = vld [vmem:[#allocation12 + $0x68] sm:$0xff]
        %v2535 = vld [vmem:[#allocation12 + $0x70] sm:$0xff]
        %v2536 = vld [vmem:[#allocation12 + $0x78] sm:$0xff]
        %v2537 = vld [vmem:[#allocation12 + $0x80] sm:$0xff]
        %v2538 = vld [vmem:[#allocation12 + $0x88] sm:$0xff]
        %v2539 = vld [vmem:[#allocation12 + $0x90] sm:$0xff]
        %v2540 = vld [vmem:[#allocation12 + $0x98] sm:$0xff]
        %v2541 = vld [vmem:[#allocation12 + $0xa0] sm:$0xff]
        %v2542 = vld [vmem:[#allocation12 + $0xa8] sm:$0xff]
        %v2543 = vld [vmem:[#allocation12 + $0xb0] sm:$0xff]
        %v2544 = vld [vmem:[#allocation12 + $0xb8] sm:$0xff]
        %v2545 = vld [vmem:[#allocation12 + $0xc0] sm:$0xff]
        %v2546 = vld [vmem:[#allocation12 + $0xc8] sm:$0xff]
        %v2547 = vld [vmem:[#allocation12 + $0xd0] sm:$0xff]
        %v2548 = vld [vmem:[#allocation12 + $0xd8] sm:$0xff]
        %v2549 = vld [vmem:[#allocation12 + $0xe0] sm:$0xff]
        %v2550 = vld [vmem:[#allocation12 + $0xe8] sm:$0xff]
        %v2551 = vld [vmem:[#allocation12 + $0xf0] sm:$0xff]
        %v2552 = vld [vmem:[#allocation12 + $0xf8] sm:$0xff]
        %v2553 = vld [vmem:[#allocation12 + $0x100] sm:$0xff]
        %v2554 = vld [vmem:[#allocation12 + $0x108] sm:$0xff]
        %v2555 = vld [vmem:[#allocation12 + $0x110] sm:$0xff]
        %v2556 = vld [vmem:[#allocation12 + $0x118] sm:$0xff]
        %v2557 = vld [vmem:[#allocation12 + $0x120] sm:$0xff]
        %v2558 = vld [vmem:[#allocation12 + $0x128] sm:$0xff]
        %v2559 = vld [vmem:[#allocation12 + $0x130] sm:$0xff]
        %v2560 = vld [vmem:[#allocation12 + $0x138] sm:$0xff]
        %v2561 = vld [vmem:[#allocation12 + $0x140] sm:$0xff]
        %v2562 = vld [vmem:[#allocation12 + $0x148] sm:$0xff]
        %v2563 = vld [vmem:[#allocation12 + $0x150] sm:$0xff]
        %v2564 = vld [vmem:[#allocation12 + $0x158] sm:$0xff]
        %v2565 = vld [vmem:[#allocation12 + $0x160] sm:$0xff]
        %v2566 = vld [vmem:[#allocation12 + $0x168] sm:$0xff]
        %v2567 = vld [vmem:[#allocation12 + $0x170] sm:$0xff]
        %v2568 = vld [vmem:[#allocation12 + $0x178] sm:$0xff]
        %v2569 = vld [vmem:[#allocation12 + $0x180] sm:$0xff]
        %v2570 = vld [vmem:[#allocation12 + $0x188] sm:$0xff]
        %v2571 = vld [vmem:[#allocation12 + $0x190] sm:$0xff]
        %v2572 = vld [vmem:[#allocation12 + $0x198] sm:$0xff]
        %v2573 = vld [vmem:[#allocation12 + $0x1a0] sm:$0xff]
        %v2574 = vld [vmem:[#allocation12 + $0x1a8] sm:$0xff]
        %v2575 = vld [vmem:[#allocation12 + $0x1b0] sm:$0xff]
        %v2576 = vld [vmem:[#allocation12 + $0x1b8] sm:$0xff]
        %v2577 = vld [vmem:[#allocation12 + $0x1c0] sm:$0xff]
        %v2578 = vld [vmem:[#allocation12 + $0x1c8] sm:$0xff]
        %v2579 = vld [vmem:[#allocation12 + $0x1d0] sm:$0xff]
        %v2580 = vld [vmem:[#allocation12 + $0x1d8] sm:$0xff]
        %v2581 = vld [vmem:[#allocation12 + $0x1e0] sm:$0xff]
        %v2582 = vld [vmem:[#allocation12 + $0x1e8] sm:$0xff]
        %v2583 = vld [vmem:[#allocation12 + $0x1f0] sm:$0xff]
        %v2584 = vld [vmem:[#allocation12 + $0x1f8] sm:$0xff]
        %v2585 = vld [vmem:[#allocation12 + $0x200] sm:$0xff]
        %v2586 = vld [vmem:[#allocation12 + $0x208] sm:$0xff]
        %v2587 = vld [vmem:[#allocation12 + $0x210] sm:$0xff]
        %v2588 = vld [vmem:[#allocation12 + $0x218] sm:$0xff]
        %v2589 = vld [vmem:[#allocation12 + $0x220] sm:$0xff]
        %v2590 = vld [vmem:[#allocation12 + $0x228] sm:$0xff]
        %v2591 = vld [vmem:[#allocation12 + $0x230] sm:$0xff]
        %v2592 = vld [vmem:[#allocation12 + $0x238] sm:$0xff]
        %v2593 = vld [vmem:[#allocation12 + $0x240] sm:$0xff]
        %v2594 = vld [vmem:[#allocation12 + $0x248] sm:$0xff]
        %v2595 = vld [vmem:[#allocation12 + $0x250] sm:$0xff]
        %v2596 = vld [vmem:[#allocation12 + $0x258] sm:$0xff]
        %v2597 = vld [vmem:[#allocation12 + $0x260] sm:$0xff]
        %v2598 = vld [vmem:[#allocation12 + $0x268] sm:$0xff]
        %v2599 = vld [vmem:[#allocation12 + $0x270] sm:$0xff]
        %v2600 = vld [vmem:[#allocation12 + $0x278] sm:$0xff]
        %v2601 = vld [vmem:[#allocation12 + $0x280] sm:$0xff]
        %v2602 = vld [vmem:[#allocation12 + $0x288] sm:$0xff]
        %v2603 = vld [vmem:[#allocation12 + $0x290] sm:$0xff]
        %v2604 = vld [vmem:[#allocation12 + $0x298] sm:$0xff]
        %v2605 = vld [vmem:[#allocation12 + $0x2a0] sm:$0xff]
        %v2606 = vld [vmem:[#allocation12 + $0x2a8] sm:$0xff]
        %v2607 = vld [vmem:[#allocation12 + $0x2b0] sm:$0xff]
        %v2608 = vld [vmem:[#allocation12 + $0x2b8] sm:$0xff]
        %v2609 = vld [vmem:[#allocation12 + $0x2c0] sm:$0xff]
        %v2610 = vld [vmem:[#allocation12 + $0x2c8] sm:$0xff]
        %v2611 = vld [vmem:[#allocation12 + $0x2d0] sm:$0xff]
        %v2612 = vld [vmem:[#allocation12 + $0x2d8] sm:$0xff]
        %v2613 = vld [vmem:[#allocation12 + $0x2e0] sm:$0xff]
        %v2614 = vld [vmem:[#allocation12 + $0x2e8] sm:$0xff]
        %v2615 = vld [vmem:[#allocation12 + $0x2f0] sm:$0xff]
        %v2616 = vld [vmem:[#allocation12 + $0x2f8] sm:$0xff]
        %v2617 = vld [vmem:[#allocation12 + $0x300] sm:$0xff]
        %v2618 = vld [vmem:[#allocation12 + $0x308] sm:$0xff]
        %v2619 = vld [vmem:[#allocation12 + $0x310] sm:$0xff]
        %v2620 = vld [vmem:[#allocation12 + $0x318] sm:$0xff]
        %v2621 = vld [vmem:[#allocation12 + $0x320] sm:$0xff]
        %v2622 = vld [vmem:[#allocation12 + $0x328] sm:$0xff]
        %v2623 = vld [vmem:[#allocation12 + $0x330] sm:$0xff]
        %v2624 = vld [vmem:[#allocation12 + $0x338] sm:$0xff]
        %v2625 = vld [vmem:[#allocation12 + $0x340] sm:$0xff]
        %v2626 = vld [vmem:[#allocation12 + $0x348] sm:$0xff]
        %v2627 = vld [vmem:[#allocation12 + $0x350] sm:$0xff]
        %v2628 = vld [vmem:[#allocation12 + $0x358] sm:$0xff]
        %v2629 = vld [vmem:[#allocation12 + $0x360] sm:$0xff]
        %v2630 = vld [vmem:[#allocation12 + $0x368] sm:$0xff]
        %v2631 = vld [vmem:[#allocation12 + $0x370] sm:$0xff]
        %v2632 = vld [vmem:[#allocation12 + $0x378] sm:$0xff]
        %v2633 = vld [vmem:[#allocation12 + $0x380] sm:$0xff]
        %v2634 = vld [vmem:[#allocation12 + $0x388] sm:$0xff]
        %v2635 = vld [vmem:[#allocation12 + $0x390] sm:$0xff]
        %v2636 = vld [vmem:[#allocation12 + $0x398] sm:$0xff]
        %v2637 = vld [vmem:[#allocation12 + $0x3a0] sm:$0xff]
        %v2638 = vld [vmem:[#allocation12 + $0x3a8] sm:$0xff]
        %v2639 = vld [vmem:[#allocation12 + $0x3b0] sm:$0xff]
        %v2640 = vld [vmem:[#allocation12 + $0x3b8] sm:$0xff]
        %v2641 = vld [vmem:[#allocation12 + $0x3c0] sm:$0xff]
        %v2642 = vld [vmem:[#allocation12 + $0x3c8] sm:$0xff]
        %v2643 = vld [vmem:[#allocation12 + $0x3d0] sm:$0xff]
        %v2644 = vld [vmem:[#allocation12 + $0x3d8] sm:$0xff]
        %v2645 = vld [vmem:[#allocation12 + $0x3e0] sm:$0xff]
        %v2646 = vld [vmem:[#allocation12 + $0x3e8] sm:$0xff]
        %v2647 = vld [vmem:[#allocation12 + $0x3f0] sm:$0xff]
        %v2648 = vld [vmem:[#allocation12 + $0x3f8] sm:$0xff]
        %v2777 = vunpack.c.l.b16 %v2521
        %v2778 = vunpack.c.h.b16 %v2521
        %v2779 = vunpack.c.l.b16 %v2522
        %v2780 = vunpack.c.h.b16 %v2522
        %v2781 = vunpack.c.l.b16 %v2523
        %v2782 = vunpack.c.h.b16 %v2523
        %v2783 = vunpack.c.l.b16 %v2524
        %v2784 = vunpack.c.h.b16 %v2524
        %v2785 = vunpack.c.l.b16 %v2525
        %v2786 = vunpack.c.h.b16 %v2525
        %v2787 = vunpack.c.l.b16 %v2526
        %v2788 = vunpack.c.h.b16 %v2526
        %v2789 = vunpack.c.l.b16 %v2527
        %v2790 = vunpack.c.h.b16 %v2527
        %v2791 = vunpack.c.l.b16 %v2528
        %v2792 = vunpack.c.h.b16 %v2528
        %v2793 = vunpack.c.l.b16 %v2529
        %v2794 = vunpack.c.h.b16 %v2529
        %v2795 = vunpack.c.l.b16 %v2530
        %v2796 = vunpack.c.h.b16 %v2530
        %v2797 = vunpack.c.l.b16 %v2531
        %v2798 = vunpack.c.h.b16 %v2531
        %v2799 = vunpack.c.l.b16 %v2532
        %v2800 = vunpack.c.h.b16 %v2532
        %v2801 = vunpack.c.l.b16 %v2533
        %v2802 = vunpack.c.h.b16 %v2533
        %v2803 = vunpack.c.l.b16 %v2534
        %v2804 = vunpack.c.h.b16 %v2534
        %v2805 = vunpack.c.l.b16 %v2535
        %v2806 = vunpack.c.h.b16 %v2535
        %v2807 = vunpack.c.l.b16 %v2536
        %v2808 = vunpack.c.h.b16 %v2536
        %v2809 = vunpack.c.l.b16 %v2537
        %v2810 = vunpack.c.h.b16 %v2537
        %v2811 = vunpack.c.l.b16 %v2538
        %v2812 = vunpack.c.h.b16 %v2538
        %v2813 = vunpack.c.l.b16 %v2539
        %v2814 = vunpack.c.h.b16 %v2539
        %v2815 = vunpack.c.l.b16 %v2540
        %v2816 = vunpack.c.h.b16 %v2540
        %v2817 = vunpack.c.l.b16 %v2541
        %v2818 = vunpack.c.h.b16 %v2541
        %v2819 = vunpack.c.l.b16 %v2542
        %v2820 = vunpack.c.h.b16 %v2542
        %v2821 = vunpack.c.l.b16 %v2543
        %v2822 = vunpack.c.h.b16 %v2543
        %v2823 = vunpack.c.l.b16 %v2544
        %v2824 = vunpack.c.h.b16 %v2544
        %v2825 = vunpack.c.l.b16 %v2545
        %v2826 = vunpack.c.h.b16 %v2545
        %v2827 = vunpack.c.l.b16 %v2546
        %v2828 = vunpack.c.h.b16 %v2546
        %v2829 = vunpack.c.l.b16 %v2547
        %v2830 = vunpack.c.h.b16 %v2547
        %v2831 = vunpack.c.l.b16 %v2548
        %v2832 = vunpack.c.h.b16 %v2548
        %v2833 = vunpack.c.l.b16 %v2549
        %v2834 = vunpack.c.h.b16 %v2549
        %v2835 = vunpack.c.l.b16 %v2550
        %v2836 = vunpack.c.h.b16 %v2550
        %v2837 = vunpack.c.l.b16 %v2551
        %v2838 = vunpack.c.h.b16 %v2551
        %v2839 = vunpack.c.l.b16 %v2552
        %v2840 = vunpack.c.h.b16 %v2552
        %v2841 = vunpack.c.l.b16 %v2553
        %v2842 = vunpack.c.h.b16 %v2553
        %v2843 = vunpack.c.l.b16 %v2554
        %v2844 = vunpack.c.h.b16 %v2554
        %v2845 = vunpack.c.l.b16 %v2555
        %v2846 = vunpack.c.h.b16 %v2555
        %v2847 = vunpack.c.l.b16 %v2556
        %v2848 = vunpack.c.h.b16 %v2556
        %v2849 = vunpack.c.l.b16 %v2557
        %v2850 = vunpack.c.h.b16 %v2557
        %v2851 = vunpack.c.l.b16 %v2558
        %v2852 = vunpack.c.h.b16 %v2558
        %v2853 = vunpack.c.l.b16 %v2559
        %v2854 = vunpack.c.h.b16 %v2559
        %v2855 = vunpack.c.l.b16 %v2560
        %v2856 = vunpack.c.h.b16 %v2560
        %v2857 = vunpack.c.l.b16 %v2561
        %v2858 = vunpack.c.h.b16 %v2561
        %v2859 = vunpack.c.l.b16 %v2562
        %v2860 = vunpack.c.h.b16 %v2562
        %v2861 = vunpack.c.l.b16 %v2563
        %v2862 = vunpack.c.h.b16 %v2563
        %v2863 = vunpack.c.l.b16 %v2564
        %v2864 = vunpack.c.h.b16 %v2564
        %v2865 = vunpack.c.l.b16 %v2565
        %v2866 = vunpack.c.h.b16 %v2565
        %v2867 = vunpack.c.l.b16 %v2566
        %v2868 = vunpack.c.h.b16 %v2566
        %v2869 = vunpack.c.l.b16 %v2567
        %v2870 = vunpack.c.h.b16 %v2567
        %v2871 = vunpack.c.l.b16 %v2568
        %v2872 = vunpack.c.h.b16 %v2568
        %v2873 = vunpack.c.l.b16 %v2569
        %v2874 = vunpack.c.h.b16 %v2569
        %v2875 = vunpack.c.l.b16 %v2570
        %v2876 = vunpack.c.h.b16 %v2570
        %v2877 = vunpack.c.l.b16 %v2571
        %v2878 = vunpack.c.h.b16 %v2571
        %v2879 = vunpack.c.l.b16 %v2572
        %v2880 = vunpack.c.h.b16 %v2572
        %v2881 = vunpack.c.l.b16 %v2573
        %v2882 = vunpack.c.h.b16 %v2573
        %v2883 = vunpack.c.l.b16 %v2574
        %v2884 = vunpack.c.h.b16 %v2574
        %v2885 = vunpack.c.l.b16 %v2575
        %v2886 = vunpack.c.h.b16 %v2575
        %v2887 = vunpack.c.l.b16 %v2576
        %v2888 = vunpack.c.h.b16 %v2576
        %v2889 = vunpack.c.l.b16 %v2577
        %v2890 = vunpack.c.h.b16 %v2577
        %v2891 = vunpack.c.l.b16 %v2578
        %v2892 = vunpack.c.h.b16 %v2578
        %v2893 = vunpack.c.l.b16 %v2579
        %v2894 = vunpack.c.h.b16 %v2579
        %v2895 = vunpack.c.l.b16 %v2580
        %v2896 = vunpack.c.h.b16 %v2580
        %v2897 = vunpack.c.l.b16 %v2581
        %v2898 = vunpack.c.h.b16 %v2581
        %v2899 = vunpack.c.l.b16 %v2582
        %v2900 = vunpack.c.h.b16 %v2582
        %v2901 = vunpack.c.l.b16 %v2583
        %v2902 = vunpack.c.h.b16 %v2583
        %v2903 = vunpack.c.l.b16 %v2584
        %v2904 = vunpack.c.h.b16 %v2584
        %v2905 = vunpack.c.l.b16 %v2585
        %v2906 = vunpack.c.h.b16 %v2585
        %v2907 = vunpack.c.l.b16 %v2586
        %v2908 = vunpack.c.h.b16 %v2586
        %v2909 = vunpack.c.l.b16 %v2587
        %v2910 = vunpack.c.h.b16 %v2587
        %v2911 = vunpack.c.l.b16 %v2588
        %v2912 = vunpack.c.h.b16 %v2588
        %v2913 = vunpack.c.l.b16 %v2589
        %v2914 = vunpack.c.h.b16 %v2589
        %v2915 = vunpack.c.l.b16 %v2590
        %v2916 = vunpack.c.h.b16 %v2590
        %v2917 = vunpack.c.l.b16 %v2591
        %v2918 = vunpack.c.h.b16 %v2591
        %v2919 = vunpack.c.l.b16 %v2592
        %v2920 = vunpack.c.h.b16 %v2592
        %v2921 = vunpack.c.l.b16 %v2593
        %v2922 = vunpack.c.h.b16 %v2593
        %v2923 = vunpack.c.l.b16 %v2594
        %v2924 = vunpack.c.h.b16 %v2594
        %v2925 = vunpack.c.l.b16 %v2595
        %v2926 = vunpack.c.h.b16 %v2595
        %v2927 = vunpack.c.l.b16 %v2596
        %v2928 = vunpack.c.h.b16 %v2596
        %v2929 = vunpack.c.l.b16 %v2597
        %v2930 = vunpack.c.h.b16 %v2597
        %v2931 = vunpack.c.l.b16 %v2598
        %v2932 = vunpack.c.h.b16 %v2598
        %v2933 = vunpack.c.l.b16 %v2599
        %v2934 = vunpack.c.h.b16 %v2599
        %v2935 = vunpack.c.l.b16 %v2600
        %v2936 = vunpack.c.h.b16 %v2600
        %v2937 = vunpack.c.l.b16 %v2601
        %v2938 = vunpack.c.h.b16 %v2601
        %v2939 = vunpack.c.l.b16 %v2602
        %v2940 = vunpack.c.h.b16 %v2602
        %v2941 = vunpack.c.l.b16 %v2603
        %v2942 = vunpack.c.h.b16 %v2603
        %v2943 = vunpack.c.l.b16 %v2604
        %v2944 = vunpack.c.h.b16 %v2604
        %v2945 = vunpack.c.l.b16 %v2605
        %v2946 = vunpack.c.h.b16 %v2605
        %v2947 = vunpack.c.l.b16 %v2606
        %v2948 = vunpack.c.h.b16 %v2606
        %v2949 = vunpack.c.l.b16 %v2607
        %v2950 = vunpack.c.h.b16 %v2607
        %v2951 = vunpack.c.l.b16 %v2608
        %v2952 = vunpack.c.h.b16 %v2608
        %v2953 = vunpack.c.l.b16 %v2609
        %v2954 = vunpack.c.h.b16 %v2609
        %v2955 = vunpack.c.l.b16 %v2610
        %v2956 = vunpack.c.h.b16 %v2610
        %v2957 = vunpack.c.l.b16 %v2611
        %v2958 = vunpack.c.h.b16 %v2611
        %v2959 = vunpack.c.l.b16 %v2612
        %v2960 = vunpack.c.h.b16 %v2612
        %v2961 = vunpack.c.l.b16 %v2613
        %v2962 = vunpack.c.h.b16 %v2613
        %v2963 = vunpack.c.l.b16 %v2614
        %v2964 = vunpack.c.h.b16 %v2614
        %v2965 = vunpack.c.l.b16 %v2615
        %v2966 = vunpack.c.h.b16 %v2615
        %v2967 = vunpack.c.l.b16 %v2616
        %v2968 = vunpack.c.h.b16 %v2616
        %v2969 = vunpack.c.l.b16 %v2617
        %v2970 = vunpack.c.h.b16 %v2617
        %v2971 = vunpack.c.l.b16 %v2618
        %v2972 = vunpack.c.h.b16 %v2618
        %v2973 = vunpack.c.l.b16 %v2619
        %v2974 = vunpack.c.h.b16 %v2619
        %v2975 = vunpack.c.l.b16 %v2620
        %v2976 = vunpack.c.h.b16 %v2620
        %v2977 = vunpack.c.l.b16 %v2621
        %v2978 = vunpack.c.h.b16 %v2621
        %v2979 = vunpack.c.l.b16 %v2622
        %v2980 = vunpack.c.h.b16 %v2622
        %v2981 = vunpack.c.l.b16 %v2623
        %v2982 = vunpack.c.h.b16 %v2623
        %v2983 = vunpack.c.l.b16 %v2624
        %v2984 = vunpack.c.h.b16 %v2624
        %v2985 = vunpack.c.l.b16 %v2625
        %v2986 = vunpack.c.h.b16 %v2625
        %v2987 = vunpack.c.l.b16 %v2626
        %v2988 = vunpack.c.h.b16 %v2626
        %v2989 = vunpack.c.l.b16 %v2627
        %v2990 = vunpack.c.h.b16 %v2627
        %v2991 = vunpack.c.l.b16 %v2628
        %v2992 = vunpack.c.h.b16 %v2628
        %v2993 = vunpack.c.l.b16 %v2629
        %v2994 = vunpack.c.h.b16 %v2629
        %v2995 = vunpack.c.l.b16 %v2630
        %v2996 = vunpack.c.h.b16 %v2630
        %v2997 = vunpack.c.l.b16 %v2631
        %v2998 = vunpack.c.h.b16 %v2631
        %v2999 = vunpack.c.l.b16 %v2632
        %v3000 = vunpack.c.h.b16 %v2632
        %v3001 = vunpack.c.l.b16 %v2633
        %v3002 = vunpack.c.h.b16 %v2633
        %v3003 = vunpack.c.l.b16 %v2634
        %v3004 = vunpack.c.h.b16 %v2634
        %v3005 = vunpack.c.l.b16 %v2635
        %v3006 = vunpack.c.h.b16 %v2635
        %v3007 = vunpack.c.l.b16 %v2636
        %v3008 = vunpack.c.h.b16 %v2636
        %v3009 = vunpack.c.l.b16 %v2637
        %v3010 = vunpack.c.h.b16 %v2637
        %v3011 = vunpack.c.l.b16 %v2638
        %v3012 = vunpack.c.h.b16 %v2638
        %v3013 = vunpack.c.l.b16 %v2639
        %v3014 = vunpack.c.h.b16 %v2639
        %v3015 = vunpack.c.l.b16 %v2640
        %v3016 = vunpack.c.h.b16 %v2640
        %v3017 = vunpack.c.l.b16 %v2641
        %v3018 = vunpack.c.h.b16 %v2641
        %v3019 = vunpack.c.l.b16 %v2642
        %v3020 = vunpack.c.h.b16 %v2642
        %v3021 = vunpack.c.l.b16 %v2643
        %v3022 = vunpack.c.h.b16 %v2643
        %v3023 = vunpack.c.l.b16 %v2644
        %v3024 = vunpack.c.h.b16 %v2644
        %v3025 = vunpack.c.l.b16 %v2645
        %v3026 = vunpack.c.h.b16 %v2645
        %v3027 = vunpack.c.l.b16 %v2646
        %v3028 = vunpack.c.h.b16 %v2646
        %v3029 = vunpack.c.l.b16 %v2647
        %v3030 = vunpack.c.h.b16 %v2647
        %v3031 = vunpack.c.l.b16 %v2648
        %v3032 = vunpack.c.h.b16 %v2648
        %v3033 = vpack.c.b16 %v2781, %v2777
        %v3034 = vpack.c.b16 %v2782, %v2778
        %v3035 = vpack.c.b16 %v2783, %v2779
        %v3036 = vpack.c.b16 %v2784, %v2780
        %v3037 = vpack.c.b16 %v2789, %v2785
        %v3038 = vpack.c.b16 %v2790, %v2786
        %v3039 = vpack.c.b16 %v2791, %v2787
        %v3040 = vpack.c.b16 %v2792, %v2788
        %v3041 = vpack.c.b16 %v2797, %v2793
        %v3042 = vpack.c.b16 %v2798, %v2794
        %v3043 = vpack.c.b16 %v2799, %v2795
        %v3044 = vpack.c.b16 %v2800, %v2796
        %v3045 = vpack.c.b16 %v2805, %v2801
        %v3046 = vpack.c.b16 %v2806, %v2802
        %v3047 = vpack.c.b16 %v2807, %v2803
        %v3048 = vpack.c.b16 %v2808, %v2804
        %v3049 = vpack.c.b16 %v2813, %v2809
        %v3050 = vpack.c.b16 %v2814, %v2810
        %v3051 = vpack.c.b16 %v2815, %v2811
        %v3052 = vpack.c.b16 %v2816, %v2812
        %v3053 = vpack.c.b16 %v2821, %v2817
        %v3054 = vpack.c.b16 %v2822, %v2818
        %v3055 = vpack.c.b16 %v2823, %v2819
        %v3056 = vpack.c.b16 %v2824, %v2820
        %v3057 = vpack.c.b16 %v2829, %v2825
        %v3058 = vpack.c.b16 %v2830, %v2826
        %v3059 = vpack.c.b16 %v2831, %v2827
        %v3060 = vpack.c.b16 %v2832, %v2828
        %v3061 = vpack.c.b16 %v2837, %v2833
        %v3062 = vpack.c.b16 %v2838, %v2834
        %v3063 = vpack.c.b16 %v2839, %v2835
        %v3064 = vpack.c.b16 %v2840, %v2836
        %v3065 = vpack.c.b16 %v2845, %v2841
        %v3066 = vpack.c.b16 %v2846, %v2842
        %v3067 = vpack.c.b16 %v2847, %v2843
        %v3068 = vpack.c.b16 %v2848, %v2844
        %v3069 = vpack.c.b16 %v2853, %v2849
        %v3070 = vpack.c.b16 %v2854, %v2850
        %v3071 = vpack.c.b16 %v2855, %v2851
        %v3072 = vpack.c.b16 %v2856, %v2852
        %v3073 = vpack.c.b16 %v2861, %v2857
        %v3074 = vpack.c.b16 %v2862, %v2858
        %v3075 = vpack.c.b16 %v2863, %v2859
        %v3076 = vpack.c.b16 %v2864, %v2860
        %v3077 = vpack.c.b16 %v2869, %v2865
        %v3078 = vpack.c.b16 %v2870, %v2866
        %v3079 = vpack.c.b16 %v2871, %v2867
        %v3080 = vpack.c.b16 %v2872, %v2868
        %v3081 = vpack.c.b16 %v2877, %v2873
        %v3082 = vpack.c.b16 %v2878, %v2874
        %v3083 = vpack.c.b16 %v2879, %v2875
        %v3084 = vpack.c.b16 %v2880, %v2876
        %v3085 = vpack.c.b16 %v2885, %v2881
        %v3086 = vpack.c.b16 %v2886, %v2882
        %v3087 = vpack.c.b16 %v2887, %v2883
        %v3088 = vpack.c.b16 %v2888, %v2884
        %v3089 = vpack.c.b16 %v2893, %v2889
        %v3090 = vpack.c.b16 %v2894, %v2890
        %v3091 = vpack.c.b16 %v2895, %v2891
        %v3092 = vpack.c.b16 %v2896, %v2892
        %v3093 = vpack.c.b16 %v2901, %v2897
        %v3094 = vpack.c.b16 %v2902, %v2898
        %v3095 = vpack.c.b16 %v2903, %v2899
        %v3096 = vpack.c.b16 %v2904, %v2900
        %v3097 = vpack.c.b16 %v2909, %v2905
        %v3098 = vpack.c.b16 %v2910, %v2906
        %v3099 = vpack.c.b16 %v2911, %v2907
        %v3100 = vpack.c.b16 %v2912, %v2908
        %v3101 = vpack.c.b16 %v2917, %v2913
        %v3102 = vpack.c.b16 %v2918, %v2914
        %v3103 = vpack.c.b16 %v2919, %v2915
        %v3104 = vpack.c.b16 %v2920, %v2916
        %v3105 = vpack.c.b16 %v2925, %v2921
        %v3106 = vpack.c.b16 %v2926, %v2922
        %v3107 = vpack.c.b16 %v2927, %v2923
        %v3108 = vpack.c.b16 %v2928, %v2924
        %v3109 = vpack.c.b16 %v2933, %v2929
        %v3110 = vpack.c.b16 %v2934, %v2930
        %v3111 = vpack.c.b16 %v2935, %v2931
        %v3112 = vpack.c.b16 %v2936, %v2932
        %v3113 = vpack.c.b16 %v2941, %v2937
        %v3114 = vpack.c.b16 %v2942, %v2938
        %v3115 = vpack.c.b16 %v2943, %v2939
        %v3116 = vpack.c.b16 %v2944, %v2940
        %v3117 = vpack.c.b16 %v2949, %v2945
        %v3118 = vpack.c.b16 %v2950, %v2946
        %v3119 = vpack.c.b16 %v2951, %v2947
        %v3120 = vpack.c.b16 %v2952, %v2948
        %v3121 = vpack.c.b16 %v2957, %v2953
        %v3122 = vpack.c.b16 %v2958, %v2954
        %v3123 = vpack.c.b16 %v2959, %v2955
        %v3124 = vpack.c.b16 %v2960, %v2956
        %v3125 = vpack.c.b16 %v2965, %v2961
        %v3126 = vpack.c.b16 %v2966, %v2962
        %v3127 = vpack.c.b16 %v2967, %v2963
        %v3128 = vpack.c.b16 %v2968, %v2964
        %v3129 = vpack.c.b16 %v2973, %v2969
        %v3130 = vpack.c.b16 %v2974, %v2970
        %v3131 = vpack.c.b16 %v2975, %v2971
        %v3132 = vpack.c.b16 %v2976, %v2972
        %v3133 = vpack.c.b16 %v2981, %v2977
        %v3134 = vpack.c.b16 %v2982, %v2978
        %v3135 = vpack.c.b16 %v2983, %v2979
        %v3136 = vpack.c.b16 %v2984, %v2980
        %v3137 = vpack.c.b16 %v2989, %v2985
        %v3138 = vpack.c.b16 %v2990, %v2986
        %v3139 = vpack.c.b16 %v2991, %v2987
        %v3140 = vpack.c.b16 %v2992, %v2988
        %v3141 = vpack.c.b16 %v2997, %v2993
        %v3142 = vpack.c.b16 %v2998, %v2994
        %v3143 = vpack.c.b16 %v2999, %v2995
        %v3144 = vpack.c.b16 %v3000, %v2996
        %v3145 = vpack.c.b16 %v3005, %v3001
        %v3146 = vpack.c.b16 %v3006, %v3002
        %v3147 = vpack.c.b16 %v3007, %v3003
        %v3148 = vpack.c.b16 %v3008, %v3004
        %v3149 = vpack.c.b16 %v3013, %v3009
        %v3150 = vpack.c.b16 %v3014, %v3010
        %v3151 = vpack.c.b16 %v3015, %v3011
        %v3152 = vpack.c.b16 %v3016, %v3012
        %v3153 = vpack.c.b16 %v3021, %v3017
        %v3154 = vpack.c.b16 %v3022, %v3018
        %v3155 = vpack.c.b16 %v3023, %v3019
        %v3156 = vpack.c.b16 %v3024, %v3020
        %v3157 = vpack.c.b16 %v3029, %v3025
        %v3158 = vpack.c.b16 %v3030, %v3026
        %v3159 = vpack.c.b16 %v3031, %v3027
        %v3160 = vpack.c.b16 %v3032, %v3028
        %3289 = vmatprep.subr.bf16.mxu0 %v3062
        %3290 = vmatpush1.bf16.msra.mxu0 %v3061
        %3291 = vmatprep.subr.bf16.mxu0 %v3058
        %3292 = vmatpush1.bf16.msra.mxu0 %v3057
        %3293 = vmatprep.subr.bf16.mxu0 %v3054
        %3294 = vmatpush1.bf16.msra.mxu0 %v3053
        %3295 = vmatprep.subr.bf16.mxu0 %v3050
        %3296 = vmatpush1.bf16.msra.mxu0 %v3049
        %3297 = vmatprep.subr.bf16.mxu0 %v3046
        %3298 = vmatpush1.bf16.msra.mxu0 %v3045
        %3299 = vmatprep.subr.bf16.mxu0 %v3042
        %3300 = vmatpush1.bf16.msra.mxu0 %v3041
        %3301 = vmatprep.subr.bf16.mxu0 %v3038
        %3302 = vmatpush1.bf16.msra.mxu0 %v3037
        %3303 = vmatprep.subr.bf16.mxu0 %v3034
        %3304 = vmatpush1.bf16.msra.mxu0 %v3033
        %3305 = vmatprep.subr.bf16.mxu0 %v3094
        %3306 = vmatpush2.bf16.msra.mxu0 %v3093
        %3307 = vmatprep.subr.bf16.mxu0 %v3090
        %3308 = vmatpush2.bf16.msra.mxu0 %v3089
        %3309 = vmatprep.subr.bf16.mxu0 %v3086
        %3310 = vmatpush2.bf16.msra.mxu0 %v3085
        %3311 = vmatprep.subr.bf16.mxu0 %v3082
        %3312 = vmatpush2.bf16.msra.mxu0 %v3081
        %3313 = vmatprep.subr.bf16.mxu0 %v3078
        %3314 = vmatpush2.bf16.msra.mxu0 %v3077
        %3315 = vmatprep.subr.bf16.mxu0 %v3074
        %3316 = vmatpush2.bf16.msra.mxu0 %v3073
        %3317 = vmatprep.subr.bf16.mxu0 %v3070
        %3318 = vmatpush2.bf16.msra.mxu0 %v3069
        %3319 = vmatprep.subr.bf16.mxu0 %v3066
        %3320 = vmatpush2.bf16.msra.mxu0 %v3065
        %3321 = vmatprep.mubr.bf16.mxu0 %v2518
        %3322 = vmatmul.mubr.bf16.gmra.mxu0 %v2517
        %v3323 = vpop.f32.mrf.mxu0
        %v3324 = vadd.f32 0.0, %v3323
        %v3325 = vpop.f32.mrf.mxu0
        %v3326 = vadd.f32 0.0, %v3325
        %v3327 = vpop.f32.mrf.mxu0
        %v3328 = vpop.f32.mrf.mxu0
        %3329 = vdwg.mxu0
        %3330 = vmatprep.subr.bf16.mxu0 %v3126
        %3331 = vmatpush1.bf16.msra.mxu0 %v3125
        %3332 = vmatprep.subr.bf16.mxu0 %v3122
        %3333 = vmatpush1.bf16.msra.mxu0 %v3121
        %3334 = vmatprep.subr.bf16.mxu0 %v3118
        %3335 = vmatpush1.bf16.msra.mxu0 %v3117
        %3336 = vmatprep.subr.bf16.mxu0 %v3114
        %3337 = vmatpush1.bf16.msra.mxu0 %v3113
        %3338 = vmatprep.subr.bf16.mxu0 %v3110
        %3339 = vmatpush1.bf16.msra.mxu0 %v3109
        %3340 = vmatprep.subr.bf16.mxu0 %v3106
        %3341 = vmatpush1.bf16.msra.mxu0 %v3105
        %3342 = vmatprep.subr.bf16.mxu0 %v3102
        %3343 = vmatpush1.bf16.msra.mxu0 %v3101
        %3344 = vmatprep.subr.bf16.mxu0 %v3098
        %3345 = vmatpush1.bf16.msra.mxu0 %v3097
        %3346 = vmatprep.subr.bf16.mxu0 %v3158
        %3347 = vmatpush2.bf16.msra.mxu0 %v3157
        %3348 = vmatprep.subr.bf16.mxu0 %v3154
        %3349 = vmatpush2.bf16.msra.mxu0 %v3153
        %3350 = vmatprep.subr.bf16.mxu0 %v3150
        %3351 = vmatpush2.bf16.msra.mxu0 %v3149
        %3352 = vmatprep.subr.bf16.mxu0 %v3146
        %3353 = vmatpush2.bf16.msra.mxu0 %v3145
        %3354 = vmatprep.subr.bf16.mxu0 %v3142
        %3355 = vmatpush2.bf16.msra.mxu0 %v3141
        %3356 = vmatprep.subr.bf16.mxu0 %v3138
        %3357 = vmatpush2.bf16.msra.mxu0 %v3137
        %3358 = vmatprep.subr.bf16.mxu0 %v3134
        %3359 = vmatpush2.bf16.msra.mxu0 %v3133
        %3360 = vmatprep.subr.bf16.mxu0 %v3130
        %3361 = vmatpush2.bf16.msra.mxu0 %v3129
        %3362 = vmatprep.mubr.bf16.mxu0 %v2520
        %3363 = vmatmul.mubr.bf16.gmra.mxu0 %v2519
        %v3364 = vpop.f32.mrf.mxu0
        %v3365 = vadd.f32 %v3324, %v3364
        %v3366 = vpop.f32.mrf.mxu0
        %v3367 = vadd.f32 %v3326, %v3366
        %v3368 = vpop.f32.mrf.mxu0
        %v3369 = vpop.f32.mrf.mxu0
        %3370 = vdwg.mxu0
        %3371 = vmatprep.subr.bf16.mxu0 %v3064
        %3372 = vmatpush1.bf16.msra.mxu0 %v3063
        %3373 = vmatprep.subr.bf16.mxu0 %v3060
        %3374 = vmatpush1.bf16.msra.mxu0 %v3059
        %3375 = vmatprep.subr.bf16.mxu0 %v3056
        %3376 = vmatpush1.bf16.msra.mxu0 %v3055
        %3377 = vmatprep.subr.bf16.mxu0 %v3052
        %3378 = vmatpush1.bf16.msra.mxu0 %v3051
        %3379 = vmatprep.subr.bf16.mxu0 %v3048
        %3380 = vmatpush1.bf16.msra.mxu0 %v3047
        %3381 = vmatprep.subr.bf16.mxu0 %v3044
        %3382 = vmatpush1.bf16.msra.mxu0 %v3043
        %3383 = vmatprep.subr.bf16.mxu0 %v3040
        %3384 = vmatpush1.bf16.msra.mxu0 %v3039
        %3385 = vmatprep.subr.bf16.mxu0 %v3036
        %3386 = vmatpush1.bf16.msra.mxu0 %v3035
        %3387 = vmatprep.subr.bf16.mxu0 %v3096
        %3388 = vmatpush2.bf16.msra.mxu0 %v3095
        %3389 = vmatprep.subr.bf16.mxu0 %v3092
        %3390 = vmatpush2.bf16.msra.mxu0 %v3091
        %3391 = vmatprep.subr.bf16.mxu0 %v3088
        %3392 = vmatpush2.bf16.msra.mxu0 %v3087
        %3393 = vmatprep.subr.bf16.mxu0 %v3084
        %3394 = vmatpush2.bf16.msra.mxu0 %v3083
        %3395 = vmatprep.subr.bf16.mxu0 %v3080
        %3396 = vmatpush2.bf16.msra.mxu0 %v3079
        %3397 = vmatprep.subr.bf16.mxu0 %v3076
        %3398 = vmatpush2.bf16.msra.mxu0 %v3075
        %3399 = vmatprep.subr.bf16.mxu0 %v3072
        %3400 = vmatpush2.bf16.msra.mxu0 %v3071
        %3401 = vmatprep.subr.bf16.mxu0 %v3068
        %3402 = vmatpush2.bf16.msra.mxu0 %v3067
        %3403 = vmatprep.mubr.bf16.mxu0 %v2518
        %3404 = vmatmul.mubr.bf16.gmra.mxu0 %v2517
        %v3405 = vpop.f32.mrf.mxu0
        %v3406 = vadd.f32 0.0, %v3405
        %v3407 = vpop.f32.mrf.mxu0
        %v3408 = vadd.f32 0.0, %v3407
        %v3409 = vpop.f32.mrf.mxu0
        %v3410 = vpop.f32.mrf.mxu0
        %3411 = vdwg.mxu0
        %3412 = vmatprep.subr.bf16.mxu0 %v3128
        %3413 = vmatpush1.bf16.msra.mxu0 %v3127
        %3414 = vmatprep.subr.bf16.mxu0 %v3124
        %3415 = vmatpush1.bf16.msra.mxu0 %v3123
        %3416 = vmatprep.subr.bf16.mxu0 %v3120
        %3417 = vmatpush1.bf16.msra.mxu0 %v3119
        %3418 = vmatprep.subr.bf16.mxu0 %v3116
        %3419 = vmatpush1.bf16.msra.mxu0 %v3115
        %3420 = vmatprep.subr.bf16.mxu0 %v3112
        %3421 = vmatpush1.bf16.msra.mxu0 %v3111
        %3422 = vmatprep.subr.bf16.mxu0 %v3108
        %3423 = vmatpush1.bf16.msra.mxu0 %v3107
        %3424 = vmatprep.subr.bf16.mxu0 %v3104
        %3425 = vmatpush1.bf16.msra.mxu0 %v3103
        %3426 = vmatprep.subr.bf16.mxu0 %v3100
        %3427 = vmatpush1.bf16.msra.mxu0 %v3099
        %3428 = vmatprep.subr.bf16.mxu0 %v3160
        %3429 = vmatpush2.bf16.msra.mxu0 %v3159
        %3430 = vmatprep.subr.bf16.mxu0 %v3156
        %3431 = vmatpush2.bf16.msra.mxu0 %v3155
        %3432 = vmatprep.subr.bf16.mxu0 %v3152
        %3433 = vmatpush2.bf16.msra.mxu0 %v3151
        %3434 = vmatprep.subr.bf16.mxu0 %v3148
        %3435 = vmatpush2.bf16.msra.mxu0 %v3147
        %3436 = vmatprep.subr.bf16.mxu0 %v3144
        %3437 = vmatpush2.bf16.msra.mxu0 %v3143
        %3438 = vmatprep.subr.bf16.mxu0 %v3140
        %3439 = vmatpush2.bf16.msra.mxu0 %v3139
        %3440 = vmatprep.subr.bf16.mxu0 %v3136
        %3441 = vmatpush2.bf16.msra.mxu0 %v3135
        %3442 = vmatprep.subr.bf16.mxu0 %v3132
        %3443 = vmatpush2.bf16.msra.mxu0 %v3131
        %3444 = vmatprep.mubr.bf16.mxu0 %v2520
        %3445 = vmatmul.mubr.bf16.gmra.mxu0 %v2519
        %v3446 = vpop.f32.mrf.mxu0
        %v3447 = vadd.f32 %v3406, %v3446
        %v3448 = vpop.f32.mrf.mxu0
        %v3449 = vadd.f32 %v3408, %v3448
        %v3450 = vpop.f32.mrf.mxu0
        %v3451 = vpop.f32.mrf.mxu0
        %3452 = vdwg.mxu0
        %v3453 = vpack.c.bf16 %v3365, %v3365
        %vm3454 = vcmask 519168
        %3455 = vst.msk [vmem:[#allocation4] sm:$0xf] %vm3454, %v3453
        %v3457 = vunpack.c.l.b16 %v3453
        %v3458 = vpack.c.b16 %v3457, %v3457
        %3459 = vrot.lane.b32.xlu0 %v3458, 64
        %v3460 = vpop.permute.xlu0 %3459
        %s3462 = scalar_lea.vmem [#allocation4], 4
        %3463 = vst.msk [vmem:[%s3462] sm:$0xf] %vm3454, %v3460
        %v3464 = vpack.c.bf16 %v3367, %v3367
        %s3465 = scalar_lea.vmem [#allocation4], 8
        %3466 = vst.msk [vmem:[%s3465] sm:$0xf] %vm3454, %v3464
        %v3468 = vunpack.c.l.b16 %v3464
        %v3469 = vpack.c.b16 %v3468, %v3468
        %3470 = vrot.lane.b32.xlu0 %v3469, 64
        %v3471 = vpop.permute.xlu0 %3470
        %s3473 = scalar_lea.vmem [#allocation4], 12
        %3474 = vst.msk [vmem:[%s3473] sm:$0xf] %vm3454, %v3471
        %v3475 = vpack.c.bf16 %v3447, %v3447
        %s3476 = scalar_lea.vmem [#allocation4], 16
        %3477 = vst.msk [vmem:[%s3476] sm:$0xf] %vm3454, %v3475
        %v3479 = vunpack.c.l.b16 %v3475
        %v3480 = vpack.c.b16 %v3479, %v3479
        %3481 = vrot.lane.b32.xlu0 %v3480, 64
        %v3482 = vpop.permute.xlu0 %3481
        %s3484 = scalar_lea.vmem [#allocation4], 20
        %3485 = vst.msk [vmem:[%s3484] sm:$0xf] %vm3454, %v3482
        %v3486 = vpack.c.bf16 %v3449, %v3449
        %s3487 = scalar_lea.vmem [#allocation4], 24
        %3488 = vst.msk [vmem:[%s3487] sm:$0xf] %vm3454, %v3486
        %v3490 = vunpack.c.l.b16 %v3486
        %v3491 = vpack.c.b16 %v3490, %v3490
        %3492 = vrot.lane.b32.xlu0 %v3491, 64
        %v3493 = vpop.permute.xlu0 %3492
        %s3495 = scalar_lea.vmem [#allocation4], 28
        %3496 = vst.msk [vmem:[%s3495] sm:$0xf] %vm3454, %v3493
        %v3497 = vld [vmem:[#allocation4] sm:$0xf]
        %v3498 = vld [vmem:[#allocation4 + $0x4] sm:$0xf]
        %v3499 = vld [vmem:[#allocation4 + $0x8] sm:$0xf]
        %v3500 = vld [vmem:[#allocation4 + $0xc] sm:$0xf]
        %v3501 = vld [vmem:[#allocation4 + $0x10] sm:$0xf]
        %v3502 = vld [vmem:[#allocation4 + $0x14] sm:$0xf]
        %v3503 = vld [vmem:[#allocation4 + $0x18] sm:$0xf]
        %v3504 = vld [vmem:[#allocation4 + $0x1c] sm:$0xf]
        %v3505 = vld [vmem:[#allocation2] sm:$0xf]
        %v3506 = vld [vmem:[#allocation2 + $0x4] sm:$0xf]
        %v3507 = vld [vmem:[#allocation2 + $0x8] sm:$0xf]
        %v3508 = vld [vmem:[#allocation2 + $0xc] sm:$0xf]
        %v3509 = vld [vmem:[#allocation2 + $0x10] sm:$0xf]
        %v3510 = vld [vmem:[#allocation2 + $0x14] sm:$0xf]
        %v3511 = vld [vmem:[#allocation2 + $0x18] sm:$0xf]
        %v3512 = vld [vmem:[#allocation2 + $0x1c] sm:$0xf]
        %vm3513 = vcmask 523264
        %v3515 = vsel %vm3513, %v3497, 0
        %v3518 = vsel %vm3513, %v3505, 0
        %3520 = vmatprep.subr.bf16.mxu0 0
        %3521 = vmatpush1.bf16.xpose.msra.mxu0 0
        %3522 = vmatprep.subr.bf16.mxu0 0
        %3523 = vmatpush1.bf16.xpose.msra.mxu0 0
        %3524 = vmatprep.subr.bf16.mxu0 0
        %3525 = vmatpush1.bf16.xpose.msra.mxu0 0
        %3526 = vmatprep.subr.bf16.mxu0 0
        %3527 = vmatpush1.bf16.xpose.msra.mxu0 0
        %3528 = vmatprep.subr.bf16.mxu0 0
        %3529 = vmatpush1.bf16.xpose.msra.mxu0 0
        %3530 = vmatprep.subr.bf16.mxu0 0
        %3531 = vmatpush1.bf16.xpose.msra.mxu0 0
        %3532 = vmatprep.subr.bf16.mxu0 0
        %3533 = vmatpush1.bf16.xpose.msra.mxu0 0
        %3534 = vmatprep.subr.bf16.mxu0 0
        %3535 = vmatpush1.bf16.xpose.msra.mxu0 %v3518
        %3536 = vmatprep.subr.bf16.mxu0 0
        %3537 = vmatpush2.bf16.xpose.msra.mxu0 0
        %3538 = vmatprep.subr.bf16.mxu0 0
        %3539 = vmatpush2.bf16.xpose.msra.mxu0 0
        %3540 = vmatprep.subr.bf16.mxu0 0
        %3541 = vmatpush2.bf16.xpose.msra.mxu0 0
        %3542 = vmatprep.subr.bf16.mxu0 0
        %3543 = vmatpush2.bf16.xpose.msra.mxu0 0
        %3544 = vmatprep.subr.bf16.mxu0 0
        %3545 = vmatpush2.bf16.xpose.msra.mxu0 0
        %3546 = vmatprep.subr.bf16.mxu0 0
        %3547 = vmatpush2.bf16.xpose.msra.mxu0 0
        %3548 = vmatprep.subr.bf16.mxu0 0
        %3549 = vmatpush2.bf16.xpose.msra.mxu0 0
        %3550 = vmatprep.subr.bf16.mxu0 0
        %3551 = vmatpush2.bf16.xpose.msra.mxu0 0
        %3552 = vmatprep.mubr.bf16.mxu0 0
        %3553 = vmatmul.mubr.bf16.gmra.mxu0 %v3515
        %v3554 = vpop.f32.mrf.mxu0
        %v3555 = vadd.f32 0.0, %v3554
        %v3556 = vpop.f32.mrf.mxu0
        %v3557 = vpop.f32.mrf.mxu0
        %v3558 = vpop.f32.mrf.mxu0
        %3559 = vdwg.mxu0
        %v3561 = vsel %vm3513, %v3498, 0
        %v3564 = vsel %vm3513, %v3506, 0
        %3566 = vmatprep.subr.bf16.mxu0 0
        %3567 = vmatpush1.bf16.xpose.msra.mxu0 0
        %3568 = vmatprep.subr.bf16.mxu0 0
        %3569 = vmatpush1.bf16.xpose.msra.mxu0 0
        %3570 = vmatprep.subr.bf16.mxu0 0
        %3571 = vmatpush1.bf16.xpose.msra.mxu0 0
        %3572 = vmatprep.subr.bf16.mxu0 0
        %3573 = vmatpush1.bf16.xpose.msra.mxu0 0
        %3574 = vmatprep.subr.bf16.mxu0 0
        %3575 = vmatpush1.bf16.xpose.msra.mxu0 0
        %3576 = vmatprep.subr.bf16.mxu0 0
        %3577 = vmatpush1.bf16.xpose.msra.mxu0 0
        %3578 = vmatprep.subr.bf16.mxu0 0
        %3579 = vmatpush1.bf16.xpose.msra.mxu0 0
        %3580 = vmatprep.subr.bf16.mxu0 0
        %3581 = vmatpush1.bf16.xpose.msra.mxu0 %v3564
        %3582 = vmatprep.subr.bf16.mxu0 0
        %3583 = vmatpush2.bf16.xpose.msra.mxu0 0
        %3584 = vmatprep.subr.bf16.mxu0 0
        %3585 = vmatpush2.bf16.xpose.msra.mxu0 0
        %3586 = vmatprep.subr.bf16.mxu0 0
        %3587 = vmatpush2.bf16.xpose.msra.mxu0 0
        %3588 = vmatprep.subr.bf16.mxu0 0
        %3589 = vmatpush2.bf16.xpose.msra.mxu0 0
        %3590 = vmatprep.subr.bf16.mxu0 0
        %3591 = vmatpush2.bf16.xpose.msra.mxu0 0
        %3592 = vmatprep.subr.bf16.mxu0 0
        %3593 = vmatpush2.bf16.xpose.msra.mxu0 0
        %3594 = vmatprep.subr.bf16.mxu0 0
        %3595 = vmatpush2.bf16.xpose.msra.mxu0 0
        %3596 = vmatprep.subr.bf16.mxu0 0
        %3597 = vmatpush2.bf16.xpose.msra.mxu0 0
        %3598 = vmatprep.mubr.bf16.mxu0 0
        %3599 = vmatmul.mubr.bf16.gmra.mxu0 %v3561
        %v3600 = vpop.f32.mrf.mxu0
        %v3601 = vadd.f32 0.0, %v3600
        %v3602 = vpop.f32.mrf.mxu0
        %v3603 = vpop.f32.mrf.mxu0
        %v3604 = vpop.f32.mrf.mxu0
        %3605 = vdwg.mxu0
        %v3607 = vsel %vm3513, %v3499, 0
        %v3610 = vsel %vm3513, %v3507, 0
        %3612 = vmatprep.subr.bf16.mxu0 0
        %3613 = vmatpush1.bf16.xpose.msra.mxu0 0
        %3614 = vmatprep.subr.bf16.mxu0 0
        %3615 = vmatpush1.bf16.xpose.msra.mxu0 0
        %3616 = vmatprep.subr.bf16.mxu0 0
        %3617 = vmatpush1.bf16.xpose.msra.mxu0 0
        %3618 = vmatprep.subr.bf16.mxu0 0
        %3619 = vmatpush1.bf16.xpose.msra.mxu0 0
        %3620 = vmatprep.subr.bf16.mxu0 0
        %3621 = vmatpush1.bf16.xpose.msra.mxu0 0
        %3622 = vmatprep.subr.bf16.mxu0 0
        %3623 = vmatpush1.bf16.xpose.msra.mxu0 0
        %3624 = vmatprep.subr.bf16.mxu0 0
        %3625 = vmatpush1.bf16.xpose.msra.mxu0 0
        %3626 = vmatprep.subr.bf16.mxu0 0
        %3627 = vmatpush1.bf16.xpose.msra.mxu0 %v3610
        %3628 = vmatprep.subr.bf16.mxu0 0
        %3629 = vmatpush2.bf16.xpose.msra.mxu0 0
        %3630 = vmatprep.subr.bf16.mxu0 0
        %3631 = vmatpush2.bf16.xpose.msra.mxu0 0
        %3632 = vmatprep.subr.bf16.mxu0 0
        %3633 = vmatpush2.bf16.xpose.msra.mxu0 0
        %3634 = vmatprep.subr.bf16.mxu0 0
        %3635 = vmatpush2.bf16.xpose.msra.mxu0 0
        %3636 = vmatprep.subr.bf16.mxu0 0
        %3637 = vmatpush2.bf16.xpose.msra.mxu0 0
        %3638 = vmatprep.subr.bf16.mxu0 0
        %3639 = vmatpush2.bf16.xpose.msra.mxu0 0
        %3640 = vmatprep.subr.bf16.mxu0 0
        %3641 = vmatpush2.bf16.xpose.msra.mxu0 0
        %3642 = vmatprep.subr.bf16.mxu0 0
        %3643 = vmatpush2.bf16.xpose.msra.mxu0 0
        %3644 = vmatprep.mubr.bf16.mxu0 0
        %3645 = vmatmul.mubr.bf16.gmra.mxu0 %v3607
        %v3646 = vpop.f32.mrf.mxu0
        %v3647 = vadd.f32 0.0, %v3646
        %v3648 = vpop.f32.mrf.mxu0
        %v3649 = vpop.f32.mrf.mxu0
        %v3650 = vpop.f32.mrf.mxu0
        %3651 = vdwg.mxu0
        %v3653 = vsel %vm3513, %v3500, 0
        %v3656 = vsel %vm3513, %v3508, 0
        %3658 = vmatprep.subr.bf16.mxu0 0
        %3659 = vmatpush1.bf16.xpose.msra.mxu0 0
        %3660 = vmatprep.subr.bf16.mxu0 0
        %3661 = vmatpush1.bf16.xpose.msra.mxu0 0
        %3662 = vmatprep.subr.bf16.mxu0 0
        %3663 = vmatpush1.bf16.xpose.msra.mxu0 0
        %3664 = vmatprep.subr.bf16.mxu0 0
        %3665 = vmatpush1.bf16.xpose.msra.mxu0 0
        %3666 = vmatprep.subr.bf16.mxu0 0
        %3667 = vmatpush1.bf16.xpose.msra.mxu0 0
        %3668 = vmatprep.subr.bf16.mxu0 0
        %3669 = vmatpush1.bf16.xpose.msra.mxu0 0
        %3670 = vmatprep.subr.bf16.mxu0 0
        %3671 = vmatpush1.bf16.xpose.msra.mxu0 0
        %3672 = vmatprep.subr.bf16.mxu0 0
        %3673 = vmatpush1.bf16.xpose.msra.mxu0 %v3656
        %3674 = vmatprep.subr.bf16.mxu0 0
        %3675 = vmatpush2.bf16.xpose.msra.mxu0 0
        %3676 = vmatprep.subr.bf16.mxu0 0
        %3677 = vmatpush2.bf16.xpose.msra.mxu0 0
        %3678 = vmatprep.subr.bf16.mxu0 0
        %3679 = vmatpush2.bf16.xpose.msra.mxu0 0
        %3680 = vmatprep.subr.bf16.mxu0 0
        %3681 = vmatpush2.bf16.xpose.msra.mxu0 0
        %3682 = vmatprep.subr.bf16.mxu0 0
        %3683 = vmatpush2.bf16.xpose.msra.mxu0 0
        %3684 = vmatprep.subr.bf16.mxu0 0
        %3685 = vmatpush2.bf16.xpose.msra.mxu0 0
        %3686 = vmatprep.subr.bf16.mxu0 0
        %3687 = vmatpush2.bf16.xpose.msra.mxu0 0
        %3688 = vmatprep.subr.bf16.mxu0 0
        %3689 = vmatpush2.bf16.xpose.msra.mxu0 0
        %3690 = vmatprep.mubr.bf16.mxu0 0
        %3691 = vmatmul.mubr.bf16.gmra.mxu0 %v3653
        %v3692 = vpop.f32.mrf.mxu0
        %v3693 = vadd.f32 0.0, %v3692
        %v3694 = vpop.f32.mrf.mxu0
        %v3695 = vpop.f32.mrf.mxu0
        %v3696 = vpop.f32.mrf.mxu0
        %3697 = vdwg.mxu0
        %v3699 = vsel %vm3513, %v3501, 0
        %v3702 = vsel %vm3513, %v3509, 0
        %3704 = vmatprep.subr.bf16.mxu0 0
        %3705 = vmatpush1.bf16.xpose.msra.mxu0 0
        %3706 = vmatprep.subr.bf16.mxu0 0
        %3707 = vmatpush1.bf16.xpose.msra.mxu0 0
        %3708 = vmatprep.subr.bf16.mxu0 0
        %3709 = vmatpush1.bf16.xpose.msra.mxu0 0
        %3710 = vmatprep.subr.bf16.mxu0 0
        %3711 = vmatpush1.bf16.xpose.msra.mxu0 0
        %3712 = vmatprep.subr.bf16.mxu0 0
        %3713 = vmatpush1.bf16.xpose.msra.mxu0 0
        %3714 = vmatprep.subr.bf16.mxu0 0
        %3715 = vmatpush1.bf16.xpose.msra.mxu0 0
        %3716 = vmatprep.subr.bf16.mxu0 0
        %3717 = vmatpush1.bf16.xpose.msra.mxu0 0
        %3718 = vmatprep.subr.bf16.mxu0 0
        %3719 = vmatpush1.bf16.xpose.msra.mxu0 %v3702
        %3720 = vmatprep.subr.bf16.mxu0 0
        %3721 = vmatpush2.bf16.xpose.msra.mxu0 0
        %3722 = vmatprep.subr.bf16.mxu0 0
        %3723 = vmatpush2.bf16.xpose.msra.mxu0 0
        %3724 = vmatprep.subr.bf16.mxu0 0
        %3725 = vmatpush2.bf16.xpose.msra.mxu0 0
        %3726 = vmatprep.subr.bf16.mxu0 0
        %3727 = vmatpush2.bf16.xpose.msra.mxu0 0
        %3728 = vmatprep.subr.bf16.mxu0 0
        %3729 = vmatpush2.bf16.xpose.msra.mxu0 0
        %3730 = vmatprep.subr.bf16.mxu0 0
        %3731 = vmatpush2.bf16.xpose.msra.mxu0 0
        %3732 = vmatprep.subr.bf16.mxu0 0
        %3733 = vmatpush2.bf16.xpose.msra.mxu0 0
        %3734 = vmatprep.subr.bf16.mxu0 0
        %3735 = vmatpush2.bf16.xpose.msra.mxu0 0
        %3736 = vmatprep.mubr.bf16.mxu0 0
        %3737 = vmatmul.mubr.bf16.gmra.mxu0 %v3699
        %v3738 = vpop.f32.mrf.mxu0
        %v3739 = vadd.f32 0.0, %v3738
        %v3740 = vpop.f32.mrf.mxu0
        %v3741 = vpop.f32.mrf.mxu0
        %v3742 = vpop.f32.mrf.mxu0
        %3743 = vdwg.mxu0
        %v3745 = vsel %vm3513, %v3502, 0
        %v3748 = vsel %vm3513, %v3510, 0
        %3750 = vmatprep.subr.bf16.mxu0 0
        %3751 = vmatpush1.bf16.xpose.msra.mxu0 0
        %3752 = vmatprep.subr.bf16.mxu0 0
        %3753 = vmatpush1.bf16.xpose.msra.mxu0 0
        %3754 = vmatprep.subr.bf16.mxu0 0
        %3755 = vmatpush1.bf16.xpose.msra.mxu0 0
        %3756 = vmatprep.subr.bf16.mxu0 0
        %3757 = vmatpush1.bf16.xpose.msra.mxu0 0
        %3758 = vmatprep.subr.bf16.mxu0 0
        %3759 = vmatpush1.bf16.xpose.msra.mxu0 0
        %3760 = vmatprep.subr.bf16.mxu0 0
        %3761 = vmatpush1.bf16.xpose.msra.mxu0 0
        %3762 = vmatprep.subr.bf16.mxu0 0
        %3763 = vmatpush1.bf16.xpose.msra.mxu0 0
        %3764 = vmatprep.subr.bf16.mxu0 0
        %3765 = vmatpush1.bf16.xpose.msra.mxu0 %v3748
        %3766 = vmatprep.subr.bf16.mxu0 0
        %3767 = vmatpush2.bf16.xpose.msra.mxu0 0
        %3768 = vmatprep.subr.bf16.mxu0 0
        %3769 = vmatpush2.bf16.xpose.msra.mxu0 0
        %3770 = vmatprep.subr.bf16.mxu0 0
        %3771 = vmatpush2.bf16.xpose.msra.mxu0 0
        %3772 = vmatprep.subr.bf16.mxu0 0
        %3773 = vmatpush2.bf16.xpose.msra.mxu0 0
        %3774 = vmatprep.subr.bf16.mxu0 0
        %3775 = vmatpush2.bf16.xpose.msra.mxu0 0
        %3776 = vmatprep.subr.bf16.mxu0 0
        %3777 = vmatpush2.bf16.xpose.msra.mxu0 0
        %3778 = vmatprep.subr.bf16.mxu0 0
        %3779 = vmatpush2.bf16.xpose.msra.mxu0 0
        %3780 = vmatprep.subr.bf16.mxu0 0
        %3781 = vmatpush2.bf16.xpose.msra.mxu0 0
        %3782 = vmatprep.mubr.bf16.mxu0 0
        %3783 = vmatmul.mubr.bf16.gmra.mxu0 %v3745
        %v3784 = vpop.f32.mrf.mxu0
        %v3785 = vadd.f32 0.0, %v3784
        %v3786 = vpop.f32.mrf.mxu0
        %v3787 = vpop.f32.mrf.mxu0
        %v3788 = vpop.f32.mrf.mxu0
        %3789 = vdwg.mxu0
        %v3791 = vsel %vm3513, %v3503, 0
        %v3794 = vsel %vm3513, %v3511, 0
        %3796 = vmatprep.subr.bf16.mxu0 0
        %3797 = vmatpush1.bf16.xpose.msra.mxu0 0
        %3798 = vmatprep.subr.bf16.mxu0 0
        %3799 = vmatpush1.bf16.xpose.msra.mxu0 0
        %3800 = vmatprep.subr.bf16.mxu0 0
        %3801 = vmatpush1.bf16.xpose.msra.mxu0 0
        %3802 = vmatprep.subr.bf16.mxu0 0
        %3803 = vmatpush1.bf16.xpose.msra.mxu0 0
        %3804 = vmatprep.subr.bf16.mxu0 0
        %3805 = vmatpush1.bf16.xpose.msra.mxu0 0
        %3806 = vmatprep.subr.bf16.mxu0 0
        %3807 = vmatpush1.bf16.xpose.msra.mxu0 0
        %3808 = vmatprep.subr.bf16.mxu0 0
        %3809 = vmatpush1.bf16.xpose.msra.mxu0 0
        %3810 = vmatprep.subr.bf16.mxu0 0
        %3811 = vmatpush1.bf16.xpose.msra.mxu0 %v3794
        %3812 = vmatprep.subr.bf16.mxu0 0
        %3813 = vmatpush2.bf16.xpose.msra.mxu0 0
        %3814 = vmatprep.subr.bf16.mxu0 0
        %3815 = vmatpush2.bf16.xpose.msra.mxu0 0
        %3816 = vmatprep.subr.bf16.mxu0 0
        %3817 = vmatpush2.bf16.xpose.msra.mxu0 0
        %3818 = vmatprep.subr.bf16.mxu0 0
        %3819 = vmatpush2.bf16.xpose.msra.mxu0 0
        %3820 = vmatprep.subr.bf16.mxu0 0
        %3821 = vmatpush2.bf16.xpose.msra.mxu0 0
        %3822 = vmatprep.subr.bf16.mxu0 0
        %3823 = vmatpush2.bf16.xpose.msra.mxu0 0
        %3824 = vmatprep.subr.bf16.mxu0 0
        %3825 = vmatpush2.bf16.xpose.msra.mxu0 0
        %3826 = vmatprep.subr.bf16.mxu0 0
        %3827 = vmatpush2.bf16.xpose.msra.mxu0 0
        %3828 = vmatprep.mubr.bf16.mxu0 0
        %3829 = vmatmul.mubr.bf16.gmra.mxu0 %v3791
        %v3830 = vpop.f32.mrf.mxu0
        %v3831 = vadd.f32 0.0, %v3830
        %v3832 = vpop.f32.mrf.mxu0
        %v3833 = vpop.f32.mrf.mxu0
        %v3834 = vpop.f32.mrf.mxu0
        %3835 = vdwg.mxu0
        %v3837 = vsel %vm3513, %v3504, 0
        %v3840 = vsel %vm3513, %v3512, 0
        %3842 = vmatprep.subr.bf16.mxu0 0
        %3843 = vmatpush1.bf16.xpose.msra.mxu0 0
        %3844 = vmatprep.subr.bf16.mxu0 0
        %3845 = vmatpush1.bf16.xpose.msra.mxu0 0
        %3846 = vmatprep.subr.bf16.mxu0 0
        %3847 = vmatpush1.bf16.xpose.msra.mxu0 0
        %3848 = vmatprep.subr.bf16.mxu0 0
        %3849 = vmatpush1.bf16.xpose.msra.mxu0 0
        %3850 = vmatprep.subr.bf16.mxu0 0
        %3851 = vmatpush1.bf16.xpose.msra.mxu0 0
        %3852 = vmatprep.subr.bf16.mxu0 0
        %3853 = vmatpush1.bf16.xpose.msra.mxu0 0
        %3854 = vmatprep.subr.bf16.mxu0 0
        %3855 = vmatpush1.bf16.xpose.msra.mxu0 0
        %3856 = vmatprep.subr.bf16.mxu0 0
        %3857 = vmatpush1.bf16.xpose.msra.mxu0 %v3840
        %3858 = vmatprep.subr.bf16.mxu0 0
        %3859 = vmatpush2.bf16.xpose.msra.mxu0 0
        %3860 = vmatprep.subr.bf16.mxu0 0
        %3861 = vmatpush2.bf16.xpose.msra.mxu0 0
        %3862 = vmatprep.subr.bf16.mxu0 0
        %3863 = vmatpush2.bf16.xpose.msra.mxu0 0
        %3864 = vmatprep.subr.bf16.mxu0 0
        %3865 = vmatpush2.bf16.xpose.msra.mxu0 0
        %3866 = vmatprep.subr.bf16.mxu0 0
        %3867 = vmatpush2.bf16.xpose.msra.mxu0 0
        %3868 = vmatprep.subr.bf16.mxu0 0
        %3869 = vmatpush2.bf16.xpose.msra.mxu0 0
        %3870 = vmatprep.subr.bf16.mxu0 0
        %3871 = vmatpush2.bf16.xpose.msra.mxu0 0
        %3872 = vmatprep.subr.bf16.mxu0 0
        %3873 = vmatpush2.bf16.xpose.msra.mxu0 0
        %3874 = vmatprep.mubr.bf16.mxu0 0
        %3875 = vmatmul.mubr.bf16.gmra.mxu0 %v3837
        %v3876 = vpop.f32.mrf.mxu0
        %v3877 = vadd.f32 0.0, %v3876
        %v3878 = vpop.f32.mrf.mxu0
        %v3879 = vpop.f32.mrf.mxu0
        %v3880 = vpop.f32.mrf.mxu0
        %3881 = vdwg.mxu0
        %v3882 = vld [vmem:[%s538] sm:$0x3]
        %vm3883 = vnez %v3882
        %v3884 = vsel %vm3883, 16843009, 0
        %v3885 = vunpack.c.0.s8 %v3884
        %vm3886 = vcmp.ne.s32.totalorder %v3885, 0
        %v3887 = vsel %vm3886, 1, 0
        %vm3888 = vcmp.eq.s32.totalorder %v3887, 1
        %v3889 = vsel %vm3888, -1e+09, %v3555
        %v3890 = vsel %vm3888, -1e+09, %v3601
        %v3891 = vsel %vm3888, -1e+09, %v3647
        %v3892 = vsel %vm3888, -1e+09, %v3693
        %v3893 = vsel %vm3888, -1e+09, %v3739
        %v3894 = vsel %vm3888, -1e+09, %v3785
        %v3895 = vsel %vm3888, -1e+09, %v3831
        %v3896 = vsel %vm3888, -1e+09, %v3877
        %vm3897 = vcmask 64512
        %v3898 = vsel %vm3897, %v3889, -inf
        %3899 = vmax.xlane.f32.xlu0 %v3898
        %v3900 = vpop.xlane.xlu0 %3899
        %v3901 = vsel %vm3897, %v3890, -inf
        %3902 = vmax.xlane.f32.xlu0 %v3901
        %v3903 = vpop.xlane.xlu0 %3902
        %v3904 = vsel %vm3897, %v3891, -inf
        %3905 = vmax.xlane.f32.xlu0 %v3904
        %v3906 = vpop.xlane.xlu0 %3905
        %v3907 = vsel %vm3897, %v3892, -inf
        %3908 = vmax.xlane.f32.xlu0 %v3907
        %v3909 = vpop.xlane.xlu0 %3908
        %v3910 = vsel %vm3897, %v3893, -inf
        %3911 = vmax.xlane.f32.xlu0 %v3910
        %v3912 = vpop.xlane.xlu0 %3911
        %v3913 = vsel %vm3897, %v3894, -inf
        %3914 = vmax.xlane.f32.xlu0 %v3913
        %v3915 = vpop.xlane.xlu0 %3914
        %v3916 = vsel %vm3897, %v3895, -inf
        %3917 = vmax.xlane.f32.xlu0 %v3916
        %v3918 = vpop.xlane.xlu0 %3917
        %v3919 = vsel %vm3897, %v3896, -inf
        %3920 = vmax.xlane.f32.xlu0 %v3919
        %v3921 = vpop.xlane.xlu0 %3920
        %v3922 = vsub.f32 %v3889, %v3900
        %v3923 = vsub.f32 %v3890, %v3903
        %v3924 = vsub.f32 %v3891, %v3906
        %v3925 = vsub.f32 %v3892, %v3909
        %v3926 = vsub.f32 %v3893, %v3912
        %v3927 = vsub.f32 %v3894, %v3915
        %v3928 = vsub.f32 %v3895, %v3918
        %v3929 = vsub.f32 %v3896, %v3921
        %v3930 = vmul.f32 %v3922, 1.442695
        %v3931 = vpow.pop %v3930
        %v3932 = vmul.f32 %v3923, 1.442695
        %v3933 = vpow.pop %v3932
        %v3934 = vmul.f32 %v3924, 1.442695
        %v3935 = vpow.pop %v3934
        %v3936 = vmul.f32 %v3925, 1.442695
        %v3937 = vpow.pop %v3936
        %v3938 = vmul.f32 %v3926, 1.442695
        %v3939 = vpow.pop %v3938
        %v3940 = vmul.f32 %v3927, 1.442695
        %v3941 = vpow.pop %v3940
        %v3942 = vmul.f32 %v3928, 1.442695
        %v3943 = vpow.pop %v3942
        %v3944 = vmul.f32 %v3929, 1.442695
        %v3945 = vpow.pop %v3944
        %v3946 = vsel %vm3897, %v3931, 0.0
        %3947 = vadd.xlane.f32.xlu0 %v3946
        %v3948 = vpop.xlane.xlu0 %3947
        %v3949 = vsel %vm3897, %v3933, 0.0
        %3950 = vadd.xlane.f32.xlu0 %v3949
        %v3951 = vpop.xlane.xlu0 %3950
        %v3952 = vsel %vm3897, %v3935, 0.0
        %3953 = vadd.xlane.f32.xlu0 %v3952
        %v3954 = vpop.xlane.xlu0 %3953
        %v3955 = vsel %vm3897, %v3937, 0.0
        %3956 = vadd.xlane.f32.xlu0 %v3955
        %v3957 = vpop.xlane.xlu0 %3956
        %v3958 = vsel %vm3897, %v3939, 0.0
        %3959 = vadd.xlane.f32.xlu0 %v3958
        %v3960 = vpop.xlane.xlu0 %3959
        %v3961 = vsel %vm3897, %v3941, 0.0
        %3962 = vadd.xlane.f32.xlu0 %v3961
        %v3963 = vpop.xlane.xlu0 %3962
        %v3964 = vsel %vm3897, %v3943, 0.0
        %3965 = vadd.xlane.f32.xlu0 %v3964
        %v3966 = vpop.xlane.xlu0 %3965
        %v3967 = vsel %vm3897, %v3945, 0.0
        %3968 = vadd.xlane.f32.xlu0 %v3967
        %v3969 = vpop.xlane.xlu0 %3968
        %v3970 = vrcp.pop %v3948
        %v3971 = vrcp.pop %v3951
        %v3972 = vrcp.pop %v3954
        %v3973 = vrcp.pop %v3957
        %v3974 = vrcp.pop %v3960
        %v3975 = vrcp.pop %v3963
        %v3976 = vrcp.pop %v3966
        %v3977 = vrcp.pop %v3969
        %v3978 = vmul.f32 %v3931, %v3970
        %v3979 = vmul.f32 %v3933, %v3971
        %v3980 = vmul.f32 %v3935, %v3972
        %v3981 = vmul.f32 %v3937, %v3973
        %v3982 = vmul.f32 %v3939, %v3974
        %v3983 = vmul.f32 %v3941, %v3975
        %v3984 = vmul.f32 %v3943, %v3976
        %v3985 = vmul.f32 %v3945, %v3977
        %3986 = vst.msk [vmem:[%s531] sm:$0xff] %vm3897, %v3978
        %3987 = vst.msk [vmem:[%s531 + $0x8] sm:$0xff] %vm3897, %v3979
        %3988 = vst.msk [vmem:[%s531 + $0x10] sm:$0xff] %vm3897, %v3980
        %3989 = vst.msk [vmem:[%s531 + $0x18] sm:$0xff] %vm3897, %v3981
        %3990 = vst.msk [vmem:[%s531 + $0x20] sm:$0xff] %vm3897, %v3982
        %3991 = vst.msk [vmem:[%s531 + $0x28] sm:$0xff] %vm3897, %v3983
        %3992 = vst.msk [vmem:[%s531 + $0x30] sm:$0xff] %vm3897, %v3984
        %3993 = vst.msk [vmem:[%s531 + $0x38] sm:$0xff] %vm3897, %v3985
        %v3994 = vpack.c.bf16 %v3978, %v3978
        %v3995 = vpack.c.bf16 %v3979, %v3979
        %v3996 = vpack.c.bf16 %v3980, %v3980
        %v3997 = vpack.c.bf16 %v3981, %v3981
        %v3998 = vpack.c.bf16 %v3982, %v3982
        %v3999 = vpack.c.bf16 %v3983, %v3983
        %v4000 = vpack.c.bf16 %v3984, %v3984
        %v4001 = vpack.c.bf16 %v3985, %v3985
        %v4002 = vld [vmem:[#allocation3] sm:$0xf]
        %v4003 = vld [vmem:[#allocation3 + $0x4] sm:$0xf]
        %v4004 = vld [vmem:[#allocation3 + $0x8] sm:$0xf]
        %v4005 = vld [vmem:[#allocation3 + $0xc] sm:$0xf]
        %v4006 = vld [vmem:[#allocation3 + $0x10] sm:$0xf]
        %v4007 = vld [vmem:[#allocation3 + $0x14] sm:$0xf]
        %v4008 = vld [vmem:[#allocation3 + $0x18] sm:$0xf]
        %v4009 = vld [vmem:[#allocation3 + $0x1c] sm:$0xf]
        %v4011 = vsel %vm3897, %v3994, 0
        %vm4013 = vcmask 1043456
        %v4015 = vsel %vm4013, %v4002, 0
        %4017 = vmatprep.subr.bf16.mxu0 0
        %4018 = vmatpush1.bf16.msra.mxu0 0
        %4019 = vmatprep.subr.bf16.mxu0 0
        %4020 = vmatpush1.bf16.msra.mxu0 0
        %4021 = vmatprep.subr.bf16.mxu0 0
        %4022 = vmatpush1.bf16.msra.mxu0 0
        %4023 = vmatprep.subr.bf16.mxu0 0
        %4024 = vmatpush1.bf16.msra.mxu0 0
        %4025 = vmatprep.subr.bf16.mxu0 0
        %4026 = vmatpush1.bf16.msra.mxu0 0
        %4027 = vmatprep.subr.bf16.mxu0 0
        %4028 = vmatpush1.bf16.msra.mxu0 0
        %4029 = vmatprep.subr.bf16.mxu0 0
        %4030 = vmatpush1.bf16.msra.mxu0 0
        %4031 = vmatprep.subr.bf16.mxu0 0
        %4032 = vmatpush1.bf16.msra.mxu0 %v4015
        %4033 = vmatprep.subr.bf16.mxu0 0
        %4034 = vmatpush2.bf16.msra.mxu0 0
        %4035 = vmatprep.subr.bf16.mxu0 0
        %4036 = vmatpush2.bf16.msra.mxu0 0
        %4037 = vmatprep.subr.bf16.mxu0 0
        %4038 = vmatpush2.bf16.msra.mxu0 0
        %4039 = vmatprep.subr.bf16.mxu0 0
        %4040 = vmatpush2.bf16.msra.mxu0 0
        %4041 = vmatprep.subr.bf16.mxu0 0
        %4042 = vmatpush2.bf16.msra.mxu0 0
        %4043 = vmatprep.subr.bf16.mxu0 0
        %4044 = vmatpush2.bf16.msra.mxu0 0
        %4045 = vmatprep.subr.bf16.mxu0 0
        %4046 = vmatpush2.bf16.msra.mxu0 0
        %4047 = vmatprep.subr.bf16.mxu0 0
        %4048 = vmatpush2.bf16.msra.mxu0 0
        %4049 = vmatprep.mubr.bf16.mxu0 0
        %4050 = vmatmul.mubr.bf16.gmra.mxu0 %v4011
        %v4051 = vpop.f32.mrf.mxu0
        %v4052 = vadd.f32 0.0, %v4051
        %v4053 = vpop.f32.mrf.mxu0
        %v4054 = vpop.f32.mrf.mxu0
        %v4055 = vpop.f32.mrf.mxu0
        %4056 = vdwg.mxu0
        %v4058 = vsel %vm3897, %v3995, 0
        %v4061 = vsel %vm4013, %v4003, 0
        %4063 = vmatprep.subr.bf16.mxu0 0
        %4064 = vmatpush1.bf16.msra.mxu0 0
        %4065 = vmatprep.subr.bf16.mxu0 0
        %4066 = vmatpush1.bf16.msra.mxu0 0
        %4067 = vmatprep.subr.bf16.mxu0 0
        %4068 = vmatpush1.bf16.msra.mxu0 0
        %4069 = vmatprep.subr.bf16.mxu0 0
        %4070 = vmatpush1.bf16.msra.mxu0 0
        %4071 = vmatprep.subr.bf16.mxu0 0
        %4072 = vmatpush1.bf16.msra.mxu0 0
        %4073 = vmatprep.subr.bf16.mxu0 0
        %4074 = vmatpush1.bf16.msra.mxu0 0
        %4075 = vmatprep.subr.bf16.mxu0 0
        %4076 = vmatpush1.bf16.msra.mxu0 0
        %4077 = vmatprep.subr.bf16.mxu0 0
        %4078 = vmatpush1.bf16.msra.mxu0 %v4061
        %4079 = vmatprep.subr.bf16.mxu0 0
        %4080 = vmatpush2.bf16.msra.mxu0 0
        %4081 = vmatprep.subr.bf16.mxu0 0
        %4082 = vmatpush2.bf16.msra.mxu0 0
        %4083 = vmatprep.subr.bf16.mxu0 0
        %4084 = vmatpush2.bf16.msra.mxu0 0
        %4085 = vmatprep.subr.bf16.mxu0 0
        %4086 = vmatpush2.bf16.msra.mxu0 0
        %4087 = vmatprep.subr.bf16.mxu0 0
        %4088 = vmatpush2.bf16.msra.mxu0 0
        %4089 = vmatprep.subr.bf16.mxu0 0
        %4090 = vmatpush2.bf16.msra.mxu0 0
        %4091 = vmatprep.subr.bf16.mxu0 0
        %4092 = vmatpush2.bf16.msra.mxu0 0
        %4093 = vmatprep.subr.bf16.mxu0 0
        %4094 = vmatpush2.bf16.msra.mxu0 0
        %4095 = vmatprep.mubr.bf16.mxu0 0
        %4096 = vmatmul.mubr.bf16.gmra.mxu0 %v4058
        %v4097 = vpop.f32.mrf.mxu0
        %v4098 = vadd.f32 0.0, %v4097
        %v4099 = vpop.f32.mrf.mxu0
        %v4100 = vpop.f32.mrf.mxu0
        %v4101 = vpop.f32.mrf.mxu0
        %4102 = vdwg.mxu0
        %v4104 = vsel %vm3897, %v3996, 0
        %v4107 = vsel %vm4013, %v4004, 0
        %4109 = vmatprep.subr.bf16.mxu0 0
        %4110 = vmatpush1.bf16.msra.mxu0 0
        %4111 = vmatprep.subr.bf16.mxu0 0
        %4112 = vmatpush1.bf16.msra.mxu0 0
        %4113 = vmatprep.subr.bf16.mxu0 0
        %4114 = vmatpush1.bf16.msra.mxu0 0
        %4115 = vmatprep.subr.bf16.mxu0 0
        %4116 = vmatpush1.bf16.msra.mxu0 0
        %4117 = vmatprep.subr.bf16.mxu0 0
        %4118 = vmatpush1.bf16.msra.mxu0 0
        %4119 = vmatprep.subr.bf16.mxu0 0
        %4120 = vmatpush1.bf16.msra.mxu0 0
        %4121 = vmatprep.subr.bf16.mxu0 0
        %4122 = vmatpush1.bf16.msra.mxu0 0
        %4123 = vmatprep.subr.bf16.mxu0 0
        %4124 = vmatpush1.bf16.msra.mxu0 %v4107
        %4125 = vmatprep.subr.bf16.mxu0 0
        %4126 = vmatpush2.bf16.msra.mxu0 0
        %4127 = vmatprep.subr.bf16.mxu0 0
        %4128 = vmatpush2.bf16.msra.mxu0 0
        %4129 = vmatprep.subr.bf16.mxu0 0
        %4130 = vmatpush2.bf16.msra.mxu0 0
        %4131 = vmatprep.subr.bf16.mxu0 0
        %4132 = vmatpush2.bf16.msra.mxu0 0
        %4133 = vmatprep.subr.bf16.mxu0 0
        %4134 = vmatpush2.bf16.msra.mxu0 0
        %4135 = vmatprep.subr.bf16.mxu0 0
        %4136 = vmatpush2.bf16.msra.mxu0 0
        %4137 = vmatprep.subr.bf16.mxu0 0
        %4138 = vmatpush2.bf16.msra.mxu0 0
        %4139 = vmatprep.subr.bf16.mxu0 0
        %4140 = vmatpush2.bf16.msra.mxu0 0
        %4141 = vmatprep.mubr.bf16.mxu0 0
        %4142 = vmatmul.mubr.bf16.gmra.mxu0 %v4104
        %v4143 = vpop.f32.mrf.mxu0
        %v4144 = vadd.f32 0.0, %v4143
        %v4145 = vpop.f32.mrf.mxu0
        %v4146 = vpop.f32.mrf.mxu0
        %v4147 = vpop.f32.mrf.mxu0
        %4148 = vdwg.mxu0
        %v4150 = vsel %vm3897, %v3997, 0
        %v4153 = vsel %vm4013, %v4005, 0
        %4155 = vmatprep.subr.bf16.mxu0 0
        %4156 = vmatpush1.bf16.msra.mxu0 0
        %4157 = vmatprep.subr.bf16.mxu0 0
        %4158 = vmatpush1.bf16.msra.mxu0 0
        %4159 = vmatprep.subr.bf16.mxu0 0
        %4160 = vmatpush1.bf16.msra.mxu0 0
        %4161 = vmatprep.subr.bf16.mxu0 0
        %4162 = vmatpush1.bf16.msra.mxu0 0
        %4163 = vmatprep.subr.bf16.mxu0 0
        %4164 = vmatpush1.bf16.msra.mxu0 0
        %4165 = vmatprep.subr.bf16.mxu0 0
        %4166 = vmatpush1.bf16.msra.mxu0 0
        %4167 = vmatprep.subr.bf16.mxu0 0
        %4168 = vmatpush1.bf16.msra.mxu0 0
        %4169 = vmatprep.subr.bf16.mxu0 0
        %4170 = vmatpush1.bf16.msra.mxu0 %v4153
        %4171 = vmatprep.subr.bf16.mxu0 0
        %4172 = vmatpush2.bf16.msra.mxu0 0
        %4173 = vmatprep.subr.bf16.mxu0 0
        %4174 = vmatpush2.bf16.msra.mxu0 0
        %4175 = vmatprep.subr.bf16.mxu0 0
        %4176 = vmatpush2.bf16.msra.mxu0 0
        %4177 = vmatprep.subr.bf16.mxu0 0
        %4178 = vmatpush2.bf16.msra.mxu0 0
        %4179 = vmatprep.subr.bf16.mxu0 0
        %4180 = vmatpush2.bf16.msra.mxu0 0
        %4181 = vmatprep.subr.bf16.mxu0 0
        %4182 = vmatpush2.bf16.msra.mxu0 0
        %4183 = vmatprep.subr.bf16.mxu0 0
        %4184 = vmatpush2.bf16.msra.mxu0 0
        %4185 = vmatprep.subr.bf16.mxu0 0
        %4186 = vmatpush2.bf16.msra.mxu0 0
        %4187 = vmatprep.mubr.bf16.mxu0 0
        %4188 = vmatmul.mubr.bf16.gmra.mxu0 %v4150
        %v4189 = vpop.f32.mrf.mxu0
        %v4190 = vadd.f32 0.0, %v4189
        %v4191 = vpop.f32.mrf.mxu0
        %v4192 = vpop.f32.mrf.mxu0
        %v4193 = vpop.f32.mrf.mxu0
        %4194 = vdwg.mxu0
        %v4196 = vsel %vm3897, %v3998, 0
        %v4199 = vsel %vm4013, %v4006, 0
        %4201 = vmatprep.subr.bf16.mxu0 0
        %4202 = vmatpush1.bf16.msra.mxu0 0
        %4203 = vmatprep.subr.bf16.mxu0 0
        %4204 = vmatpush1.bf16.msra.mxu0 0
        %4205 = vmatprep.subr.bf16.mxu0 0
        %4206 = vmatpush1.bf16.msra.mxu0 0
        %4207 = vmatprep.subr.bf16.mxu0 0
        %4208 = vmatpush1.bf16.msra.mxu0 0
        %4209 = vmatprep.subr.bf16.mxu0 0
        %4210 = vmatpush1.bf16.msra.mxu0 0
        %4211 = vmatprep.subr.bf16.mxu0 0
        %4212 = vmatpush1.bf16.msra.mxu0 0
        %4213 = vmatprep.subr.bf16.mxu0 0
        %4214 = vmatpush1.bf16.msra.mxu0 0
        %4215 = vmatprep.subr.bf16.mxu0 0
        %4216 = vmatpush1.bf16.msra.mxu0 %v4199
        %4217 = vmatprep.subr.bf16.mxu0 0
        %4218 = vmatpush2.bf16.msra.mxu0 0
        %4219 = vmatprep.subr.bf16.mxu0 0
        %4220 = vmatpush2.bf16.msra.mxu0 0
        %4221 = vmatprep.subr.bf16.mxu0 0
        %4222 = vmatpush2.bf16.msra.mxu0 0
        %4223 = vmatprep.subr.bf16.mxu0 0
        %4224 = vmatpush2.bf16.msra.mxu0 0
        %4225 = vmatprep.subr.bf16.mxu0 0
        %4226 = vmatpush2.bf16.msra.mxu0 0
        %4227 = vmatprep.subr.bf16.mxu0 0
        %4228 = vmatpush2.bf16.msra.mxu0 0
        %4229 = vmatprep.subr.bf16.mxu0 0
        %4230 = vmatpush2.bf16.msra.mxu0 0
        %4231 = vmatprep.subr.bf16.mxu0 0
        %4232 = vmatpush2.bf16.msra.mxu0 0
        %4233 = vmatprep.mubr.bf16.mxu0 0
        %4234 = vmatmul.mubr.bf16.gmra.mxu0 %v4196
        %v4235 = vpop.f32.mrf.mxu0
        %v4236 = vadd.f32 0.0, %v4235
        %v4237 = vpop.f32.mrf.mxu0
        %v4238 = vpop.f32.mrf.mxu0
        %v4239 = vpop.f32.mrf.mxu0
        %4240 = vdwg.mxu0
        %v4242 = vsel %vm3897, %v3999, 0
        %v4245 = vsel %vm4013, %v4007, 0
        %4247 = vmatprep.subr.bf16.mxu0 0
        %4248 = vmatpush1.bf16.msra.mxu0 0
        %4249 = vmatprep.subr.bf16.mxu0 0
        %4250 = vmatpush1.bf16.msra.mxu0 0
        %4251 = vmatprep.subr.bf16.mxu0 0
        %4252 = vmatpush1.bf16.msra.mxu0 0
        %4253 = vmatprep.subr.bf16.mxu0 0
        %4254 = vmatpush1.bf16.msra.mxu0 0
        %4255 = vmatprep.subr.bf16.mxu0 0
        %4256 = vmatpush1.bf16.msra.mxu0 0
        %4257 = vmatprep.subr.bf16.mxu0 0
        %4258 = vmatpush1.bf16.msra.mxu0 0
        %4259 = vmatprep.subr.bf16.mxu0 0
        %4260 = vmatpush1.bf16.msra.mxu0 0
        %4261 = vmatprep.subr.bf16.mxu0 0
        %4262 = vmatpush1.bf16.msra.mxu0 %v4245
        %4263 = vmatprep.subr.bf16.mxu0 0
        %4264 = vmatpush2.bf16.msra.mxu0 0
        %4265 = vmatprep.subr.bf16.mxu0 0
        %4266 = vmatpush2.bf16.msra.mxu0 0
        %4267 = vmatprep.subr.bf16.mxu0 0
        %4268 = vmatpush2.bf16.msra.mxu0 0
        %4269 = vmatprep.subr.bf16.mxu0 0
        %4270 = vmatpush2.bf16.msra.mxu0 0
        %4271 = vmatprep.subr.bf16.mxu0 0
        %4272 = vmatpush2.bf16.msra.mxu0 0
        %4273 = vmatprep.subr.bf16.mxu0 0
        %4274 = vmatpush2.bf16.msra.mxu0 0
        %4275 = vmatprep.subr.bf16.mxu0 0
        %4276 = vmatpush2.bf16.msra.mxu0 0
        %4277 = vmatprep.subr.bf16.mxu0 0
        %4278 = vmatpush2.bf16.msra.mxu0 0
        %4279 = vmatprep.mubr.bf16.mxu0 0
        %4280 = vmatmul.mubr.bf16.gmra.mxu0 %v4242
        %v4281 = vpop.f32.mrf.mxu0
        %v4282 = vadd.f32 0.0, %v4281
        %v4283 = vpop.f32.mrf.mxu0
        %v4284 = vpop.f32.mrf.mxu0
        %v4285 = vpop.f32.mrf.mxu0
        %4286 = vdwg.mxu0
        %v4288 = vsel %vm3897, %v4000, 0
        %v4291 = vsel %vm4013, %v4008, 0
        %4293 = vmatprep.subr.bf16.mxu0 0
        %4294 = vmatpush1.bf16.msra.mxu0 0
        %4295 = vmatprep.subr.bf16.mxu0 0
        %4296 = vmatpush1.bf16.msra.mxu0 0
        %4297 = vmatprep.subr.bf16.mxu0 0
        %4298 = vmatpush1.bf16.msra.mxu0 0
        %4299 = vmatprep.subr.bf16.mxu0 0
        %4300 = vmatpush1.bf16.msra.mxu0 0
        %4301 = vmatprep.subr.bf16.mxu0 0
        %4302 = vmatpush1.bf16.msra.mxu0 0
        %4303 = vmatprep.subr.bf16.mxu0 0
        %4304 = vmatpush1.bf16.msra.mxu0 0
        %4305 = vmatprep.subr.bf16.mxu0 0
        %4306 = vmatpush1.bf16.msra.mxu0 0
        %4307 = vmatprep.subr.bf16.mxu0 0
        %4308 = vmatpush1.bf16.msra.mxu0 %v4291
        %4309 = vmatprep.subr.bf16.mxu0 0
        %4310 = vmatpush2.bf16.msra.mxu0 0
        %4311 = vmatprep.subr.bf16.mxu0 0
        %4312 = vmatpush2.bf16.msra.mxu0 0
        %4313 = vmatprep.subr.bf16.mxu0 0
        %4314 = vmatpush2.bf16.msra.mxu0 0
        %4315 = vmatprep.subr.bf16.mxu0 0
        %4316 = vmatpush2.bf16.msra.mxu0 0
        %4317 = vmatprep.subr.bf16.mxu0 0
        %4318 = vmatpush2.bf16.msra.mxu0 0
        %4319 = vmatprep.subr.bf16.mxu0 0
        %4320 = vmatpush2.bf16.msra.mxu0 0
        %4321 = vmatprep.subr.bf16.mxu0 0
        %4322 = vmatpush2.bf16.msra.mxu0 0
        %4323 = vmatprep.subr.bf16.mxu0 0
        %4324 = vmatpush2.bf16.msra.mxu0 0
        %4325 = vmatprep.mubr.bf16.mxu0 0
        %4326 = vmatmul.mubr.bf16.gmra.mxu0 %v4288
        %v4327 = vpop.f32.mrf.mxu0
        %v4328 = vadd.f32 0.0, %v4327
        %v4329 = vpop.f32.mrf.mxu0
        %v4330 = vpop.f32.mrf.mxu0
        %v4331 = vpop.f32.mrf.mxu0
        %4332 = vdwg.mxu0
        %v4334 = vsel %vm3897, %v4001, 0
        %v4337 = vsel %vm4013, %v4009, 0
        %4339 = vmatprep.subr.bf16.mxu0 0
        %4340 = vmatpush1.bf16.msra.mxu0 0
        %4341 = vmatprep.subr.bf16.mxu0 0
        %4342 = vmatpush1.bf16.msra.mxu0 0
        %4343 = vmatprep.subr.bf16.mxu0 0
        %4344 = vmatpush1.bf16.msra.mxu0 0
        %4345 = vmatprep.subr.bf16.mxu0 0
        %4346 = vmatpush1.bf16.msra.mxu0 0
        %4347 = vmatprep.subr.bf16.mxu0 0
        %4348 = vmatpush1.bf16.msra.mxu0 0
        %4349 = vmatprep.subr.bf16.mxu0 0
        %4350 = vmatpush1.bf16.msra.mxu0 0
        %4351 = vmatprep.subr.bf16.mxu0 0
        %4352 = vmatpush1.bf16.msra.mxu0 0
        %4353 = vmatprep.subr.bf16.mxu0 0
        %4354 = vmatpush1.bf16.msra.mxu0 %v4337
        %4355 = vmatprep.subr.bf16.mxu0 0
        %4356 = vmatpush2.bf16.msra.mxu0 0
        %4357 = vmatprep.subr.bf16.mxu0 0
        %4358 = vmatpush2.bf16.msra.mxu0 0
        %4359 = vmatprep.subr.bf16.mxu0 0
        %4360 = vmatpush2.bf16.msra.mxu0 0
        %4361 = vmatprep.subr.bf16.mxu0 0
        %4362 = vmatpush2.bf16.msra.mxu0 0
        %4363 = vmatprep.subr.bf16.mxu0 0
        %4364 = vmatpush2.bf16.msra.mxu0 0
        %4365 = vmatprep.subr.bf16.mxu0 0
        %4366 = vmatpush2.bf16.msra.mxu0 0
        %4367 = vmatprep.subr.bf16.mxu0 0
        %4368 = vmatpush2.bf16.msra.mxu0 0
        %4369 = vmatprep.subr.bf16.mxu0 0
        %4370 = vmatpush2.bf16.msra.mxu0 0
        %4371 = vmatprep.mubr.bf16.mxu0 0
        %4372 = vmatmul.mubr.bf16.gmra.mxu0 %v4334
        %v4373 = vpop.f32.mrf.mxu0
        %v4374 = vadd.f32 0.0, %v4373
        %v4375 = vpop.f32.mrf.mxu0
        %v4376 = vpop.f32.mrf.mxu0
        %v4377 = vpop.f32.mrf.mxu0
        %4378 = vdwg.mxu0
        %v4379 = vpack.c.bf16 %v4052, %v4052
        %4380 = vst.msk [vmem:[#allocation5] sm:$0xf] %vm3454, %v4379
        %v4381 = vpack.c.bf16 %v4098, %v4098
        %v4383 = vunpack.c.l.b16 %v4381
        %v4384 = vpack.c.b16 %v4383, %v4383
        %4385 = vrot.lane.b32.xlu0 %v4384, 64
        %v4386 = vpop.permute.xlu0 %4385
        %vm4388 = vcmask 1043968
        %4389 = vst.msk [vmem:[#allocation5] sm:$0xf] %vm4388, %v4386
        %v4390 = vpack.c.bf16 %v4144, %v4144
        %4391 = vst.msk [vmem:[#allocation5 + $0x4] sm:$0xf] %vm3454, %v4390
        %v4392 = vpack.c.bf16 %v4190, %v4190
        %v4394 = vunpack.c.l.b16 %v4392
        %v4395 = vpack.c.b16 %v4394, %v4394
        %4396 = vrot.lane.b32.xlu0 %v4395, 64
        %v4397 = vpop.permute.xlu0 %4396
        %4399 = vst.msk [vmem:[#allocation5 + $0x4] sm:$0xf] %vm4388, %v4397
        %v4400 = vpack.c.bf16 %v4236, %v4236
        %4401 = vst.msk [vmem:[#allocation5 + $0x8] sm:$0xf] %vm3454, %v4400
        %v4402 = vpack.c.bf16 %v4282, %v4282
        %v4404 = vunpack.c.l.b16 %v4402
        %v4405 = vpack.c.b16 %v4404, %v4404
        %4406 = vrot.lane.b32.xlu0 %v4405, 64
        %v4407 = vpop.permute.xlu0 %4406
        %4409 = vst.msk [vmem:[#allocation5 + $0x8] sm:$0xf] %vm4388, %v4407
        %v4410 = vpack.c.bf16 %v4328, %v4328
        %4411 = vst.msk [vmem:[#allocation5 + $0xc] sm:$0xf] %vm3454, %v4410
        %v4412 = vpack.c.bf16 %v4374, %v4374
        %v4414 = vunpack.c.l.b16 %v4412
        %v4415 = vpack.c.b16 %v4414, %v4414
        %4416 = vrot.lane.b32.xlu0 %v4415, 64
        %v4417 = vpop.permute.xlu0 %4416
        %4419 = vst.msk [vmem:[#allocation5 + $0xc] sm:$0xf] %vm4388, %v4417
        %v4420 = vld [vmem:[#allocation5] sm:$0xff]
        %v4421 = vld [vmem:[#allocation5 + $0x8] sm:$0xff]
        %v4422 = vld [vmem:[#allocation17] sm:$0xff]
        %v4423 = vld [vmem:[#allocation17 + $0x8] sm:$0xff]
        %v4424 = vld [vmem:[#allocation17 + $0x10] sm:$0xff]
        %v4425 = vld [vmem:[#allocation17 + $0x18] sm:$0xff]
        %v4426 = vld [vmem:[#allocation17 + $0x20] sm:$0xff]
        %v4427 = vld [vmem:[#allocation17 + $0x28] sm:$0xff]
        %v4428 = vld [vmem:[#allocation17 + $0x30] sm:$0xff]
        %v4429 = vld [vmem:[#allocation17 + $0x38] sm:$0xff]
        %v4430 = vld [vmem:[#allocation17 + $0x40] sm:$0xff]
        %v4431 = vld [vmem:[#allocation17 + $0x48] sm:$0xff]
        %v4432 = vld [vmem:[#allocation17 + $0x50] sm:$0xff]
        %v4433 = vld [vmem:[#allocation17 + $0x58] sm:$0xff]
        %v4434 = vld [vmem:[#allocation17 + $0x60] sm:$0xff]
        %v4435 = vld [vmem:[#allocation17 + $0x68] sm:$0xff]
        %v4436 = vld [vmem:[#allocation17 + $0x70] sm:$0xff]
        %v4437 = vld [vmem:[#allocation17 + $0x78] sm:$0xff]
        %v4438 = vld [vmem:[#allocation17 + $0x80] sm:$0xff]
        %v4439 = vld [vmem:[#allocation17 + $0x88] sm:$0xff]
        %v4440 = vld [vmem:[#allocation17 + $0x90] sm:$0xff]
        %v4441 = vld [vmem:[#allocation17 + $0x98] sm:$0xff]
        %v4442 = vld [vmem:[#allocation17 + $0xa0] sm:$0xff]
        %v4443 = vld [vmem:[#allocation17 + $0xa8] sm:$0xff]
        %v4444 = vld [vmem:[#allocation17 + $0xb0] sm:$0xff]
        %v4445 = vld [vmem:[#allocation17 + $0xb8] sm:$0xff]
        %v4446 = vld [vmem:[#allocation17 + $0xc0] sm:$0xff]
        %v4447 = vld [vmem:[#allocation17 + $0xc8] sm:$0xff]
        %v4448 = vld [vmem:[#allocation17 + $0xd0] sm:$0xff]
        %v4449 = vld [vmem:[#allocation17 + $0xd8] sm:$0xff]
        %v4450 = vld [vmem:[#allocation17 + $0xe0] sm:$0xff]
        %v4451 = vld [vmem:[#allocation17 + $0xe8] sm:$0xff]
        %v4452 = vld [vmem:[#allocation17 + $0xf0] sm:$0xff]
        %v4453 = vld [vmem:[#allocation17 + $0xf8] sm:$0xff]
        %v4454 = vld [vmem:[#allocation17 + $0x100] sm:$0xff]
        %v4455 = vld [vmem:[#allocation17 + $0x108] sm:$0xff]
        %v4456 = vld [vmem:[#allocation17 + $0x110] sm:$0xff]
        %v4457 = vld [vmem:[#allocation17 + $0x118] sm:$0xff]
        %v4458 = vld [vmem:[#allocation17 + $0x120] sm:$0xff]
        %v4459 = vld [vmem:[#allocation17 + $0x128] sm:$0xff]
        %v4460 = vld [vmem:[#allocation17 + $0x130] sm:$0xff]
        %v4461 = vld [vmem:[#allocation17 + $0x138] sm:$0xff]
        %v4462 = vld [vmem:[#allocation17 + $0x140] sm:$0xff]
        %v4463 = vld [vmem:[#allocation17 + $0x148] sm:$0xff]
        %v4464 = vld [vmem:[#allocation17 + $0x150] sm:$0xff]
        %v4465 = vld [vmem:[#allocation17 + $0x158] sm:$0xff]
        %v4466 = vld [vmem:[#allocation17 + $0x160] sm:$0xff]
        %v4467 = vld [vmem:[#allocation17 + $0x168] sm:$0xff]
        %v4468 = vld [vmem:[#allocation17 + $0x170] sm:$0xff]
        %v4469 = vld [vmem:[#allocation17 + $0x178] sm:$0xff]
        %v4470 = vld [vmem:[#allocation17 + $0x180] sm:$0xff]
        %v4471 = vld [vmem:[#allocation17 + $0x188] sm:$0xff]
        %v4472 = vld [vmem:[#allocation17 + $0x190] sm:$0xff]
        %v4473 = vld [vmem:[#allocation17 + $0x198] sm:$0xff]
        %v4474 = vld [vmem:[#allocation17 + $0x1a0] sm:$0xff]
        %v4475 = vld [vmem:[#allocation17 + $0x1a8] sm:$0xff]
        %v4476 = vld [vmem:[#allocation17 + $0x1b0] sm:$0xff]
        %v4477 = vld [vmem:[#allocation17 + $0x1b8] sm:$0xff]
        %v4478 = vld [vmem:[#allocation17 + $0x1c0] sm:$0xff]
        %v4479 = vld [vmem:[#allocation17 + $0x1c8] sm:$0xff]
        %v4480 = vld [vmem:[#allocation17 + $0x1d0] sm:$0xff]
        %v4481 = vld [vmem:[#allocation17 + $0x1d8] sm:$0xff]
        %v4482 = vld [vmem:[#allocation17 + $0x1e0] sm:$0xff]
        %v4483 = vld [vmem:[#allocation17 + $0x1e8] sm:$0xff]
        %v4484 = vld [vmem:[#allocation17 + $0x1f0] sm:$0xff]
        %v4485 = vld [vmem:[#allocation17 + $0x1f8] sm:$0xff]
        %v4486 = vld [vmem:[#allocation17 + $0x200] sm:$0xff]
        %v4487 = vld [vmem:[#allocation17 + $0x208] sm:$0xff]
        %v4488 = vld [vmem:[#allocation17 + $0x210] sm:$0xff]
        %v4489 = vld [vmem:[#allocation17 + $0x218] sm:$0xff]
        %v4490 = vld [vmem:[#allocation17 + $0x220] sm:$0xff]
        %v4491 = vld [vmem:[#allocation17 + $0x228] sm:$0xff]
        %v4492 = vld [vmem:[#allocation17 + $0x230] sm:$0xff]
        %v4493 = vld [vmem:[#allocation17 + $0x238] sm:$0xff]
        %v4494 = vld [vmem:[#allocation17 + $0x240] sm:$0xff]
        %v4495 = vld [vmem:[#allocation17 + $0x248] sm:$0xff]
        %v4496 = vld [vmem:[#allocation17 + $0x250] sm:$0xff]
        %v4497 = vld [vmem:[#allocation17 + $0x258] sm:$0xff]
        %v4498 = vld [vmem:[#allocation17 + $0x260] sm:$0xff]
        %v4499 = vld [vmem:[#allocation17 + $0x268] sm:$0xff]
        %v4500 = vld [vmem:[#allocation17 + $0x270] sm:$0xff]
        %v4501 = vld [vmem:[#allocation17 + $0x278] sm:$0xff]
        %v4502 = vld [vmem:[#allocation17 + $0x280] sm:$0xff]
        %v4503 = vld [vmem:[#allocation17 + $0x288] sm:$0xff]
        %v4504 = vld [vmem:[#allocation17 + $0x290] sm:$0xff]
        %v4505 = vld [vmem:[#allocation17 + $0x298] sm:$0xff]
        %v4506 = vld [vmem:[#allocation17 + $0x2a0] sm:$0xff]
        %v4507 = vld [vmem:[#allocation17 + $0x2a8] sm:$0xff]
        %v4508 = vld [vmem:[#allocation17 + $0x2b0] sm:$0xff]
        %v4509 = vld [vmem:[#allocation17 + $0x2b8] sm:$0xff]
        %v4510 = vld [vmem:[#allocation17 + $0x2c0] sm:$0xff]
        %v4511 = vld [vmem:[#allocation17 + $0x2c8] sm:$0xff]
        %v4512 = vld [vmem:[#allocation17 + $0x2d0] sm:$0xff]
        %v4513 = vld [vmem:[#allocation17 + $0x2d8] sm:$0xff]
        %v4514 = vld [vmem:[#allocation17 + $0x2e0] sm:$0xff]
        %v4515 = vld [vmem:[#allocation17 + $0x2e8] sm:$0xff]
        %v4516 = vld [vmem:[#allocation17 + $0x2f0] sm:$0xff]
        %v4517 = vld [vmem:[#allocation17 + $0x2f8] sm:$0xff]
        %v4518 = vld [vmem:[#allocation17 + $0x300] sm:$0xff]
        %v4519 = vld [vmem:[#allocation17 + $0x308] sm:$0xff]
        %v4520 = vld [vmem:[#allocation17 + $0x310] sm:$0xff]
        %v4521 = vld [vmem:[#allocation17 + $0x318] sm:$0xff]
        %v4522 = vld [vmem:[#allocation17 + $0x320] sm:$0xff]
        %v4523 = vld [vmem:[#allocation17 + $0x328] sm:$0xff]
        %v4524 = vld [vmem:[#allocation17 + $0x330] sm:$0xff]
        %v4525 = vld [vmem:[#allocation17 + $0x338] sm:$0xff]
        %v4526 = vld [vmem:[#allocation17 + $0x340] sm:$0xff]
        %v4527 = vld [vmem:[#allocation17 + $0x348] sm:$0xff]
        %v4528 = vld [vmem:[#allocation17 + $0x350] sm:$0xff]
        %v4529 = vld [vmem:[#allocation17 + $0x358] sm:$0xff]
        %v4530 = vld [vmem:[#allocation17 + $0x360] sm:$0xff]
        %v4531 = vld [vmem:[#allocation17 + $0x368] sm:$0xff]
        %v4532 = vld [vmem:[#allocation17 + $0x370] sm:$0xff]
        %v4533 = vld [vmem:[#allocation17 + $0x378] sm:$0xff]
        %v4534 = vld [vmem:[#allocation17 + $0x380] sm:$0xff]
        %v4535 = vld [vmem:[#allocation17 + $0x388] sm:$0xff]
        %v4536 = vld [vmem:[#allocation17 + $0x390] sm:$0xff]
        %v4537 = vld [vmem:[#allocation17 + $0x398] sm:$0xff]
        %v4538 = vld [vmem:[#allocation17 + $0x3a0] sm:$0xff]
        %v4539 = vld [vmem:[#allocation17 + $0x3a8] sm:$0xff]
        %v4540 = vld [vmem:[#allocation17 + $0x3b0] sm:$0xff]
        %v4541 = vld [vmem:[#allocation17 + $0x3b8] sm:$0xff]
        %v4542 = vld [vmem:[#allocation17 + $0x3c0] sm:$0xff]
        %v4543 = vld [vmem:[#allocation17 + $0x3c8] sm:$0xff]
        %v4544 = vld [vmem:[#allocation17 + $0x3d0] sm:$0xff]
        %v4545 = vld [vmem:[#allocation17 + $0x3d8] sm:$0xff]
        %v4546 = vld [vmem:[#allocation17 + $0x3e0] sm:$0xff]
        %v4547 = vld [vmem:[#allocation17 + $0x3e8] sm:$0xff]
        %v4548 = vld [vmem:[#allocation17 + $0x3f0] sm:$0xff]
        %v4549 = vld [vmem:[#allocation17 + $0x3f8] sm:$0xff]
        %v4552 = vunpack.c.l.b16 %v4420
        %v4553 = vunpack.c.h.b16 %v4420
        %v4554 = vunpack.c.l.b16 %v4421
        %v4555 = vunpack.c.h.b16 %v4421
        %v4556 = vpack.c.b16 %v4552, %v4552
        %v4557 = vpack.c.b16 %v4553, %v4553
        %v4558 = vpack.c.b16 %v4554, %v4554
        %v4559 = vpack.c.b16 %v4555, %v4555
        %v4692 = vunpack.c.l.b16 %v4422
        %v4693 = vunpack.c.h.b16 %v4422
        %v4694 = vunpack.c.l.b16 %v4423
        %v4695 = vunpack.c.h.b16 %v4423
        %v4696 = vunpack.c.l.b16 %v4424
        %v4697 = vunpack.c.h.b16 %v4424
        %v4698 = vunpack.c.l.b16 %v4425
        %v4699 = vunpack.c.h.b16 %v4425
        %v4700 = vunpack.c.l.b16 %v4426
        %v4701 = vunpack.c.h.b16 %v4426
        %v4702 = vunpack.c.l.b16 %v4427
        %v4703 = vunpack.c.h.b16 %v4427
        %v4704 = vunpack.c.l.b16 %v4428
        %v4705 = vunpack.c.h.b16 %v4428
        %v4706 = vunpack.c.l.b16 %v4429
        %v4707 = vunpack.c.h.b16 %v4429
        %v4708 = vunpack.c.l.b16 %v4430
        %v4709 = vunpack.c.h.b16 %v4430
        %v4710 = vunpack.c.l.b16 %v4431
        %v4711 = vunpack.c.h.b16 %v4431
        %v4712 = vunpack.c.l.b16 %v4432
        %v4713 = vunpack.c.h.b16 %v4432
        %v4714 = vunpack.c.l.b16 %v4433
        %v4715 = vunpack.c.h.b16 %v4433
        %v4716 = vunpack.c.l.b16 %v4434
        %v4717 = vunpack.c.h.b16 %v4434
        %v4718 = vunpack.c.l.b16 %v4435
        %v4719 = vunpack.c.h.b16 %v4435
        %v4720 = vunpack.c.l.b16 %v4436
        %v4721 = vunpack.c.h.b16 %v4436
        %v4722 = vunpack.c.l.b16 %v4437
        %v4723 = vunpack.c.h.b16 %v4437
        %v4724 = vunpack.c.l.b16 %v4438
        %v4725 = vunpack.c.h.b16 %v4438
        %v4726 = vunpack.c.l.b16 %v4439
        %v4727 = vunpack.c.h.b16 %v4439
        %v4728 = vunpack.c.l.b16 %v4440
        %v4729 = vunpack.c.h.b16 %v4440
        %v4730 = vunpack.c.l.b16 %v4441
        %v4731 = vunpack.c.h.b16 %v4441
        %v4732 = vunpack.c.l.b16 %v4442
        %v4733 = vunpack.c.h.b16 %v4442
        %v4734 = vunpack.c.l.b16 %v4443
        %v4735 = vunpack.c.h.b16 %v4443
        %v4736 = vunpack.c.l.b16 %v4444
        %v4737 = vunpack.c.h.b16 %v4444
        %v4738 = vunpack.c.l.b16 %v4445
        %v4739 = vunpack.c.h.b16 %v4445
        %v4740 = vunpack.c.l.b16 %v4446
        %v4741 = vunpack.c.h.b16 %v4446
        %v4742 = vunpack.c.l.b16 %v4447
        %v4743 = vunpack.c.h.b16 %v4447
        %v4744 = vunpack.c.l.b16 %v4448
        %v4745 = vunpack.c.h.b16 %v4448
        %v4746 = vunpack.c.l.b16 %v4449
        %v4747 = vunpack.c.h.b16 %v4449
        %v4748 = vunpack.c.l.b16 %v4450
        %v4749 = vunpack.c.h.b16 %v4450
        %v4750 = vunpack.c.l.b16 %v4451
        %v4751 = vunpack.c.h.b16 %v4451
        %v4752 = vunpack.c.l.b16 %v4452
        %v4753 = vunpack.c.h.b16 %v4452
        %v4754 = vunpack.c.l.b16 %v4453
        %v4755 = vunpack.c.h.b16 %v4453
        %v4756 = vunpack.c.l.b16 %v4454
        %v4757 = vunpack.c.h.b16 %v4454
        %v4758 = vunpack.c.l.b16 %v4455
        %v4759 = vunpack.c.h.b16 %v4455
        %v4760 = vunpack.c.l.b16 %v4456
        %v4761 = vunpack.c.h.b16 %v4456
        %v4762 = vunpack.c.l.b16 %v4457
        %v4763 = vunpack.c.h.b16 %v4457
        %v4764 = vunpack.c.l.b16 %v4458
        %v4765 = vunpack.c.h.b16 %v4458
        %v4766 = vunpack.c.l.b16 %v4459
        %v4767 = vunpack.c.h.b16 %v4459
        %v4768 = vunpack.c.l.b16 %v4460
        %v4769 = vunpack.c.h.b16 %v4460
        %v4770 = vunpack.c.l.b16 %v4461
        %v4771 = vunpack.c.h.b16 %v4461
        %v4772 = vunpack.c.l.b16 %v4462
        %v4773 = vunpack.c.h.b16 %v4462
        %v4774 = vunpack.c.l.b16 %v4463
        %v4775 = vunpack.c.h.b16 %v4463
        %v4776 = vunpack.c.l.b16 %v4464
        %v4777 = vunpack.c.h.b16 %v4464
        %v4778 = vunpack.c.l.b16 %v4465
        %v4779 = vunpack.c.h.b16 %v4465
        %v4780 = vunpack.c.l.b16 %v4466
        %v4781 = vunpack.c.h.b16 %v4466
        %v4782 = vunpack.c.l.b16 %v4467
        %v4783 = vunpack.c.h.b16 %v4467
        %v4784 = vunpack.c.l.b16 %v4468
        %v4785 = vunpack.c.h.b16 %v4468
        %v4786 = vunpack.c.l.b16 %v4469
        %v4787 = vunpack.c.h.b16 %v4469
        %v4788 = vunpack.c.l.b16 %v4470
        %v4789 = vunpack.c.h.b16 %v4470
        %v4790 = vunpack.c.l.b16 %v4471
        %v4791 = vunpack.c.h.b16 %v4471
        %v4792 = vunpack.c.l.b16 %v4472
        %v4793 = vunpack.c.h.b16 %v4472
        %v4794 = vunpack.c.l.b16 %v4473
        %v4795 = vunpack.c.h.b16 %v4473
        %v4796 = vunpack.c.l.b16 %v4474
        %v4797 = vunpack.c.h.b16 %v4474
        %v4798 = vunpack.c.l.b16 %v4475
        %v4799 = vunpack.c.h.b16 %v4475
        %v4800 = vunpack.c.l.b16 %v4476
        %v4801 = vunpack.c.h.b16 %v4476
        %v4802 = vunpack.c.l.b16 %v4477
        %v4803 = vunpack.c.h.b16 %v4477
        %v4804 = vunpack.c.l.b16 %v4478
        %v4805 = vunpack.c.h.b16 %v4478
        %v4806 = vunpack.c.l.b16 %v4479
        %v4807 = vunpack.c.h.b16 %v4479
        %v4808 = vunpack.c.l.b16 %v4480
        %v4809 = vunpack.c.h.b16 %v4480
        %v4810 = vunpack.c.l.b16 %v4481
        %v4811 = vunpack.c.h.b16 %v4481
        %v4812 = vunpack.c.l.b16 %v4482
        %v4813 = vunpack.c.h.b16 %v4482
        %v4814 = vunpack.c.l.b16 %v4483
        %v4815 = vunpack.c.h.b16 %v4483
        %v4816 = vunpack.c.l.b16 %v4484
        %v4817 = vunpack.c.h.b16 %v4484
        %v4818 = vunpack.c.l.b16 %v4485
        %v4819 = vunpack.c.h.b16 %v4485
        %v4820 = vunpack.c.l.b16 %v4486
        %v4821 = vunpack.c.h.b16 %v4486
        %v4822 = vunpack.c.l.b16 %v4487
        %v4823 = vunpack.c.h.b16 %v4487
        %v4824 = vunpack.c.l.b16 %v4488
        %v4825 = vunpack.c.h.b16 %v4488
        %v4826 = vunpack.c.l.b16 %v4489
        %v4827 = vunpack.c.h.b16 %v4489
        %v4828 = vunpack.c.l.b16 %v4490
        %v4829 = vunpack.c.h.b16 %v4490
        %v4830 = vunpack.c.l.b16 %v4491
        %v4831 = vunpack.c.h.b16 %v4491
        %v4832 = vunpack.c.l.b16 %v4492
        %v4833 = vunpack.c.h.b16 %v4492
        %v4834 = vunpack.c.l.b16 %v4493
        %v4835 = vunpack.c.h.b16 %v4493
        %v4836 = vunpack.c.l.b16 %v4494
        %v4837 = vunpack.c.h.b16 %v4494
        %v4838 = vunpack.c.l.b16 %v4495
        %v4839 = vunpack.c.h.b16 %v4495
        %v4840 = vunpack.c.l.b16 %v4496
        %v4841 = vunpack.c.h.b16 %v4496
        %v4842 = vunpack.c.l.b16 %v4497
        %v4843 = vunpack.c.h.b16 %v4497
        %v4844 = vunpack.c.l.b16 %v4498
        %v4845 = vunpack.c.h.b16 %v4498
        %v4846 = vunpack.c.l.b16 %v4499
        %v4847 = vunpack.c.h.b16 %v4499
        %v4848 = vunpack.c.l.b16 %v4500
        %v4849 = vunpack.c.h.b16 %v4500
        %v4850 = vunpack.c.l.b16 %v4501
        %v4851 = vunpack.c.h.b16 %v4501
        %v4852 = vunpack.c.l.b16 %v4502
        %v4853 = vunpack.c.h.b16 %v4502
        %v4854 = vunpack.c.l.b16 %v4503
        %v4855 = vunpack.c.h.b16 %v4503
        %v4856 = vunpack.c.l.b16 %v4504
        %v4857 = vunpack.c.h.b16 %v4504
        %v4858 = vunpack.c.l.b16 %v4505
        %v4859 = vunpack.c.h.b16 %v4505
        %v4860 = vunpack.c.l.b16 %v4506
        %v4861 = vunpack.c.h.b16 %v4506
        %v4862 = vunpack.c.l.b16 %v4507
        %v4863 = vunpack.c.h.b16 %v4507
        %v4864 = vunpack.c.l.b16 %v4508
        %v4865 = vunpack.c.h.b16 %v4508
        %v4866 = vunpack.c.l.b16 %v4509
        %v4867 = vunpack.c.h.b16 %v4509
        %v4868 = vunpack.c.l.b16 %v4510
        %v4869 = vunpack.c.h.b16 %v4510
        %v4870 = vunpack.c.l.b16 %v4511
        %v4871 = vunpack.c.h.b16 %v4511
        %v4872 = vunpack.c.l.b16 %v4512
        %v4873 = vunpack.c.h.b16 %v4512
        %v4874 = vunpack.c.l.b16 %v4513
        %v4875 = vunpack.c.h.b16 %v4513
        %v4876 = vunpack.c.l.b16 %v4514
        %v4877 = vunpack.c.h.b16 %v4514
        %v4878 = vunpack.c.l.b16 %v4515
        %v4879 = vunpack.c.h.b16 %v4515
        %v4880 = vunpack.c.l.b16 %v4516
        %v4881 = vunpack.c.h.b16 %v4516
        %v4882 = vunpack.c.l.b16 %v4517
        %v4883 = vunpack.c.h.b16 %v4517
        %v4884 = vunpack.c.l.b16 %v4518
        %v4885 = vunpack.c.h.b16 %v4518
        %v4886 = vunpack.c.l.b16 %v4519
        %v4887 = vunpack.c.h.b16 %v4519
        %v4888 = vunpack.c.l.b16 %v4520
        %v4889 = vunpack.c.h.b16 %v4520
        %v4890 = vunpack.c.l.b16 %v4521
        %v4891 = vunpack.c.h.b16 %v4521
        %v4892 = vunpack.c.l.b16 %v4522
        %v4893 = vunpack.c.h.b16 %v4522
        %v4894 = vunpack.c.l.b16 %v4523
        %v4895 = vunpack.c.h.b16 %v4523
        %v4896 = vunpack.c.l.b16 %v4524
        %v4897 = vunpack.c.h.b16 %v4524
        %v4898 = vunpack.c.l.b16 %v4525
        %v4899 = vunpack.c.h.b16 %v4525
        %v4900 = vunpack.c.l.b16 %v4526
        %v4901 = vunpack.c.h.b16 %v4526
        %v4902 = vunpack.c.l.b16 %v4527
        %v4903 = vunpack.c.h.b16 %v4527
        %v4904 = vunpack.c.l.b16 %v4528
        %v4905 = vunpack.c.h.b16 %v4528
        %v4906 = vunpack.c.l.b16 %v4529
        %v4907 = vunpack.c.h.b16 %v4529
        %v4908 = vunpack.c.l.b16 %v4530
        %v4909 = vunpack.c.h.b16 %v4530
        %v4910 = vunpack.c.l.b16 %v4531
        %v4911 = vunpack.c.h.b16 %v4531
        %v4912 = vunpack.c.l.b16 %v4532
        %v4913 = vunpack.c.h.b16 %v4532
        %v4914 = vunpack.c.l.b16 %v4533
        %v4915 = vunpack.c.h.b16 %v4533
        %v4916 = vunpack.c.l.b16 %v4534
        %v4917 = vunpack.c.h.b16 %v4534
        %v4918 = vunpack.c.l.b16 %v4535
        %v4919 = vunpack.c.h.b16 %v4535
        %v4920 = vunpack.c.l.b16 %v4536
        %v4921 = vunpack.c.h.b16 %v4536
        %v4922 = vunpack.c.l.b16 %v4537
        %v4923 = vunpack.c.h.b16 %v4537
        %v4924 = vunpack.c.l.b16 %v4538
        %v4925 = vunpack.c.h.b16 %v4538
        %v4926 = vunpack.c.l.b16 %v4539
        %v4927 = vunpack.c.h.b16 %v4539
        %v4928 = vunpack.c.l.b16 %v4540
        %v4929 = vunpack.c.h.b16 %v4540
        %v4930 = vunpack.c.l.b16 %v4541
        %v4931 = vunpack.c.h.b16 %v4541
        %v4932 = vunpack.c.l.b16 %v4542
        %v4933 = vunpack.c.h.b16 %v4542
        %v4934 = vunpack.c.l.b16 %v4543
        %v4935 = vunpack.c.h.b16 %v4543
        %v4936 = vunpack.c.l.b16 %v4544
        %v4937 = vunpack.c.h.b16 %v4544
        %v4938 = vunpack.c.l.b16 %v4545
        %v4939 = vunpack.c.h.b16 %v4545
        %v4940 = vunpack.c.l.b16 %v4546
        %v4941 = vunpack.c.h.b16 %v4546
        %v4942 = vunpack.c.l.b16 %v4547
        %v4943 = vunpack.c.h.b16 %v4547
        %v4944 = vunpack.c.l.b16 %v4548
        %v4945 = vunpack.c.h.b16 %v4548
        %v4946 = vunpack.c.l.b16 %v4549
        %v4947 = vunpack.c.h.b16 %v4549
        %v4948 = vpack.c.b16 %v4696, %v4692
        %v4949 = vpack.c.b16 %v4697, %v4693
        %v4950 = vpack.c.b16 %v4698, %v4694
        %v4951 = vpack.c.b16 %v4699, %v4695
        %v4952 = vpack.c.b16 %v4704, %v4700
        %v4953 = vpack.c.b16 %v4705, %v4701
        %v4954 = vpack.c.b16 %v4706, %v4702
        %v4955 = vpack.c.b16 %v4707, %v4703
        %v4956 = vpack.c.b16 %v4712, %v4708
        %v4957 = vpack.c.b16 %v4713, %v4709
        %v4958 = vpack.c.b16 %v4714, %v4710
        %v4959 = vpack.c.b16 %v4715, %v4711
        %v4960 = vpack.c.b16 %v4720, %v4716
        %v4961 = vpack.c.b16 %v4721, %v4717
        %v4962 = vpack.c.b16 %v4722, %v4718
        %v4963 = vpack.c.b16 %v4723, %v4719
        %v4964 = vpack.c.b16 %v4728, %v4724
        %v4965 = vpack.c.b16 %v4729, %v4725
        %v4966 = vpack.c.b16 %v4730, %v4726
        %v4967 = vpack.c.b16 %v4731, %v4727
        %v4968 = vpack.c.b16 %v4736, %v4732
        %v4969 = vpack.c.b16 %v4737, %v4733
        %v4970 = vpack.c.b16 %v4738, %v4734
        %v4971 = vpack.c.b16 %v4739, %v4735
        %v4972 = vpack.c.b16 %v4744, %v4740
        %v4973 = vpack.c.b16 %v4745, %v4741
        %v4974 = vpack.c.b16 %v4746, %v4742
        %v4975 = vpack.c.b16 %v4747, %v4743
        %v4976 = vpack.c.b16 %v4752, %v4748
        %v4977 = vpack.c.b16 %v4753, %v4749
        %v4978 = vpack.c.b16 %v4754, %v4750
        %v4979 = vpack.c.b16 %v4755, %v4751
        %v4980 = vpack.c.b16 %v4760, %v4756
        %v4981 = vpack.c.b16 %v4761, %v4757
        %v4982 = vpack.c.b16 %v4762, %v4758
        %v4983 = vpack.c.b16 %v4763, %v4759
        %v4984 = vpack.c.b16 %v4768, %v4764
        %v4985 = vpack.c.b16 %v4769, %v4765
        %v4986 = vpack.c.b16 %v4770, %v4766
        %v4987 = vpack.c.b16 %v4771, %v4767
        %v4988 = vpack.c.b16 %v4776, %v4772
        %v4989 = vpack.c.b16 %v4777, %v4773
        %v4990 = vpack.c.b16 %v4778, %v4774
        %v4991 = vpack.c.b16 %v4779, %v4775
        %v4992 = vpack.c.b16 %v4784, %v4780
        %v4993 = vpack.c.b16 %v4785, %v4781
        %v4994 = vpack.c.b16 %v4786, %v4782
        %v4995 = vpack.c.b16 %v4787, %v4783
        %v4996 = vpack.c.b16 %v4792, %v4788
        %v4997 = vpack.c.b16 %v4793, %v4789
        %v4998 = vpack.c.b16 %v4794, %v4790
        %v4999 = vpack.c.b16 %v4795, %v4791
        %v5000 = vpack.c.b16 %v4800, %v4796
        %v5001 = vpack.c.b16 %v4801, %v4797
        %v5002 = vpack.c.b16 %v4802, %v4798
        %v5003 = vpack.c.b16 %v4803, %v4799
        %v5004 = vpack.c.b16 %v4808, %v4804
        %v5005 = vpack.c.b16 %v4809, %v4805
        %v5006 = vpack.c.b16 %v4810, %v4806
        %v5007 = vpack.c.b16 %v4811, %v4807
        %v5008 = vpack.c.b16 %v4816, %v4812
        %v5009 = vpack.c.b16 %v4817, %v4813
        %v5010 = vpack.c.b16 %v4818, %v4814
        %v5011 = vpack.c.b16 %v4819, %v4815
        %v5012 = vpack.c.b16 %v4824, %v4820
        %v5013 = vpack.c.b16 %v4825, %v4821
        %v5014 = vpack.c.b16 %v4826, %v4822
        %v5015 = vpack.c.b16 %v4827, %v4823
        %v5016 = vpack.c.b16 %v4832, %v4828
        %v5017 = vpack.c.b16 %v4833, %v4829
        %v5018 = vpack.c.b16 %v4834, %v4830
        %v5019 = vpack.c.b16 %v4835, %v4831
        %v5020 = vpack.c.b16 %v4840, %v4836
        %v5021 = vpack.c.b16 %v4841, %v4837
        %v5022 = vpack.c.b16 %v4842, %v4838
        %v5023 = vpack.c.b16 %v4843, %v4839
        %v5024 = vpack.c.b16 %v4848, %v4844
        %v5025 = vpack.c.b16 %v4849, %v4845
        %v5026 = vpack.c.b16 %v4850, %v4846
        %v5027 = vpack.c.b16 %v4851, %v4847
        %v5028 = vpack.c.b16 %v4856, %v4852
        %v5029 = vpack.c.b16 %v4857, %v4853
        %v5030 = vpack.c.b16 %v4858, %v4854
        %v5031 = vpack.c.b16 %v4859, %v4855
        %v5032 = vpack.c.b16 %v4864, %v4860
        %v5033 = vpack.c.b16 %v4865, %v4861
        %v5034 = vpack.c.b16 %v4866, %v4862
        %v5035 = vpack.c.b16 %v4867, %v4863
        %v5036 = vpack.c.b16 %v4872, %v4868
        %v5037 = vpack.c.b16 %v4873, %v4869
        %v5038 = vpack.c.b16 %v4874, %v4870
        %v5039 = vpack.c.b16 %v4875, %v4871
        %v5040 = vpack.c.b16 %v4880, %v4876
        %v5041 = vpack.c.b16 %v4881, %v4877
        %v5042 = vpack.c.b16 %v4882, %v4878
        %v5043 = vpack.c.b16 %v4883, %v4879
        %v5044 = vpack.c.b16 %v4888, %v4884
        %v5045 = vpack.c.b16 %v4889, %v4885
        %v5046 = vpack.c.b16 %v4890, %v4886
        %v5047 = vpack.c.b16 %v4891, %v4887
        %v5048 = vpack.c.b16 %v4896, %v4892
        %v5049 = vpack.c.b16 %v4897, %v4893
        %v5050 = vpack.c.b16 %v4898, %v4894
        %v5051 = vpack.c.b16 %v4899, %v4895
        %v5052 = vpack.c.b16 %v4904, %v4900
        %v5053 = vpack.c.b16 %v4905, %v4901
        %v5054 = vpack.c.b16 %v4906, %v4902
        %v5055 = vpack.c.b16 %v4907, %v4903
        %v5056 = vpack.c.b16 %v4912, %v4908
        %v5057 = vpack.c.b16 %v4913, %v4909
        %v5058 = vpack.c.b16 %v4914, %v4910
        %v5059 = vpack.c.b16 %v4915, %v4911
        %v5060 = vpack.c.b16 %v4920, %v4916
        %v5061 = vpack.c.b16 %v4921, %v4917
        %v5062 = vpack.c.b16 %v4922, %v4918
        %v5063 = vpack.c.b16 %v4923, %v4919
        %v5064 = vpack.c.b16 %v4928, %v4924
        %v5065 = vpack.c.b16 %v4929, %v4925
        %v5066 = vpack.c.b16 %v4930, %v4926
        %v5067 = vpack.c.b16 %v4931, %v4927
        %v5068 = vpack.c.b16 %v4936, %v4932
        %v5069 = vpack.c.b16 %v4937, %v4933
        %v5070 = vpack.c.b16 %v4938, %v4934
        %v5071 = vpack.c.b16 %v4939, %v4935
        %v5072 = vpack.c.b16 %v4944, %v4940
        %v5073 = vpack.c.b16 %v4945, %v4941
        %v5074 = vpack.c.b16 %v4946, %v4942
        %v5075 = vpack.c.b16 %v4947, %v4943
        %5204 = vmatprep.subr.bf16.mxu0 %v4977
        %5205 = vmatpush1.bf16.msra.mxu0 %v4976
        %5206 = vmatprep.subr.bf16.mxu0 %v4973
        %5207 = vmatpush1.bf16.msra.mxu0 %v4972
        %5208 = vmatprep.subr.bf16.mxu0 %v4969
        %5209 = vmatpush1.bf16.msra.mxu0 %v4968
        %5210 = vmatprep.subr.bf16.mxu0 %v4965
        %5211 = vmatpush1.bf16.msra.mxu0 %v4964
        %5212 = vmatprep.subr.bf16.mxu0 %v4961
        %5213 = vmatpush1.bf16.msra.mxu0 %v4960
        %5214 = vmatprep.subr.bf16.mxu0 %v4957
        %5215 = vmatpush1.bf16.msra.mxu0 %v4956
        %5216 = vmatprep.subr.bf16.mxu0 %v4953
        %5217 = vmatpush1.bf16.msra.mxu0 %v4952
        %5218 = vmatprep.subr.bf16.mxu0 %v4949
        %5219 = vmatpush1.bf16.msra.mxu0 %v4948
        %5220 = vmatprep.subr.bf16.mxu0 %v5009
        %5221 = vmatpush2.bf16.msra.mxu0 %v5008
        %5222 = vmatprep.subr.bf16.mxu0 %v5005
        %5223 = vmatpush2.bf16.msra.mxu0 %v5004
        %5224 = vmatprep.subr.bf16.mxu0 %v5001
        %5225 = vmatpush2.bf16.msra.mxu0 %v5000
        %5226 = vmatprep.subr.bf16.mxu0 %v4997
        %5227 = vmatpush2.bf16.msra.mxu0 %v4996
        %5228 = vmatprep.subr.bf16.mxu0 %v4993
        %5229 = vmatpush2.bf16.msra.mxu0 %v4992
        %5230 = vmatprep.subr.bf16.mxu0 %v4989
        %5231 = vmatpush2.bf16.msra.mxu0 %v4988
        %5232 = vmatprep.subr.bf16.mxu0 %v4985
        %5233 = vmatpush2.bf16.msra.mxu0 %v4984
        %5234 = vmatprep.subr.bf16.mxu0 %v4981
        %5235 = vmatpush2.bf16.msra.mxu0 %v4980
        %5236 = vmatprep.mubr.bf16.mxu0 %v4557
        %5237 = vmatmul.mubr.bf16.gmra.mxu0 %v4556
        %v5238 = vpop.f32.mrf.mxu0
        %v5239 = vadd.f32 %v2513, %v5238
        %v5240 = vpop.f32.mrf.mxu0
        %v5241 = vadd.f32 %v2514, %v5240
        %v5242 = vpop.f32.mrf.mxu0
        %v5243 = vpop.f32.mrf.mxu0
        %5244 = vdwg.mxu0
        %5245 = vmatprep.subr.bf16.mxu0 %v5041
        %5246 = vmatpush1.bf16.msra.mxu0 %v5040
        %5247 = vmatprep.subr.bf16.mxu0 %v5037
        %5248 = vmatpush1.bf16.msra.mxu0 %v5036
        %5249 = vmatprep.subr.bf16.mxu0 %v5033
        %5250 = vmatpush1.bf16.msra.mxu0 %v5032
        %5251 = vmatprep.subr.bf16.mxu0 %v5029
        %5252 = vmatpush1.bf16.msra.mxu0 %v5028
        %5253 = vmatprep.subr.bf16.mxu0 %v5025
        %5254 = vmatpush1.bf16.msra.mxu0 %v5024
        %5255 = vmatprep.subr.bf16.mxu0 %v5021
        %5256 = vmatpush1.bf16.msra.mxu0 %v5020
        %5257 = vmatprep.subr.bf16.mxu0 %v5017
        %5258 = vmatpush1.bf16.msra.mxu0 %v5016
        %5259 = vmatprep.subr.bf16.mxu0 %v5013
        %5260 = vmatpush1.bf16.msra.mxu0 %v5012
        %5261 = vmatprep.subr.bf16.mxu0 %v5073
        %5262 = vmatpush2.bf16.msra.mxu0 %v5072
        %5263 = vmatprep.subr.bf16.mxu0 %v5069
        %5264 = vmatpush2.bf16.msra.mxu0 %v5068
        %5265 = vmatprep.subr.bf16.mxu0 %v5065
        %5266 = vmatpush2.bf16.msra.mxu0 %v5064
        %5267 = vmatprep.subr.bf16.mxu0 %v5061
        %5268 = vmatpush2.bf16.msra.mxu0 %v5060
        %5269 = vmatprep.subr.bf16.mxu0 %v5057
        %5270 = vmatpush2.bf16.msra.mxu0 %v5056
        %5271 = vmatprep.subr.bf16.mxu0 %v5053
        %5272 = vmatpush2.bf16.msra.mxu0 %v5052
        %5273 = vmatprep.subr.bf16.mxu0 %v5049
        %5274 = vmatpush2.bf16.msra.mxu0 %v5048
        %5275 = vmatprep.subr.bf16.mxu0 %v5045
        %5276 = vmatpush2.bf16.msra.mxu0 %v5044
        %5277 = vmatprep.mubr.bf16.mxu0 %v4559
        %5278 = vmatmul.mubr.bf16.gmra.mxu0 %v4558
        %v5279 = vpop.f32.mrf.mxu0
        %v5280 = vadd.f32 %v5239, %v5279
        %v5281 = vpop.f32.mrf.mxu0
        %v5282 = vadd.f32 %v5241, %v5281
        %v5283 = vpop.f32.mrf.mxu0
        %v5284 = vpop.f32.mrf.mxu0
        %5285 = vdwg.mxu0
        %5286 = vmatprep.subr.bf16.mxu0 %v4979
        %5287 = vmatpush1.bf16.msra.mxu0 %v4978
        %5288 = vmatprep.subr.bf16.mxu0 %v4975
        %5289 = vmatpush1.bf16.msra.mxu0 %v4974
        %5290 = vmatprep.subr.bf16.mxu0 %v4971
        %5291 = vmatpush1.bf16.msra.mxu0 %v4970
        %5292 = vmatprep.subr.bf16.mxu0 %v4967
        %5293 = vmatpush1.bf16.msra.mxu0 %v4966
        %5294 = vmatprep.subr.bf16.mxu0 %v4963
        %5295 = vmatpush1.bf16.msra.mxu0 %v4962
        %5296 = vmatprep.subr.bf16.mxu0 %v4959
        %5297 = vmatpush1.bf16.msra.mxu0 %v4958
        %5298 = vmatprep.subr.bf16.mxu0 %v4955
        %5299 = vmatpush1.bf16.msra.mxu0 %v4954
        %5300 = vmatprep.subr.bf16.mxu0 %v4951
        %5301 = vmatpush1.bf16.msra.mxu0 %v4950
        %5302 = vmatprep.subr.bf16.mxu0 %v5011
        %5303 = vmatpush2.bf16.msra.mxu0 %v5010
        %5304 = vmatprep.subr.bf16.mxu0 %v5007
        %5305 = vmatpush2.bf16.msra.mxu0 %v5006
        %5306 = vmatprep.subr.bf16.mxu0 %v5003
        %5307 = vmatpush2.bf16.msra.mxu0 %v5002
        %5308 = vmatprep.subr.bf16.mxu0 %v4999
        %5309 = vmatpush2.bf16.msra.mxu0 %v4998
        %5310 = vmatprep.subr.bf16.mxu0 %v4995
        %5311 = vmatpush2.bf16.msra.mxu0 %v4994
        %5312 = vmatprep.subr.bf16.mxu0 %v4991
        %5313 = vmatpush2.bf16.msra.mxu0 %v4990
        %5314 = vmatprep.subr.bf16.mxu0 %v4987
        %5315 = vmatpush2.bf16.msra.mxu0 %v4986
        %5316 = vmatprep.subr.bf16.mxu0 %v4983
        %5317 = vmatpush2.bf16.msra.mxu0 %v4982
        %5318 = vmatprep.mubr.bf16.mxu0 %v4557
        %5319 = vmatmul.mubr.bf16.gmra.mxu0 %v4556
        %v5320 = vpop.f32.mrf.mxu0
        %v5321 = vadd.f32 %v2515, %v5320
        %v5322 = vpop.f32.mrf.mxu0
        %v5323 = vadd.f32 %v2516, %v5322
        %v5324 = vpop.f32.mrf.mxu0
        %v5325 = vpop.f32.mrf.mxu0
        %5326 = vdwg.mxu0
        %5327 = vmatprep.subr.bf16.mxu0 %v5043
        %5328 = vmatpush1.bf16.msra.mxu0 %v5042
        %5329 = vmatprep.subr.bf16.mxu0 %v5039
        %5330 = vmatpush1.bf16.msra.mxu0 %v5038
        %5331 = vmatprep.subr.bf16.mxu0 %v5035
        %5332 = vmatpush1.bf16.msra.mxu0 %v5034
        %5333 = vmatprep.subr.bf16.mxu0 %v5031
        %5334 = vmatpush1.bf16.msra.mxu0 %v5030
        %5335 = vmatprep.subr.bf16.mxu0 %v5027
        %5336 = vmatpush1.bf16.msra.mxu0 %v5026
        %5337 = vmatprep.subr.bf16.mxu0 %v5023
        %5338 = vmatpush1.bf16.msra.mxu0 %v5022
        %5339 = vmatprep.subr.bf16.mxu0 %v5019
        %5340 = vmatpush1.bf16.msra.mxu0 %v5018
        %5341 = vmatprep.subr.bf16.mxu0 %v5015
        %5342 = vmatpush1.bf16.msra.mxu0 %v5014
        %5343 = vmatprep.subr.bf16.mxu0 %v5075
        %5344 = vmatpush2.bf16.msra.mxu0 %v5074
        %5345 = vmatprep.subr.bf16.mxu0 %v5071
        %5346 = vmatpush2.bf16.msra.mxu0 %v5070
        %5347 = vmatprep.subr.bf16.mxu0 %v5067
        %5348 = vmatpush2.bf16.msra.mxu0 %v5066
        %5349 = vmatprep.subr.bf16.mxu0 %v5063
        %5350 = vmatpush2.bf16.msra.mxu0 %v5062
        %5351 = vmatprep.subr.bf16.mxu0 %v5059
        %5352 = vmatpush2.bf16.msra.mxu0 %v5058
        %5353 = vmatprep.subr.bf16.mxu0 %v5055
        %5354 = vmatpush2.bf16.msra.mxu0 %v5054
        %5355 = vmatprep.subr.bf16.mxu0 %v5051
        %5356 = vmatpush2.bf16.msra.mxu0 %v5050
        %5357 = vmatprep.subr.bf16.mxu0 %v5047
        %5358 = vmatpush2.bf16.msra.mxu0 %v5046
        %5359 = vmatprep.mubr.bf16.mxu0 %v4559
        %5360 = vmatmul.mubr.bf16.gmra.mxu0 %v4558
        %v5361 = vpop.f32.mrf.mxu0
        %v5362 = vadd.f32 %v5321, %v5361
        %v5363 = vpop.f32.mrf.mxu0
        %v5364 = vadd.f32 %v5323, %v5363
        %v5365 = vpop.f32.mrf.mxu0
        %v5366 = vpop.f32.mrf.mxu0
        %5367 = vdwg.mxu0
        %v5368 = vadd.f32 %v5280, %v5282
        %v5369 = vadd.f32 %v5368, %v5362
        %v5370 = vadd.f32 %v5369, %v5364
        %5371 = vadd.xlane.f32.xlu0 %v5370
        %v5372 = vpop.xlane.xlu0 %5371
        %v5373 = vrcp.pop 512.0
        %v5374 = vmul.f32 %v5372, %v5373
        %v5375 = vsub.f32 %v5280, %v5374
        %v5376 = vsub.f32 %v5282, %v5374
        %v5377 = vsub.f32 %v5362, %v5374
        %v5378 = vsub.f32 %v5364, %v5374
        %v5379 = vmul.f32 %v5375, %v5375
        %v5380 = vmul.f32 %v5376, %v5376
        %v5381 = vmul.f32 %v5377, %v5377
        %v5382 = vmul.f32 %v5378, %v5378
        %v5383 = vadd.f32 %v5379, %v5380
        %v5384 = vadd.f32 %v5383, %v5381
        %v5385 = vadd.f32 %v5384, %v5382
        %5386 = vadd.xlane.f32.xlu0 %v5385
        %v5387 = vpop.xlane.xlu0 %5386
        %v5388 = vmul.f32 %v5387, %v5373
        %v5389 = vadd.f32 %v5388, 1e-05
        %v5390 = vrsqrt.pop %v5389
        %v5391 = vmul.f32 %v5375, %v5390
        %v5392 = vmul.f32 %v5376, %v5390
        %v5393 = vmul.f32 %v5377, %v5390
        %v5394 = vmul.f32 %v5378, %v5390
        %5395 = vst [vmem:[%s524] sm:$0xff] %v5391
        %5396 = vst [vmem:[%s524 + $0x8] sm:$0xff] %v5392
        %5397 = vst [vmem:[%s524 + $0x10] sm:$0xff] %v5393
        %5398 = vst [vmem:[%s524 + $0x18] sm:$0xff] %v5394
        %s5399 = sand.u32 %s249, 1
        %s5400 = scalar_lea.sflag [#allocation8], %s5399
        %s5401 = sand.u32 %s249, 1
        %s5402 = smul.addr %s5401, 32
        %s5403 = scalar_lea.vmem [#allocation18], %s5402
        %s5404 = sand.u32 %s277, 1
        %s5405 = scalar_lea.sflag [#allocation20], %s5404
        %s5406 = sand.u32 %s277, 1
        %s5407 = smul.addr %s5406, 64
        %s5408 = scalar_lea.vmem [#allocation19], %s5407
        // Predicated region
        $region85: #{tpu_custom_call.1} parent=51 // pred_check
          %p5409 = pneg %p259
        $region86: #{tpu_custom_call.1} parent=51 // pred_check_branch
          %5411 = sbr.rel (%p5409) target = $region88
        $region87: #{tpu_custom_call.1} parent=51 // pred_region
          %s5413 = ssub.s32 512, 512
          %5414 = vsyncadd %s5400, %s5413
          %s5415 = smul.addr %s40, 4
          %s5416 = smul.addr %s39, 4
          %s5417 = sadd.s32 %s5415, %s5416
          %s5418 = smul.addr %s5417, 128
          %s5419 = scalar_lea.hbm %s8, %s5418
          %s5421 = sshll.u32 %s5403, 4
          %s5422 = int_to_ptr.vmem [resolvable:$true] %s5421
          %5424 = dma.vmem_to_hbm [thread:$0]  %s5422, 512, %s5419, %s5400
        $region88: #{tpu_custom_call.1} parent=51 // pred_fallthru
          _
        // Predicated region
        $region89: #{tpu_custom_call.1} parent=51 // pred_check
          %p5425 = pneg %p287
        $region90: #{tpu_custom_call.1} parent=51 // pred_check_branch
          %5427 = sbr.rel (%p5425) target = $region92
        $region91: #{tpu_custom_call.1} parent=51 // pred_region
          %s5429 = ssub.s32 1024, 1024
          %5430 = vsyncadd %s5405, %s5429
          %s5431 = smul.addr %s39, 8
          %s5432 = sadd.s32 %s40, %s5431
          %s5433 = smul.addr %s5432, 128
          %s5434 = scalar_lea.hbm %s9, %s5433
          %s5435 = sshll.u32 %s5408, 4
          %s5436 = int_to_ptr.vmem [resolvable:$true] %s5435
          %5441 = dma.vmem_to_hbm [thread:$0]  %s5436, 1024, %s5434, %s5405, 128, 128, 8
        $region92: #{tpu_custom_call.1} parent=51 // pred_fallthru
          _
      $region52: #{tpu_custom_call.1} parent=5 // pred_fallthru
        _
      %p5442 = scmp.le.s32.totalorder 2, %s30
      // Predicated region
      $region93: #{tpu_custom_call.1} parent=5 // pred_check
        %p5443 = pneg %p5442
      $region94: #{tpu_custom_call.1} parent=5 // pred_check_branch
        %5445 = sbr.rel (%p5443) target = $region96
      $region95: #{tpu_custom_call.1} parent=5 // pred_region
        %s5446 = ssub.s32 %s30, 2
        // Predicated region
        $region97: #{tpu_custom_call.1} parent=95 // pred_check
          %p5447 = pneg %p265
        $region98: #{tpu_custom_call.1} parent=95 // pred_check_branch
          %5449 = sbr.rel (%p5447) target = $region100
        $region99: #{tpu_custom_call.1} parent=95 // pred_region
          %s5450 = sand.u32 %s250, 1
          %s5451 = scalar_lea.sflag [#allocation8], %s5450
          %s5452 = sand.u32 %s250, 1
          %s5453 = smul.addr %s5452, 32
          %s5454 = scalar_lea.vmem [#allocation18], %s5453
          %5455 = dma.done %s5451, 512
        $region100: #{tpu_custom_call.1} parent=95 // pred_fallthru
          _
        // Predicated region
        $region101: #{tpu_custom_call.1} parent=95 // pred_check
          %p5456 = pneg %p293
        $region102: #{tpu_custom_call.1} parent=95 // pred_check_branch
          %5458 = sbr.rel (%p5456) target = $region104
        $region103: #{tpu_custom_call.1} parent=95 // pred_region
          %s5459 = sand.u32 %s278, 1
          %s5460 = scalar_lea.sflag [#allocation20], %s5459
          %s5461 = sand.u32 %s278, 1
          %s5462 = smul.addr %s5461, 64
          %s5463 = scalar_lea.vmem [#allocation19], %s5462
          %5464 = dma.done %s5460, 1024
        $region104: #{tpu_custom_call.1} parent=95 // pred_fallthru
          _
      $region96: #{tpu_custom_call.1} parent=5 // pred_fallthru
        _
    $region6: #{tpu_custom_call.1} parent=1 // loop_footer
      %s34 = sadd.s32 1, %s30
    $region7: #{tpu_custom_call.1} parent=1 // loop_footer_branch
      %29 = sbr.rel target = $region3
    $region8: #{tpu_custom_call.1} parent=1 // loop_exit
      _
    %5465 = vsyncpa [#allocation7], 1
    %s5466 = scalar_lea.sflag [#allocation7], 1
    %5467 = vsyncpa %s5466, 1
    %5468 = vsyncpa [#allocation10], 1
    %s5469 = scalar_lea.sflag [#allocation10], 1
    %5470 = vsyncpa %s5469, 1
    %5471 = vsyncpa [#allocation13], 1
    %5472 = vsyncpa [#allocation16], 1
    %5473 = vsyncpa [#allocation8], 1
    %s5474 = scalar_lea.sflag [#allocation8], 1
    %5475 = vsyncpa %s5474, 1
    %5476 = vsyncpa [#allocation20], 1
    %s5477 = scalar_lea.sflag [#allocation20], 1
    %5478 = vsyncpa %s5477, 1

</llo_original>
